<compile_context>
chip_gen: v7x
topology: tpu7x:2x2x1
jax: 0.10.0
libtpu: 0.0.40
codegen_flags: <defaults>
</compile_context>

<pallas_src>
import functools

import jax
import jax.numpy as jnp
from jax.experimental import pallas as pl
from jax.experimental.pallas import tpu as pltpu


# ----------------------------------------------------------------------------
# Pallas kernel: the FULL layer stack for one batch element.
# ----------------------------------------------------------------------------
def _transformer_stack_kernel(q_ref, kv_ref, mask_ref,
                              w_ref, vec_ref, w1_ref, b1_ref, w2_ref,
                              out_ref, *, nhead, nlayers, approx_recip):
    x0 = q_ref[0]            # (Sq, D)  f32
    kv = kv_ref[0]           # (Skv, D) f32
    D = x0.shape[-1]
    hd = D // nhead

    # ---- unpack packed parameters (loaded once, reused across all layers) ----
    wq = w_ref[0]            # (D, D)  (already pre-scaled by 1/sqrt(hd))
    wk = w_ref[1]
    wv = w_ref[2]
    wo = w_ref[3]
    cdt = wq.dtype           # matmul operand dtype (f32 or bf16)
    w1 = w1_ref[...]         # (D, F)  cdt
    w2 = w2_ref[...]         # (F, D)  cdt
    b1 = b1_ref[...]         # (1, F)  f32
    bq  = vec_ref[0:1, :]    # (1, D)  (already pre-scaled by 1/sqrt(hd))
    bk  = vec_ref[1:2, :]
    bv  = vec_ref[2:3, :]
    bo  = vec_ref[3:4, :]
    b2  = vec_ref[4:5, :]
    g1  = vec_ref[5:6, :]
    be1 = vec_ref[6:7, :]
    g2  = vec_ref[7:8, :]
    be2 = vec_ref[8:9, :]

    def split_heads(t):      # (S, D) -> (H, S, hd) via static lane slices
        return jnp.stack([t[:, h * hd:(h + 1) * hd] for h in range(nhead)])

    # ---- hoisted out of the layer loop: identical weights AND identical
    # key_value mean K, V and the mask bias are the same for every layer.
    kvc = kv.astype(cdt)
    k_full = jnp.dot(kvc, wk, preferred_element_type=jnp.float32) + bk   # (Skv, D)
    v_full = jnp.dot(kvc, wv, preferred_element_type=jnp.float32) + bv   # (Skv, D)
    kh = split_heads(k_full).astype(cdt)     # (H, Skv, hd)
    vh = split_heads(v_full).astype(cdt)     # (H, Skv, hd)
    # key padding mask: 1.0 => padded key, large negative bias (finite, not -inf)
    neg = (mask_ref[0] * (-1e9))[None]       # (1, 1, Skv)

    def layer(_, x):
        # ---- multi-head cross attention ----
        xc = x.astype(cdt)
        # merged lane-dense Q projection: ONE (Sq,D)@(D,D) MXU pass
        q_full = jnp.dot(xc, wq, preferred_element_type=jnp.float32) + bq  # (Sq, D)
        qh = split_heads(q_full).astype(cdt)                               # (H, Sq, hd)

        s = jnp.einsum('hqd,hkd->hqk', qh, kh,
                       preferred_element_type=jnp.float32) + neg           # (H, Sq, Skv)
        s = s - jnp.max(s, axis=-1, keepdims=True)
        p = jnp.exp(s)
        denom = jnp.sum(p, axis=-1, keepdims=True)
        if approx_recip:
            # EUP approximate reciprocal (~bf16-accurate) instead of a VPU divide.
            p = p * pl.reciprocal(denom, approx=True)
        else:
            p = p / denom
        o = jnp.einsum('hqk,hkd->hqd', p.astype(cdt), vh,
                       preferred_element_type=jnp.float32)                 # (H, Sq, hd)

        # merge heads (minor-dim concat) + output projection in ONE matmul:
        # identical to concat(heads) @ wo; the head reduction accumulates
        # inside the MXU instead of an (H,Sq,D) intermediate + separate sum.
        om = jnp.concatenate([o[h] for h in range(nhead)], axis=-1)        # (Sq, D)
        attn = jnp.dot(om.astype(cdt), wo,
                       preferred_element_type=jnp.float32) + bo

        # ---- residual + LayerNorm 1 (eps=1e-5, biased variance, as PyTorch) ----
        y = x + attn
        mu = jnp.mean(y, axis=-1, keepdims=True)
        var = jnp.mean((y - mu) ** 2, axis=-1, keepdims=True)
        y = (y - mu) * jax.lax.rsqrt(var + 1e-5) * g1 + be1

        # ---- feed-forward: Linear -> ReLU -> Linear ----
        f = jnp.maximum(
            jnp.dot(y.astype(cdt), w1, preferred_element_type=jnp.float32) + b1,
            0.0)
        f = jnp.dot(f.astype(cdt), w2, preferred_element_type=jnp.float32) + b2

        # ---- residual + LayerNorm 2 ----
        z = y + f
        mu2 = jnp.mean(z, axis=-1, keepdims=True)
        var2 = jnp.mean((z - mu2) ** 2, axis=-1, keepdims=True)
        return (z - mu2) * jax.lax.rsqrt(var2 + 1e-5) * g2 + be2

    # Full unroll only while the body fits in registers (64 vregs).
    out_ref[0] = jax.lax.fori_loop(0, nlayers, layer, x0, unroll=(nlayers <= 4))


# ----------------------------------------------------------------------------
# Wrapper: ONE pallas_call for the whole module, grid over batch ("parallel").
# ----------------------------------------------------------------------------
def transformer_module(query, key_value, mask, params, nhead, nlayers, *,
                       matmul_dtype=jnp.float32, approx_recip=True):
    # copy.deepcopy(layer) in the PyTorch module => every layer shares the SAME
    # initial weights, so one weight set drives all nlayers inside the kernel.
    B, Sq, D = query.shape
    _, Skv, _ = key_value.shape
    hd = D // nhead
    scale = 1.0 / float(hd) ** 0.5

    # ---- host-side packing / pre-scaling (done once, outside the kernel) ----
    wstack = jnp.stack([params["wq"] * scale,     # scale folded into Q proj
                        params["wk"], params["wv"],
                        params["wo"]]).astype(matmul_dtype)               # (4, D, D)
    vecs = jnp.concatenate([params["bq"] * scale, params["bk"], params["bv"],
                            params["bo"], params["b2"], params["g1"],
                            params["be1"], params["g2"], params["be2"]],
                           axis=0)                                        # (9, D) f32
    w1 = params["w1"].astype(matmul_dtype)
    w2 = params["w2"].astype(matmul_dtype)
    b1 = params["b1"]                                                     # (1, F) f32

    def repl(shape):   # constant (weight) input: same block every grid step
        nd = len(shape)
        return pl.BlockSpec(shape, lambda b, _n=nd: (0,) * _n)

    kernel = functools.partial(_transformer_stack_kernel, nhead=nhead,
                               nlayers=nlayers, approx_recip=approx_recip)

    return pl.pallas_call(
        kernel,
        out_shape=jax.ShapeDtypeStruct((B, Sq, D), jnp.float32),
        grid=(B,),
        in_specs=[
            pl.BlockSpec((1, Sq, D),  lambda b: (b, 0, 0)),   # query
            pl.BlockSpec((1, Skv, D), lambda b: (b, 0, 0)),   # key_value
            pl.BlockSpec((1, 1, Skv), lambda b: (b, 0, 0)),   # key_padding_mask
            repl(wstack.shape),      # packed Wq*scale, Wk, Wv, Wo
            repl(vecs.shape),        # packed bq*scale, bk, bv, bo, b2, g1, be1, g2, be2
            repl(w1.shape),          # FF weight 1
            repl(b1.shape),          # FF bias 1
            repl(w2.shape),          # FF weight 2
        ],
        out_specs=pl.BlockSpec((1, Sq, D), lambda b: (b, 0, 0)),
        compiler_params=pltpu.CompilerParams(
            dimension_semantics=("parallel",),
            vmem_limit_bytes=32 * 1024 * 1024),
    )(query, key_value, mask, wstack, vecs, w1, b1, w2)


# ----------------------------------------------------------------------------
# Pure-JAX reference (identical math, exact softmax divide) for correctness.
# ----------------------------------------------------------------------------
def _layer_ref(x, kv, mask, p, nhead):
    B, Sq, D = x.shape
    hd = D // nhead
    scale = 1.0 / float(hd) ** 0.5
    q = x @ p["wq"] + p["bq"]
    k = kv @ p["wk"] + p["bk"]
    v = kv @ p["wv"] + p["bv"]
    q = q.reshape(B, Sq, nhead, hd).transpose(0, 2, 1, 3) * scale
    k = k.reshape(B, -1, nhead, hd).transpose(0, 2, 1, 3)
    v = v.reshape(B, -1, nhead, hd).transpose(0, 2, 1, 3)
    s = jnp.einsum("bhqd,bhkd->bhqk", q, k) + (mask * -1e9)[:, None, :, :]
    s = s - jnp.max(s, axis=-1, keepdims=True)
    pmat = jnp.exp(s)
    pmat = pmat / jnp.sum(pmat, axis=-1, keepdims=True)
    attn = jnp.einsum("bhqk,bhkd->bhqd", pmat, v).transpose(0, 2, 1, 3).reshape(B, Sq, D)
    attn = attn @ p["wo"] + p["bo"]

    def ln(z, g, b):
        mu = jnp.mean(z, axis=-1, keepdims=True)
        var = jnp.mean((z - mu) ** 2, axis=-1, keepdims=True)
        return (z - mu) * jax.lax.rsqrt(var + 1e-5) * g + b

    y = ln(x + attn, p["g1"], p["be1"])
    f = jnp.maximum(y @ p["w1"] + p["b1"], 0.0) @ p["w2"] + p["b2"]
    return ln(y + f, p["g2"], p["be2"])


def _module_ref(x, kv, mask, params, nhead, nlayers):
    out = x
    for _ in range(nlayers):
        out = _layer_ref(out, kv, mask, params, nhead)
    return out


# ----------------------------------------------------------------------------
if __name__ == "__main__":
    B, Sq, Skv, D, H, F = 2, 8, 8, 32, 4, 64
    NLAYERS = 2

    key = jax.random.PRNGKey(0)
    ks = jax.random.split(key, 20)

    query = jax.random.normal(ks[0], (B, Sq, D), jnp.float32)
    key_value = jax.random.normal(ks[1], (B, Skv, D), jnp.float32)

    # key_padding_mask: 1.0 = padded (ignored) key. Batch 1: last 2 keys padded.
    mask = jnp.zeros((B, 1, Skv), jnp.float32).at[1, 0, -2:].set(1.0)

    s = 0.1
    params = {
        "wq": s * jax.random.normal(ks[2], (D, D), jnp.float32),
        "wk": s * jax.random.normal(ks[3], (D, D), jnp.float32),
        "wv": s * jax.random.normal(ks[4], (D, D), jnp.float32),
        "bq": s * jax.random.normal(ks[5], (1, D), jnp.float32),
        "bk": s * jax.random.normal(ks[6], (1, D), jnp.float32),
        "bv": s * jax.random.normal(ks[7], (1, D), jnp.float32),
        "wo": s * jax.random.normal(ks[8], (D, D), jnp.float32),
        "bo": s * jax.random.normal(ks[9], (1, D), jnp.float32),
        "w1": s * jax.random.normal(ks[10], (D, F), jnp.float32),
        "b1": s * jax.random.normal(ks[11], (1, F), jnp.float32),
        "w2": s * jax.random.normal(ks[12], (F, D), jnp.float32),
        "b2": s * jax.random.normal(ks[13], (1, D), jnp.float32),
        "g1": jnp.ones((1, D), jnp.float32),
        "be1": jnp.zeros((1, D), jnp.float32),
        "g2": jnp.ones((1, D), jnp.float32),
        "be2": jnp.zeros((1, D), jnp.float32),
    }

    ref = jax.block_until_ready(_module_ref(query, key_value, mask, params, H, NLAYERS))

    # f32 matmul operands (default): only approximation is the EUP reciprocal
    # in the softmax denominator (approx_recip=False restores <1e-3 agreement).
    out = jax.block_until_ready(
        transformer_module(query, key_value, mask, params, H, NLAYERS))
    assert out.shape == (B, Sq, D)
    assert jnp.max(jnp.abs(out - ref)) < 1e-2, "f32 kernel/reference mismatch"

    # bf16 matmul-operand path (v6e/v7x configuration): weights/activations bf16
    # at the MXU, accumulation + softmax/LayerNorm stay f32.
    out_bf16 = jax.block_until_ready(
        transformer_module(query, key_value, mask, params, H, NLAYERS,
                           matmul_dtype=jnp.bfloat16))
    assert jnp.max(jnp.abs(out_bf16 - ref)) < 1e-1, "bf16 kernel/reference mismatch"

    print("KERNEL_OK")
</pallas_src>

<mosaic_0001>
module attributes {stable_mosaic.version = 11 : i64} {
  func.func @_transformer_stack_kernel(%arg0: i32, %arg1: memref<1x8x32xf32, #tpu.memory_space<vmem>>, %arg2: memref<1x8x32xf32, #tpu.memory_space<vmem>>, %arg3: memref<1x1x8xf32, #tpu.memory_space<vmem>>, %arg4: memref<4x32x32xf32, #tpu.memory_space<vmem>>, %arg5: memref<9x32xf32, #tpu.memory_space<vmem>>, %arg6: memref<32x64xf32, #tpu.memory_space<vmem>>, %arg7: memref<1x64xf32, #tpu.memory_space<vmem>>, %arg8: memref<64x32xf32, #tpu.memory_space<vmem>>, %arg9: memref<1x8x32xf32, #tpu.memory_space<vmem>>) attributes {dimension_semantics = [#tpu.dimension_semantics<parallel>], iteration_bounds = array<i64: 2>, scalar_prefetch = 0 : i64, scratch_operands = 0 : i64, tpu.core_type = #tpu.core_type<tc>, window_params = [{transform_indices = @transform_0, window_bounds = array<i64: 1, 8, 32>}, {transform_indices = @transform_1, window_bounds = array<i64: 1, 8, 32>}, {transform_indices = @transform_2, window_bounds = array<i64: 1, 1, 8>}, {pipeline_mode = #tpu.pipeline_mode<synchronous>, transform_indices = @transform_3, window_bounds = array<i64: 4, 32, 32>}, {pipeline_mode = #tpu.pipeline_mode<synchronous>, transform_indices = @transform_4, window_bounds = array<i64: 9, 32>}, {pipeline_mode = #tpu.pipeline_mode<synchronous>, transform_indices = @transform_5, window_bounds = array<i64: 32, 64>}, {pipeline_mode = #tpu.pipeline_mode<synchronous>, transform_indices = @transform_6, window_bounds = array<i64: 1, 64>}, {pipeline_mode = #tpu.pipeline_mode<synchronous>, transform_indices = @transform_7, window_bounds = array<i64: 64, 32>}, {transform_indices = @transform_8, window_bounds = array<i64: 1, 8, 32>}]} {
    %c0 = arith.constant 0 : index
    %c0_0 = arith.constant 0 : index
    %c0_1 = arith.constant 0 : index
    %0 = vector.load %arg1[%c0, %c0_0, %c0_1] : memref<1x8x32xf32, #tpu.memory_space<vmem>>, vector<1x8x32xf32>
    %1 = vector.shape_cast %0 : vector<1x8x32xf32> to vector<8x32xf32>
    %c0_2 = arith.constant 0 : index
    %c0_3 = arith.constant 0 : index
    %c0_4 = arith.constant 0 : index
    %2 = vector.load %arg2[%c0_2, %c0_3, %c0_4] : memref<1x8x32xf32, #tpu.memory_space<vmem>>, vector<1x8x32xf32>
    %3 = vector.shape_cast %2 : vector<1x8x32xf32> to vector<8x32xf32>
    %c0_5 = arith.constant 0 : index
    %c0_6 = arith.constant 0 : index
    %c0_7 = arith.constant 0 : index
    %4 = vector.load %arg4[%c0_5, %c0_6, %c0_7] : memref<4x32x32xf32, #tpu.memory_space<vmem>>, vector<1x32x32xf32>
    %5 = vector.shape_cast %4 : vector<1x32x32xf32> to vector<32x32xf32>
    %c1 = arith.constant 1 : index
    %c0_8 = arith.constant 0 : index
    %c0_9 = arith.constant 0 : index
    %6 = vector.load %arg4[%c1, %c0_8, %c0_9] : memref<4x32x32xf32, #tpu.memory_space<vmem>>, vector<1x32x32xf32>
    %7 = vector.shape_cast %6 : vector<1x32x32xf32> to vector<32x32xf32>
    %c2 = arith.constant 2 : index
    %c0_10 = arith.constant 0 : index
    %c0_11 = arith.constant 0 : index
    %8 = vector.load %arg4[%c2, %c0_10, %c0_11] : memref<4x32x32xf32, #tpu.memory_space<vmem>>, vector<1x32x32xf32>
    %9 = vector.shape_cast %8 : vector<1x32x32xf32> to vector<32x32xf32>
    %c3 = arith.constant 3 : index
    %c0_12 = arith.constant 0 : index
    %c0_13 = arith.constant 0 : index
    %10 = vector.load %arg4[%c3, %c0_12, %c0_13] : memref<4x32x32xf32, #tpu.memory_space<vmem>>, vector<1x32x32xf32>
    %11 = vector.shape_cast %10 : vector<1x32x32xf32> to vector<32x32xf32>
    %c0_14 = arith.constant 0 : index
    %c0_15 = arith.constant 0 : index
    %12 = vector.load %arg6[%c0_14, %c0_15] : memref<32x64xf32, #tpu.memory_space<vmem>>, vector<32x64xf32>
    %c0_16 = arith.constant 0 : index
    %c0_17 = arith.constant 0 : index
    %13 = vector.load %arg8[%c0_16, %c0_17] : memref<64x32xf32, #tpu.memory_space<vmem>>, vector<64x32xf32>
    %c0_18 = arith.constant 0 : index
    %c0_19 = arith.constant 0 : index
    %14 = vector.load %arg7[%c0_18, %c0_19] : memref<1x64xf32, #tpu.memory_space<vmem>>, vector<1x64xf32>
    %c0_20 = arith.constant 0 : index
    %c0_21 = arith.constant 0 : index
    %15 = vector.load %arg5[%c0_20, %c0_21] : memref<9x32xf32, #tpu.memory_space<vmem>>, vector<1x32xf32>
    %c1_22 = arith.constant 1 : index
    %c0_23 = arith.constant 0 : index
    %16 = vector.load %arg5[%c1_22, %c0_23] : memref<9x32xf32, #tpu.memory_space<vmem>>, vector<1x32xf32>
    %c2_24 = arith.constant 2 : index
    %c0_25 = arith.constant 0 : index
    %17 = vector.load %arg5[%c2_24, %c0_25] : memref<9x32xf32, #tpu.memory_space<vmem>>, vector<1x32xf32>
    %c3_26 = arith.constant 3 : index
    %c0_27 = arith.constant 0 : index
    %18 = vector.load %arg5[%c3_26, %c0_27] : memref<9x32xf32, #tpu.memory_space<vmem>>, vector<1x32xf32>
    %c4 = arith.constant 4 : index
    %c0_28 = arith.constant 0 : index
    %19 = vector.load %arg5[%c4, %c0_28] : memref<9x32xf32, #tpu.memory_space<vmem>>, vector<1x32xf32>
    %c5 = arith.constant 5 : index
    %c0_29 = arith.constant 0 : index
    %20 = vector.load %arg5[%c5, %c0_29] : memref<9x32xf32, #tpu.memory_space<vmem>>, vector<1x32xf32>
    %c6 = arith.constant 6 : index
    %c0_30 = arith.constant 0 : index
    %21 = vector.load %arg5[%c6, %c0_30] : memref<9x32xf32, #tpu.memory_space<vmem>>, vector<1x32xf32>
    %c7 = arith.constant 7 : index
    %c0_31 = arith.constant 0 : index
    %22 = vector.load %arg5[%c7, %c0_31] : memref<9x32xf32, #tpu.memory_space<vmem>>, vector<1x32xf32>
    %c8 = arith.constant 8 : index
    %c0_32 = arith.constant 0 : index
    %23 = vector.load %arg5[%c8, %c0_32] : memref<9x32xf32, #tpu.memory_space<vmem>>, vector<1x32xf32>
    %cst = arith.constant dense<0.000000e+00> : vector<8x32xf32>
    %24 = tpu.matmul %3, %7, %cst {dimension_numbers = #tpu.dot_dimension_numbers<[1], [0], [0], [1], [0, 0, 1, 1], [], []>} : vector<8x32xf32>, vector<32x32xf32>, vector<8x32xf32> -> vector<8x32xf32>
    %25 = vector.broadcast %16 : vector<1x32xf32> to vector<8x32xf32>
    %26 = arith.addf %24, %25 : vector<8x32xf32>
    %cst_33 = arith.constant dense<0.000000e+00> : vector<8x32xf32>
    %27 = tpu.matmul %3, %9, %cst_33 {dimension_numbers = #tpu.dot_dimension_numbers<[1], [0], [0], [1], [0, 0, 1, 1], [], []>} : vector<8x32xf32>, vector<32x32xf32>, vector<8x32xf32> -> vector<8x32xf32>
    %28 = vector.broadcast %17 : vector<1x32xf32> to vector<8x32xf32>
    %29 = arith.addf %27, %28 : vector<8x32xf32>
    %30 = vector.extract_strided_slice %26 {offsets = [0, 0], sizes = [8, 8], strides = [1, 1]} : vector<8x32xf32> to vector<8x8xf32>
    %31 = vector.extract_strided_slice %26 {offsets = [0, 8], sizes = [8, 8], strides = [1, 1]} : vector<8x32xf32> to vector<8x8xf32>
    %32 = vector.extract_strided_slice %26 {offsets = [0, 16], sizes = [8, 8], strides = [1, 1]} : vector<8x32xf32> to vector<8x8xf32>
    %33 = vector.extract_strided_slice %26 {offsets = [0, 24], sizes = [8, 8], strides = [1, 1]} : vector<8x32xf32> to vector<8x8xf32>
    %34 = vector.shape_cast %30 : vector<8x8xf32> to vector<1x8x8xf32>
    %35 = vector.shape_cast %31 : vector<8x8xf32> to vector<1x8x8xf32>
    %36 = vector.shape_cast %32 : vector<8x8xf32> to vector<1x8x8xf32>
    %37 = vector.shape_cast %33 : vector<8x8xf32> to vector<1x8x8xf32>
    %38 = tpu.concatenate %34, %35, %36, %37 in 0 : vector<1x8x8xf32>, vector<1x8x8xf32>, vector<1x8x8xf32>, vector<1x8x8xf32> -> vector<4x8x8xf32>
    %39 = vector.extract_strided_slice %29 {offsets = [0, 0], sizes = [8, 8], strides = [1, 1]} : vector<8x32xf32> to vector<8x8xf32>
    %40 = vector.extract_strided_slice %29 {offsets = [0, 8], sizes = [8, 8], strides = [1, 1]} : vector<8x32xf32> to vector<8x8xf32>
    %41 = vector.extract_strided_slice %29 {offsets = [0, 16], sizes = [8, 8], strides = [1, 1]} : vector<8x32xf32> to vector<8x8xf32>
    %42 = vector.extract_strided_slice %29 {offsets = [0, 24], sizes = [8, 8], strides = [1, 1]} : vector<8x32xf32> to vector<8x8xf32>
    %43 = vector.shape_cast %39 : vector<8x8xf32> to vector<1x8x8xf32>
    %44 = vector.shape_cast %40 : vector<8x8xf32> to vector<1x8x8xf32>
    %45 = vector.shape_cast %41 : vector<8x8xf32> to vector<1x8x8xf32>
    %46 = vector.shape_cast %42 : vector<8x8xf32> to vector<1x8x8xf32>
    %47 = tpu.concatenate %43, %44, %45, %46 in 0 : vector<1x8x8xf32>, vector<1x8x8xf32>, vector<1x8x8xf32>, vector<1x8x8xf32> -> vector<4x8x8xf32>
    %c0_34 = arith.constant 0 : index
    %c0_35 = arith.constant 0 : index
    %c0_36 = arith.constant 0 : index
    %48 = vector.load %arg3[%c0_34, %c0_35, %c0_36] : memref<1x1x8xf32, #tpu.memory_space<vmem>>, vector<1x1x8xf32>
    %49 = vector.shape_cast %48 : vector<1x1x8xf32> to vector<1x8xf32>
    %cst_37 = arith.constant -1.000000e+09 : f32
    %50 = vector.broadcast %cst_37 : f32 to vector<1x8xf32>
    %51 = arith.mulf %49, %50 : vector<1x8xf32>
    %52 = vector.shape_cast %51 : vector<1x8xf32> to vector<1x1x8xf32>
    %c0_i32 = arith.constant 0 : i32
    %cst_38 = arith.constant dense<0.000000e+00> : vector<8x32xf32>
    %53 = tpu.matmul %1, %5, %cst_38 {dimension_numbers = #tpu.dot_dimension_numbers<[1], [0], [0], [1], [0, 0, 1, 1], [], []>} : vector<8x32xf32>, vector<32x32xf32>, vector<8x32xf32> -> vector<8x32xf32>
    %54 = vector.broadcast %15 : vector<1x32xf32> to vector<8x32xf32>
    %55 = arith.addf %53, %54 : vector<8x32xf32>
    %56 = vector.extract_strided_slice %55 {offsets = [0, 0], sizes = [8, 8], strides = [1, 1]} : vector<8x32xf32> to vector<8x8xf32>
    %57 = vector.extract_strided_slice %55 {offsets = [0, 8], sizes = [8, 8], strides = [1, 1]} : vector<8x32xf32> to vector<8x8xf32>
    %58 = vector.extract_strided_slice %55 {offsets = [0, 16], sizes = [8, 8], strides = [1, 1]} : vector<8x32xf32> to vector<8x8xf32>
    %59 = vector.extract_strided_slice %55 {offsets = [0, 24], sizes = [8, 8], strides = [1, 1]} : vector<8x32xf32> to vector<8x8xf32>
    %60 = vector.shape_cast %56 : vector<8x8xf32> to vector<1x8x8xf32>
    %61 = vector.shape_cast %57 : vector<8x8xf32> to vector<1x8x8xf32>
    %62 = vector.shape_cast %58 : vector<8x8xf32> to vector<1x8x8xf32>
    %63 = vector.shape_cast %59 : vector<8x8xf32> to vector<1x8x8xf32>
    %64 = tpu.concatenate %60, %61, %62, %63 in 0 : vector<1x8x8xf32>, vector<1x8x8xf32>, vector<1x8x8xf32>, vector<1x8x8xf32> -> vector<4x8x8xf32>
    "tpu.trace_start"() <{level = 10 : i32, message = "hqd,hkd->hqk"}> : () -> ()
    %cst_39 = arith.constant dense<0.000000e+00> : vector<4x8x8xf32>
    %65 = tpu.matmul %64, %38, %cst_39 {dimension_numbers = #tpu.dot_dimension_numbers<[2], [2], [1], [1], [0, 0, 0, 1, 1, 1], [0], [0]>} : vector<4x8x8xf32>, vector<4x8x8xf32>, vector<4x8x8xf32> -> vector<4x8x8xf32>
    "tpu.trace_stop"() : () -> ()
    %66 = vector.broadcast %52 : vector<1x1x8xf32> to vector<4x8x8xf32>
    %67 = arith.addf %65, %66 : vector<4x8x8xf32>
    %cst_40 = arith.constant dense<0xFF800000> : vector<4x8xf32>
    %68 = vector.multi_reduction <maximumf>, %67, %cst_40 [2] : vector<4x8x8xf32> to vector<4x8xf32>
    %69 = vector.shape_cast %68 : vector<4x8xf32> to vector<4x8x1xf32>
    %70 = vector.broadcast %69 : vector<4x8x1xf32> to vector<4x8x8xf32>
    %71 = arith.subf %67, %70 : vector<4x8x8xf32>
    %72 = math.exp %71 : vector<4x8x8xf32>
    %cst_41 = arith.constant dense<0.000000e+00> : vector<4x8xf32>
    %73 = vector.multi_reduction <add>, %72, %cst_41 [2] : vector<4x8x8xf32> to vector<4x8xf32>
    %74 = vector.shape_cast %73 : vector<4x8xf32> to vector<4x8x1xf32>
    %75 = tpu.reciprocal %74 {approx = true} : vector<4x8x1xf32> -> vector<4x8x1xf32>
    %76 = vector.broadcast %75 : vector<4x8x1xf32> to vector<4x8x8xf32>
    %77 = arith.mulf %72, %76 : vector<4x8x8xf32>
    "tpu.trace_start"() <{level = 10 : i32, message = "hqk,hkd->hqd"}> : () -> ()
    %cst_42 = arith.constant dense<0.000000e+00> : vector<4x8x8xf32>
    %78 = tpu.matmul %77, %47, %cst_42 {dimension_numbers = #tpu.dot_dimension_numbers<[2], [1], [1], [2], [0, 0, 0, 1, 1, 2], [0], [0]>} : vector<4x8x8xf32>, vector<4x8x8xf32>, vector<4x8x8xf32> -> vector<4x8x8xf32>
    "tpu.trace_stop"() : () -> ()
    %79 = vector.extract_strided_slice %78 {offsets = [0, 0, 0], sizes = [1, 8, 8], strides = [1, 1, 1]} : vector<4x8x8xf32> to vector<1x8x8xf32>
    %80 = vector.shape_cast %79 : vector<1x8x8xf32> to vector<8x8xf32>
    %81 = vector.extract_strided_slice %78 {offsets = [1, 0, 0], sizes = [1, 8, 8], strides = [1, 1, 1]} : vector<4x8x8xf32> to vector<1x8x8xf32>
    %82 = vector.shape_cast %81 : vector<1x8x8xf32> to vector<8x8xf32>
    %83 = vector.extract_strided_slice %78 {offsets = [2, 0, 0], sizes = [1, 8, 8], strides = [1, 1, 1]} : vector<4x8x8xf32> to vector<1x8x8xf32>
    %84 = vector.shape_cast %83 : vector<1x8x8xf32> to vector<8x8xf32>
    %85 = vector.extract_strided_slice %78 {offsets = [3, 0, 0], sizes = [1, 8, 8], strides = [1, 1, 1]} : vector<4x8x8xf32> to vector<1x8x8xf32>
    %86 = vector.shape_cast %85 : vector<1x8x8xf32> to vector<8x8xf32>
    %87 = tpu.concatenate %80, %82, %84, %86 in 1 : vector<8x8xf32>, vector<8x8xf32>, vector<8x8xf32>, vector<8x8xf32> -> vector<8x32xf32>
    %cst_43 = arith.constant dense<0.000000e+00> : vector<8x32xf32>
    %88 = tpu.matmul %87, %11, %cst_43 {dimension_numbers = #tpu.dot_dimension_numbers<[1], [0], [0], [1], [0, 0, 1, 1], [], []>} : vector<8x32xf32>, vector<32x32xf32>, vector<8x32xf32> -> vector<8x32xf32>
    %89 = vector.broadcast %18 : vector<1x32xf32> to vector<8x32xf32>
    %90 = arith.addf %88, %89 : vector<8x32xf32>
    %91 = arith.addf %1, %90 : vector<8x32xf32>
    %cst_44 = arith.constant dense<0.000000e+00> : vector<8xf32>
    %92 = vector.multi_reduction <add>, %91, %cst_44 [1] : vector<8x32xf32> to vector<8xf32>
    %93 = vector.shape_cast %92 : vector<8xf32> to vector<8x1xf32>
    %cst_45 = arith.constant 3.200000e+01 : f32
    %94 = vector.broadcast %cst_45 : f32 to vector<8x1xf32>
    %95 = arith.divf %93, %94 : vector<8x1xf32>
    %96 = vector.broadcast %95 : vector<8x1xf32> to vector<8x32xf32>
    %97 = arith.subf %91, %96 : vector<8x32xf32>
    %98 = arith.mulf %97, %97 : vector<8x32xf32>
    %cst_46 = arith.constant dense<0.000000e+00> : vector<8xf32>
    %99 = vector.multi_reduction <add>, %98, %cst_46 [1] : vector<8x32xf32> to vector<8xf32>
    %100 = vector.shape_cast %99 : vector<8xf32> to vector<8x1xf32>
    %cst_47 = arith.constant 3.200000e+01 : f32
    %101 = vector.broadcast %cst_47 : f32 to vector<8x1xf32>
    %102 = arith.divf %100, %101 : vector<8x1xf32>
    %103 = vector.broadcast %95 : vector<8x1xf32> to vector<8x32xf32>
    %104 = arith.subf %91, %103 : vector<8x32xf32>
    %cst_48 = arith.constant 9.99999974E-6 : f32
    %105 = vector.broadcast %cst_48 : f32 to vector<8x1xf32>
    %106 = arith.addf %102, %105 : vector<8x1xf32>
    %107 = math.rsqrt %106 : vector<8x1xf32>
    %108 = vector.broadcast %107 : vector<8x1xf32> to vector<8x32xf32>
    %109 = arith.mulf %104, %108 : vector<8x32xf32>
    %110 = vector.broadcast %20 : vector<1x32xf32> to vector<8x32xf32>
    %111 = arith.mulf %109, %110 : vector<8x32xf32>
    %112 = vector.broadcast %21 : vector<1x32xf32> to vector<8x32xf32>
    %113 = arith.addf %111, %112 : vector<8x32xf32>
    %cst_49 = arith.constant dense<0.000000e+00> : vector<8x64xf32>
    %114 = tpu.matmul %113, %12, %cst_49 {dimension_numbers = #tpu.dot_dimension_numbers<[1], [0], [0], [1], [0, 0, 1, 1], [], []>} : vector<8x32xf32>, vector<32x64xf32>, vector<8x64xf32> -> vector<8x64xf32>
    %115 = vector.broadcast %14 : vector<1x64xf32> to vector<8x64xf32>
    %116 = arith.addf %114, %115 : vector<8x64xf32>
    %cst_50 = arith.constant 0.000000e+00 : f32
    %117 = vector.broadcast %cst_50 : f32 to vector<8x64xf32>
    %118 = arith.maximumf %116, %117 : vector<8x64xf32>
    %cst_51 = arith.constant dense<0.000000e+00> : vector<8x32xf32>
    %119 = tpu.matmul %118, %13, %cst_51 {dimension_numbers = #tpu.dot_dimension_numbers<[1], [0], [0], [1], [0, 0, 1, 1], [], []>} : vector<8x64xf32>, vector<64x32xf32>, vector<8x32xf32> -> vector<8x32xf32>
    %120 = vector.broadcast %19 : vector<1x32xf32> to vector<8x32xf32>
    %121 = arith.addf %119, %120 : vector<8x32xf32>
    %122 = arith.addf %113, %121 : vector<8x32xf32>
    %cst_52 = arith.constant dense<0.000000e+00> : vector<8xf32>
    %123 = vector.multi_reduction <add>, %122, %cst_52 [1] : vector<8x32xf32> to vector<8xf32>
    %124 = vector.shape_cast %123 : vector<8xf32> to vector<8x1xf32>
    %cst_53 = arith.constant 3.200000e+01 : f32
    %125 = vector.broadcast %cst_53 : f32 to vector<8x1xf32>
    %126 = arith.divf %124, %125 : vector<8x1xf32>
    %127 = vector.broadcast %126 : vector<8x1xf32> to vector<8x32xf32>
    %128 = arith.subf %122, %127 : vector<8x32xf32>
    %129 = arith.mulf %128, %128 : vector<8x32xf32>
    %cst_54 = arith.constant dense<0.000000e+00> : vector<8xf32>
    %130 = vector.multi_reduction <add>, %129, %cst_54 [1] : vector<8x32xf32> to vector<8xf32>
    %131 = vector.shape_cast %130 : vector<8xf32> to vector<8x1xf32>
    %cst_55 = arith.constant 3.200000e+01 : f32
    %132 = vector.broadcast %cst_55 : f32 to vector<8x1xf32>
    %133 = arith.divf %131, %132 : vector<8x1xf32>
    %134 = vector.broadcast %126 : vector<8x1xf32> to vector<8x32xf32>
    %135 = arith.subf %122, %134 : vector<8x32xf32>
    %cst_56 = arith.constant 9.99999974E-6 : f32
    %136 = vector.broadcast %cst_56 : f32 to vector<8x1xf32>
    %137 = arith.addf %133, %136 : vector<8x1xf32>
    %138 = math.rsqrt %137 : vector<8x1xf32>
    %139 = vector.broadcast %138 : vector<8x1xf32> to vector<8x32xf32>
    %140 = arith.mulf %135, %139 : vector<8x32xf32>
    %141 = vector.broadcast %22 : vector<1x32xf32> to vector<8x32xf32>
    %142 = arith.mulf %140, %141 : vector<8x32xf32>
    %143 = vector.broadcast %23 : vector<1x32xf32> to vector<8x32xf32>
    %144 = arith.addf %142, %143 : vector<8x32xf32>
    %c1_i32 = arith.constant 1 : i32
    %cst_57 = arith.constant dense<0.000000e+00> : vector<8x32xf32>
    %145 = tpu.matmul %144, %5, %cst_57 {dimension_numbers = #tpu.dot_dimension_numbers<[1], [0], [0], [1], [0, 0, 1, 1], [], []>} : vector<8x32xf32>, vector<32x32xf32>, vector<8x32xf32> -> vector<8x32xf32>
    %146 = vector.broadcast %15 : vector<1x32xf32> to vector<8x32xf32>
    %147 = arith.addf %145, %146 : vector<8x32xf32>
    %148 = vector.extract_strided_slice %147 {offsets = [0, 0], sizes = [8, 8], strides = [1, 1]} : vector<8x32xf32> to vector<8x8xf32>
    %149 = vector.extract_strided_slice %147 {offsets = [0, 8], sizes = [8, 8], strides = [1, 1]} : vector<8x32xf32> to vector<8x8xf32>
    %150 = vector.extract_strided_slice %147 {offsets = [0, 16], sizes = [8, 8], strides = [1, 1]} : vector<8x32xf32> to vector<8x8xf32>
    %151 = vector.extract_strided_slice %147 {offsets = [0, 24], sizes = [8, 8], strides = [1, 1]} : vector<8x32xf32> to vector<8x8xf32>
    %152 = vector.shape_cast %148 : vector<8x8xf32> to vector<1x8x8xf32>
    %153 = vector.shape_cast %149 : vector<8x8xf32> to vector<1x8x8xf32>
    %154 = vector.shape_cast %150 : vector<8x8xf32> to vector<1x8x8xf32>
    %155 = vector.shape_cast %151 : vector<8x8xf32> to vector<1x8x8xf32>
    %156 = tpu.concatenate %152, %153, %154, %155 in 0 : vector<1x8x8xf32>, vector<1x8x8xf32>, vector<1x8x8xf32>, vector<1x8x8xf32> -> vector<4x8x8xf32>
    "tpu.trace_start"() <{level = 10 : i32, message = "hqd,hkd->hqk"}> : () -> ()
    %cst_58 = arith.constant dense<0.000000e+00> : vector<4x8x8xf32>
    %157 = tpu.matmul %156, %38, %cst_58 {dimension_numbers = #tpu.dot_dimension_numbers<[2], [2], [1], [1], [0, 0, 0, 1, 1, 1], [0], [0]>} : vector<4x8x8xf32>, vector<4x8x8xf32>, vector<4x8x8xf32> -> vector<4x8x8xf32>
    "tpu.trace_stop"() : () -> ()
    %158 = vector.broadcast %52 : vector<1x1x8xf32> to vector<4x8x8xf32>
    %159 = arith.addf %157, %158 : vector<4x8x8xf32>
    %cst_59 = arith.constant dense<0xFF800000> : vector<4x8xf32>
    %160 = vector.multi_reduction <maximumf>, %159, %cst_59 [2] : vector<4x8x8xf32> to vector<4x8xf32>
    %161 = vector.shape_cast %160 : vector<4x8xf32> to vector<4x8x1xf32>
    %162 = vector.broadcast %161 : vector<4x8x1xf32> to vector<4x8x8xf32>
    %163 = arith.subf %159, %162 : vector<4x8x8xf32>
    %164 = math.exp %163 : vector<4x8x8xf32>
    %cst_60 = arith.constant dense<0.000000e+00> : vector<4x8xf32>
    %165 = vector.multi_reduction <add>, %164, %cst_60 [2] : vector<4x8x8xf32> to vector<4x8xf32>
    %166 = vector.shape_cast %165 : vector<4x8xf32> to vector<4x8x1xf32>
    %167 = tpu.reciprocal %166 {approx = true} : vector<4x8x1xf32> -> vector<4x8x1xf32>
    %168 = vector.broadcast %167 : vector<4x8x1xf32> to vector<4x8x8xf32>
    %169 = arith.mulf %164, %168 : vector<4x8x8xf32>
    "tpu.trace_start"() <{level = 10 : i32, message = "hqk,hkd->hqd"}> : () -> ()
    %cst_61 = arith.constant dense<0.000000e+00> : vector<4x8x8xf32>
    %170 = tpu.matmul %169, %47, %cst_61 {dimension_numbers = #tpu.dot_dimension_numbers<[2], [1], [1], [2], [0, 0, 0, 1, 1, 2], [0], [0]>} : vector<4x8x8xf32>, vector<4x8x8xf32>, vector<4x8x8xf32> -> vector<4x8x8xf32>
    "tpu.trace_stop"() : () -> ()
    %171 = vector.extract_strided_slice %170 {offsets = [0, 0, 0], sizes = [1, 8, 8], strides = [1, 1, 1]} : vector<4x8x8xf32> to vector<1x8x8xf32>
    %172 = vector.shape_cast %171 : vector<1x8x8xf32> to vector<8x8xf32>
    %173 = vector.extract_strided_slice %170 {offsets = [1, 0, 0], sizes = [1, 8, 8], strides = [1, 1, 1]} : vector<4x8x8xf32> to vector<1x8x8xf32>
    %174 = vector.shape_cast %173 : vector<1x8x8xf32> to vector<8x8xf32>
    %175 = vector.extract_strided_slice %170 {offsets = [2, 0, 0], sizes = [1, 8, 8], strides = [1, 1, 1]} : vector<4x8x8xf32> to vector<1x8x8xf32>
    %176 = vector.shape_cast %175 : vector<1x8x8xf32> to vector<8x8xf32>
    %177 = vector.extract_strided_slice %170 {offsets = [3, 0, 0], sizes = [1, 8, 8], strides = [1, 1, 1]} : vector<4x8x8xf32> to vector<1x8x8xf32>
    %178 = vector.shape_cast %177 : vector<1x8x8xf32> to vector<8x8xf32>
    %179 = tpu.concatenate %172, %174, %176, %178 in 1 : vector<8x8xf32>, vector<8x8xf32>, vector<8x8xf32>, vector<8x8xf32> -> vector<8x32xf32>
    %cst_62 = arith.constant dense<0.000000e+00> : vector<8x32xf32>
    %180 = tpu.matmul %179, %11, %cst_62 {dimension_numbers = #tpu.dot_dimension_numbers<[1], [0], [0], [1], [0, 0, 1, 1], [], []>} : vector<8x32xf32>, vector<32x32xf32>, vector<8x32xf32> -> vector<8x32xf32>
    %181 = vector.broadcast %18 : vector<1x32xf32> to vector<8x32xf32>
    %182 = arith.addf %180, %181 : vector<8x32xf32>
    %183 = arith.addf %144, %182 : vector<8x32xf32>
    %cst_63 = arith.constant dense<0.000000e+00> : vector<8xf32>
    %184 = vector.multi_reduction <add>, %183, %cst_63 [1] : vector<8x32xf32> to vector<8xf32>
    %185 = vector.shape_cast %184 : vector<8xf32> to vector<8x1xf32>
    %cst_64 = arith.constant 3.200000e+01 : f32
    %186 = vector.broadcast %cst_64 : f32 to vector<8x1xf32>
    %187 = arith.divf %185, %186 : vector<8x1xf32>
    %188 = vector.broadcast %187 : vector<8x1xf32> to vector<8x32xf32>
    %189 = arith.subf %183, %188 : vector<8x32xf32>
    %190 = arith.mulf %189, %189 : vector<8x32xf32>
    %cst_65 = arith.constant dense<0.000000e+00> : vector<8xf32>
    %191 = vector.multi_reduction <add>, %190, %cst_65 [1] : vector<8x32xf32> to vector<8xf32>
    %192 = vector.shape_cast %191 : vector<8xf32> to vector<8x1xf32>
    %cst_66 = arith.constant 3.200000e+01 : f32
    %193 = vector.broadcast %cst_66 : f32 to vector<8x1xf32>
    %194 = arith.divf %192, %193 : vector<8x1xf32>
    %195 = vector.broadcast %187 : vector<8x1xf32> to vector<8x32xf32>
    %196 = arith.subf %183, %195 : vector<8x32xf32>
    %cst_67 = arith.constant 9.99999974E-6 : f32
    %197 = vector.broadcast %cst_67 : f32 to vector<8x1xf32>
    %198 = arith.addf %194, %197 : vector<8x1xf32>
    %199 = math.rsqrt %198 : vector<8x1xf32>
    %200 = vector.broadcast %199 : vector<8x1xf32> to vector<8x32xf32>
    %201 = arith.mulf %196, %200 : vector<8x32xf32>
    %202 = vector.broadcast %20 : vector<1x32xf32> to vector<8x32xf32>
    %203 = arith.mulf %201, %202 : vector<8x32xf32>
    %204 = vector.broadcast %21 : vector<1x32xf32> to vector<8x32xf32>
    %205 = arith.addf %203, %204 : vector<8x32xf32>
    %cst_68 = arith.constant dense<0.000000e+00> : vector<8x64xf32>
    %206 = tpu.matmul %205, %12, %cst_68 {dimension_numbers = #tpu.dot_dimension_numbers<[1], [0], [0], [1], [0, 0, 1, 1], [], []>} : vector<8x32xf32>, vector<32x64xf32>, vector<8x64xf32> -> vector<8x64xf32>
    %207 = vector.broadcast %14 : vector<1x64xf32> to vector<8x64xf32>
    %208 = arith.addf %206, %207 : vector<8x64xf32>
    %cst_69 = arith.constant 0.000000e+00 : f32
    %209 = vector.broadcast %cst_69 : f32 to vector<8x64xf32>
    %210 = arith.maximumf %208, %209 : vector<8x64xf32>
    %cst_70 = arith.constant dense<0.000000e+00> : vector<8x32xf32>
    %211 = tpu.matmul %210, %13, %cst_70 {dimension_numbers = #tpu.dot_dimension_numbers<[1], [0], [0], [1], [0, 0, 1, 1], [], []>} : vector<8x64xf32>, vector<64x32xf32>, vector<8x32xf32> -> vector<8x32xf32>
    %212 = vector.broadcast %19 : vector<1x32xf32> to vector<8x32xf32>
    %213 = arith.addf %211, %212 : vector<8x32xf32>
    %214 = arith.addf %205, %213 : vector<8x32xf32>
    %cst_71 = arith.constant dense<0.000000e+00> : vector<8xf32>
    %215 = vector.multi_reduction <add>, %214, %cst_71 [1] : vector<8x32xf32> to vector<8xf32>
    %216 = vector.shape_cast %215 : vector<8xf32> to vector<8x1xf32>
    %cst_72 = arith.constant 3.200000e+01 : f32
    %217 = vector.broadcast %cst_72 : f32 to vector<8x1xf32>
    %218 = arith.divf %216, %217 : vector<8x1xf32>
    %219 = vector.broadcast %218 : vector<8x1xf32> to vector<8x32xf32>
    %220 = arith.subf %214, %219 : vector<8x32xf32>
    %221 = arith.mulf %220, %220 : vector<8x32xf32>
    %cst_73 = arith.constant dense<0.000000e+00> : vector<8xf32>
    %222 = vector.multi_reduction <add>, %221, %cst_73 [1] : vector<8x32xf32> to vector<8xf32>
    %223 = vector.shape_cast %222 : vector<8xf32> to vector<8x1xf32>
    %cst_74 = arith.constant 3.200000e+01 : f32
    %224 = vector.broadcast %cst_74 : f32 to vector<8x1xf32>
    %225 = arith.divf %223, %224 : vector<8x1xf32>
    %226 = vector.broadcast %218 : vector<8x1xf32> to vector<8x32xf32>
    %227 = arith.subf %214, %226 : vector<8x32xf32>
    %cst_75 = arith.constant 9.99999974E-6 : f32
    %228 = vector.broadcast %cst_75 : f32 to vector<8x1xf32>
    %229 = arith.addf %225, %228 : vector<8x1xf32>
    %230 = math.rsqrt %229 : vector<8x1xf32>
    %231 = vector.broadcast %230 : vector<8x1xf32> to vector<8x32xf32>
    %232 = arith.mulf %227, %231 : vector<8x32xf32>
    %233 = vector.broadcast %22 : vector<1x32xf32> to vector<8x32xf32>
    %234 = arith.mulf %232, %233 : vector<8x32xf32>
    %235 = vector.broadcast %23 : vector<1x32xf32> to vector<8x32xf32>
    %236 = arith.addf %234, %235 : vector<8x32xf32>
    %c0_76 = arith.constant 0 : index
    %c0_77 = arith.constant 0 : index
    %c0_78 = arith.constant 0 : index
    %237 = vector.load %arg9[%c0_76, %c0_77, %c0_78] : memref<1x8x32xf32, #tpu.memory_space<vmem>>, vector<1x8x32xf32>
    %238 = vector.shape_cast %237 : vector<1x8x32xf32> to vector<8x32xf32>
    %239 = vector.shape_cast %236 : vector<8x32xf32> to vector<1x8x32xf32>
    tpu.vector_store %arg9[%c0_76, %c0_77, %c0_78], %239 {strides = array<i32>} : memref<1x8x32xf32, #tpu.memory_space<vmem>>, vector<1x8x32xf32>,
    return
  }
  func.func @transform_0(%arg0: i32) -> (i32, i32, i32) {
    %c0_i32 = arith.constant 0 : i32
    %c0_i32_0 = arith.constant 0 : i32
    %c0_i32_1 = arith.constant 0 : i32
    return %arg0, %c0_i32, %c0_i32_0 : i32, i32, i32
  }
  func.func @transform_1(%arg0: i32) -> (i32, i32, i32) {
    %c0_i32 = arith.constant 0 : i32
    %c0_i32_0 = arith.constant 0 : i32
    %c0_i32_1 = arith.constant 0 : i32
    return %arg0, %c0_i32, %c0_i32_0 : i32, i32, i32
  }
  func.func @transform_2(%arg0: i32) -> (i32, i32, i32) {
    %c0_i32 = arith.constant 0 : i32
    %c0_i32_0 = arith.constant 0 : i32
    %c0_i32_1 = arith.constant 0 : i32
    return %arg0, %c0_i32, %c0_i32_0 : i32, i32, i32
  }
  func.func @transform_3(%arg0: i32) -> (i32, i32, i32) {
    %c0_i32 = arith.constant 0 : i32
    %c0_i32_0 = arith.constant 0 : i32
    %c0_i32_1 = arith.constant 0 : i32
    %c0_i32_2 = arith.constant 0 : i32
    return %c0_i32, %c0_i32_0, %c0_i32_1 : i32, i32, i32
  }
  func.func @transform_4(%arg0: i32) -> (i32, i32) {
    %c0_i32 = arith.constant 0 : i32
    %c0_i32_0 = arith.constant 0 : i32
    %c0_i32_1 = arith.constant 0 : i32
    return %c0_i32, %c0_i32_0 : i32, i32
  }
  func.func @transform_5(%arg0: i32) -> (i32, i32) {
    %c0_i32 = arith.constant 0 : i32
    %c0_i32_0 = arith.constant 0 : i32
    %c0_i32_1 = arith.constant 0 : i32
    return %c0_i32, %c0_i32_0 : i32, i32
  }
  func.func @transform_6(%arg0: i32) -> (i32, i32) {
    %c0_i32 = arith.constant 0 : i32
    %c0_i32_0 = arith.constant 0 : i32
    %c0_i32_1 = arith.constant 0 : i32
    return %c0_i32, %c0_i32_0 : i32, i32
  }
  func.func @transform_7(%arg0: i32) -> (i32, i32) {
    %c0_i32 = arith.constant 0 : i32
    %c0_i32_0 = arith.constant 0 : i32
    %c0_i32_1 = arith.constant 0 : i32
    return %c0_i32, %c0_i32_0 : i32, i32
  }
  func.func @transform_8(%arg0: i32) -> (i32, i32, i32) {
    %c0_i32 = arith.constant 0 : i32
    %c0_i32_0 = arith.constant 0 : i32
    %c0_i32_1 = arith.constant 0 : i32
    return %arg0, %c0_i32, %c0_i32_0 : i32, i32, i32
  }
}

</mosaic_0001>

<llo_original>
// kernel: tpu_custom_call.1
$region0: #{tpu_custom_call.1}
  #allocation0 [shape = 'u32[]', space=smem, size = 0x4, offset = 0x4, fixed_abs, tag = 'smem constant byte address 0x4 - core index']
  #allocation1 [shape = 'u32[144,128]{1,0:T(1,128)}', space=vmem, size = 0x12000, scoped, tag = 'internal scratch']
  %s0 = inlined_call_operand.vmem [shape: f32[2,8,32], index: 0, kind: input, shape index: {}]
  %s1 = inlined_call_operand.vmem [shape: f32[2,8,32], index: 1, kind: input, shape index: {}]
  %s2 = inlined_call_operand.vmem [shape: f32[2,1,8], index: 2, kind: input, shape index: {}]
  %s3 = inlined_call_operand.hbm [shape: f32[4,32,32], index: 3, kind: input, shape index: {}]
  %s4 = inlined_call_operand.vmem [shape: f32[9,32], index: 4, kind: input, shape index: {}]
  %s5 = inlined_call_operand.vmem [shape: f32[32,64], index: 5, kind: input, shape index: {}]
  %s6 = inlined_call_operand.vmem [shape: f32[1,64], index: 6, kind: input, shape index: {}]
  %s7 = inlined_call_operand.vmem [shape: f32[64,32], index: 7, kind: input, shape index: {}]
  %s8 = inlined_call_operand.hbm [shape: f32[2,8,32], index: 8, kind: output, shape index: {}]
  %s9 = sld [smem:[#allocation0]]
  $region69: #{tpu_custom_call.1} parent=0
    _
  %s11 = ssub.s32 1, %s9
  %s12 = scalar_select 0, %s11, %s9
  $region1: #{tpu_custom_call.1} parent=0
    #allocation2 [shape = 'u8[65536]{0}', space=vmem, size = 0x10000, scoped, tag = 'input window, operand 3, single buffered']
    #allocation3 [shape = 's32[2]{0}', space=sflag, size = 0x8, scoped, tag = 'scoped memory for tpu_custom_call.1']
    #allocation4 [shape = 's32[2]{0}', space=sflag, size = 0x8, scoped, tag = 'scoped memory for tpu_custom_call.1']
    #allocation5 [shape = 'u8[8192]{0}', space=vmem, size = 0x2000, scoped, tag = 'output window, operand 0']
    %13 = vsyncpa [#allocation3], 0
    %14 = vsyncpa [#allocation4], 0
    %s15 = scalar_lea.sflag [#allocation4], 1
    %16 = vsyncpa %s15, 0
    loop: start=0, step=1, limit=4
    $region2: #{tpu_custom_call.1} parent=1 // loop_pre_header
      _
    $region3: #{tpu_custom_call.1} parent=1 // loop_header
      %s18 = sphi 0, %s22
      %p19 = scmp.ge.s32.totalorder %s18, 4
      %s28 = sphi 0, %s30
      %s31 = sphi 0, %s28
      %s32 = sphi 0, %s31
      %s48 = sphi 0, %s32
      %s54 = sphi 0, %s56
      %s57 = sphi 0, %s54
      %s58 = sphi 0, %s57
      %s74 = sphi 0, %s58
      %s80 = sphi 0, %s82
      %s83 = sphi 0, %s80
      %s84 = sphi 0, %s83
      %s100 = sphi 0, %s84
      %s104 = sphi 0, %s104
      %s106 = sphi 0, %s104
      %s107 = sphi 0, %s106
      %s121 = sphi 0, %s107
      %s125 = sphi 0, %s125
      %s127 = sphi 0, %s125
      %s128 = sphi 0, %s127
      %s142 = sphi 0, %s128
      %s146 = sphi 0, %s146
      %s148 = sphi 0, %s146
      %s149 = sphi 0, %s148
      %s163 = sphi 0, %s149
      %s167 = sphi 0, %s167
      %s169 = sphi 0, %s167
      %s170 = sphi 0, %s169
      %s184 = sphi 0, %s170
      %s188 = sphi 0, %s188
      %s190 = sphi 0, %s188
      %s191 = sphi 0, %s190
      %s205 = sphi 0, %s191
      %s211 = sphi 0, %s213
      %s214 = sphi 0, %s211
      %s215 = sphi 0, %s214
      %s231 = sphi 0, %s215
    $region4: #{tpu_custom_call.1} parent=1 // loop_header_branch
      %21 = sbr.rel (%p19) target = $region8
    $region5: #{tpu_custom_call.1} parent=1 // loop_body
      %s23 = ssub.s32 %s18, 1
      %s24 = ssub.s32 %s18, 2
      %s25 = sadd.s32 %s18, 1
      %s26 = ssub.s32 %s18, %s25
      %p27 = scmp.eq.s32.totalorder %s26, 0
      %s29 = sadd.s32 %s28, 1
      %s30 = scalar_select %p27, %s28, %s29
      %p33 = pneg %p27
      %p34 = scmp.eq.s32.totalorder %s18, 1
      %p35 = por %p33, %p34
      %p36 = scmp.ne.s32.totalorder %s28, %s31
      %p37 = scmp.eq.s32.totalorder %s18, 0
      %p38 = por %p36, %p37
      %p39 = scmp.ne.s32.totalorder %s28, %s31
      %p40 = scmp.eq.s32.totalorder %s23, 1
      %p41 = por %p39, %p40
      %p42 = scmp.ne.s32.totalorder %s31, %s32
      %p43 = scmp.eq.s32.totalorder %s23, 0
      %p44 = por %p42, %p43
      %p45 = scmp.ne.s32.totalorder %s31, %s32
      %p46 = scmp.eq.s32.totalorder %s24, 1
      %p47 = por %p45, %p46
      %p49 = scmp.ne.s32.totalorder %s32, %s48
      %p50 = scmp.eq.s32.totalorder %s24, 0
      %p51 = por %p49, %p50
      %s52 = ssub.s32 %s18, %s25
      %p53 = scmp.eq.s32.totalorder %s52, 0
      %s55 = sadd.s32 %s54, 1
      %s56 = scalar_select %p53, %s54, %s55
      %p59 = pneg %p53
      %p60 = scmp.eq.s32.totalorder %s18, 1
      %p61 = por %p59, %p60
      %p62 = scmp.ne.s32.totalorder %s54, %s57
      %p63 = scmp.eq.s32.totalorder %s18, 0
      %p64 = por %p62, %p63
      %p65 = scmp.ne.s32.totalorder %s54, %s57
      %p66 = scmp.eq.s32.totalorder %s23, 1
      %p67 = por %p65, %p66
      %p68 = scmp.ne.s32.totalorder %s57, %s58
      %p69 = scmp.eq.s32.totalorder %s23, 0
      %p70 = por %p68, %p69
      %p71 = scmp.ne.s32.totalorder %s57, %s58
      %p72 = scmp.eq.s32.totalorder %s24, 1
      %p73 = por %p71, %p72
      %p75 = scmp.ne.s32.totalorder %s58, %s74
      %p76 = scmp.eq.s32.totalorder %s24, 0
      %p77 = por %p75, %p76
      %s78 = ssub.s32 %s18, %s25
      %p79 = scmp.eq.s32.totalorder %s78, 0
      %s81 = sadd.s32 %s80, 1
      %s82 = scalar_select %p79, %s80, %s81
      %p85 = pneg %p79
      %p86 = scmp.eq.s32.totalorder %s18, 1
      %p87 = por %p85, %p86
      %p88 = scmp.ne.s32.totalorder %s80, %s83
      %p89 = scmp.eq.s32.totalorder %s18, 0
      %p90 = por %p88, %p89
      %p91 = scmp.ne.s32.totalorder %s80, %s83
      %p92 = scmp.eq.s32.totalorder %s23, 1
      %p93 = por %p91, %p92
      %p94 = scmp.ne.s32.totalorder %s83, %s84
      %p95 = scmp.eq.s32.totalorder %s23, 0
      %p96 = por %p94, %p95
      %p97 = scmp.ne.s32.totalorder %s83, %s84
      %p98 = scmp.eq.s32.totalorder %s24, 1
      %p99 = por %p97, %p98
      %p101 = scmp.ne.s32.totalorder %s84, %s100
      %p102 = scmp.eq.s32.totalorder %s24, 0
      %p103 = por %p101, %p102
      %s105 = sadd.s32 %s104, 1
      %p108 = scmp.eq.s32.totalorder %s18, 1
      %p109 = scmp.ne.s32.totalorder %s104, %s106
      %p110 = scmp.eq.s32.totalorder %s18, 0
      %p111 = por %p109, %p110
      %p112 = scmp.ne.s32.totalorder %s104, %s106
      %p113 = scmp.eq.s32.totalorder %s23, 1
      %p114 = por %p112, %p113
      %p115 = scmp.ne.s32.totalorder %s106, %s107
      %p116 = scmp.eq.s32.totalorder %s23, 0
      %p117 = por %p115, %p116
      %p118 = scmp.ne.s32.totalorder %s106, %s107
      %p119 = scmp.eq.s32.totalorder %s24, 1
      %p120 = por %p118, %p119
      %p122 = scmp.ne.s32.totalorder %s107, %s121
      %p123 = scmp.eq.s32.totalorder %s24, 0
      %p124 = por %p122, %p123
      %s126 = sadd.s32 %s125, 1
      %p129 = scmp.eq.s32.totalorder %s18, 1
      %p130 = scmp.ne.s32.totalorder %s125, %s127
      %p131 = scmp.eq.s32.totalorder %s18, 0
      %p132 = por %p130, %p131
      %p133 = scmp.ne.s32.totalorder %s125, %s127
      %p134 = scmp.eq.s32.totalorder %s23, 1
      %p135 = por %p133, %p134
      %p136 = scmp.ne.s32.totalorder %s127, %s128
      %p137 = scmp.eq.s32.totalorder %s23, 0
      %p138 = por %p136, %p137
      %p139 = scmp.ne.s32.totalorder %s127, %s128
      %p140 = scmp.eq.s32.totalorder %s24, 1
      %p141 = por %p139, %p140
      %p143 = scmp.ne.s32.totalorder %s128, %s142
      %p144 = scmp.eq.s32.totalorder %s24, 0
      %p145 = por %p143, %p144
      %s147 = sadd.s32 %s146, 1
      %p150 = scmp.eq.s32.totalorder %s18, 1
      %p151 = scmp.ne.s32.totalorder %s146, %s148
      %p152 = scmp.eq.s32.totalorder %s18, 0
      %p153 = por %p151, %p152
      %p154 = scmp.ne.s32.totalorder %s146, %s148
      %p155 = scmp.eq.s32.totalorder %s23, 1
      %p156 = por %p154, %p155
      %p157 = scmp.ne.s32.totalorder %s148, %s149
      %p158 = scmp.eq.s32.totalorder %s23, 0
      %p159 = por %p157, %p158
      %p160 = scmp.ne.s32.totalorder %s148, %s149
      %p161 = scmp.eq.s32.totalorder %s24, 1
      %p162 = por %p160, %p161
      %p164 = scmp.ne.s32.totalorder %s149, %s163
      %p165 = scmp.eq.s32.totalorder %s24, 0
      %p166 = por %p164, %p165
      %s168 = sadd.s32 %s167, 1
      %p171 = scmp.eq.s32.totalorder %s18, 1
      %p172 = scmp.ne.s32.totalorder %s167, %s169
      %p173 = scmp.eq.s32.totalorder %s18, 0
      %p174 = por %p172, %p173
      %p175 = scmp.ne.s32.totalorder %s167, %s169
      %p176 = scmp.eq.s32.totalorder %s23, 1
      %p177 = por %p175, %p176
      %p178 = scmp.ne.s32.totalorder %s169, %s170
      %p179 = scmp.eq.s32.totalorder %s23, 0
      %p180 = por %p178, %p179
      %p181 = scmp.ne.s32.totalorder %s169, %s170
      %p182 = scmp.eq.s32.totalorder %s24, 1
      %p183 = por %p181, %p182
      %p185 = scmp.ne.s32.totalorder %s170, %s184
      %p186 = scmp.eq.s32.totalorder %s24, 0
      %p187 = por %p185, %p186
      %s189 = sadd.s32 %s188, 1
      %p192 = scmp.eq.s32.totalorder %s18, 1
      %p193 = scmp.ne.s32.totalorder %s188, %s190
      %p194 = scmp.eq.s32.totalorder %s18, 0
      %p195 = por %p193, %p194
      %p196 = scmp.ne.s32.totalorder %s188, %s190
      %p197 = scmp.eq.s32.totalorder %s23, 1
      %p198 = por %p196, %p197
      %p199 = scmp.ne.s32.totalorder %s190, %s191
      %p200 = scmp.eq.s32.totalorder %s23, 0
      %p201 = por %p199, %p200
      %p202 = scmp.ne.s32.totalorder %s190, %s191
      %p203 = scmp.eq.s32.totalorder %s24, 1
      %p204 = por %p202, %p203
      %p206 = scmp.ne.s32.totalorder %s191, %s205
      %p207 = scmp.eq.s32.totalorder %s24, 0
      %p208 = por %p206, %p207
      %s209 = ssub.s32 %s18, %s25
      %p210 = scmp.eq.s32.totalorder %s209, 0
      %s212 = sadd.s32 %s211, 1
      %s213 = scalar_select %p210, %s211, %s212
      %p216 = pneg %p210
      %p217 = scmp.eq.s32.totalorder %s18, 1
      %p218 = por %p216, %p217
      %p219 = scmp.ne.s32.totalorder %s211, %s214
      %p220 = scmp.eq.s32.totalorder %s18, 0
      %p221 = por %p219, %p220
      %p222 = scmp.ne.s32.totalorder %s211, %s214
      %p223 = scmp.eq.s32.totalorder %s23, 1
      %p224 = por %p222, %p223
      %p225 = scmp.ne.s32.totalorder %s214, %s215
      %p226 = scmp.eq.s32.totalorder %s23, 0
      %p227 = por %p225, %p226
      %p228 = scmp.ne.s32.totalorder %s214, %s215
      %p229 = scmp.eq.s32.totalorder %s24, 1
      %p230 = por %p228, %p229
      %p232 = scmp.ne.s32.totalorder %s215, %s231
      %p233 = scmp.eq.s32.totalorder %s24, 0
      %p234 = por %p232, %p233
      %p235 = scmp.le.s32.totalorder 1, %s18
      %p236 = scmp.lt.s32.totalorder %s18, 3
      %p237 = pnand %p235, %p236
      %p238 = pneg %p237
      // Predicated region
      $region9: #{tpu_custom_call.1} parent=5 // pred_check
        _
      $region10: #{tpu_custom_call.1} parent=5 // pred_check_branch
        %240 = sbr.rel (%p237) target = $region12
      $region11: #{tpu_custom_call.1} parent=5 // pred_region
        %s241 = ssub.s32 %s18, 1
        // Predicated region
        $region13: #{tpu_custom_call.1} parent=11 // pred_check
          %p242 = pneg %p117
        $region14: #{tpu_custom_call.1} parent=11 // pred_check_branch
          %244 = sbr.rel (%p242) target = $region16
        $region15: #{tpu_custom_call.1} parent=11 // pred_region
          %s246 = ssub.s32 2048, 2048
          %247 = vsyncadd [#allocation3], %s246
          %s248 = sshll.u32 [#allocation2], 4
          %s249 = int_to_ptr.vmem [resolvable:$true] %s248
          %254 = dma.hbm_to_vmem [thread:$0]  %s3, 2048, %s249, [#allocation3], 128, 128, 8
        $region16: #{tpu_custom_call.1} parent=11 // pred_fallthru
          _
        // Predicated region
        $region17: #{tpu_custom_call.1} parent=11 // pred_check
          %p255 = pneg %p138
        $region18: #{tpu_custom_call.1} parent=11 // pred_check_branch
          %257 = sbr.rel (%p255) target = $region20
        $region19: #{tpu_custom_call.1} parent=11 // pred_region
          _
        $region20: #{tpu_custom_call.1} parent=11 // pred_fallthru
          _
        // Predicated region
        $region21: #{tpu_custom_call.1} parent=11 // pred_check
          %p258 = pneg %p159
        $region22: #{tpu_custom_call.1} parent=11 // pred_check_branch
          %260 = sbr.rel (%p258) target = $region24
        $region23: #{tpu_custom_call.1} parent=11 // pred_region
          _
        $region24: #{tpu_custom_call.1} parent=11 // pred_fallthru
          _
        // Predicated region
        $region25: #{tpu_custom_call.1} parent=11 // pred_check
          %p261 = pneg %p180
        $region26: #{tpu_custom_call.1} parent=11 // pred_check_branch
          %263 = sbr.rel (%p261) target = $region28
        $region27: #{tpu_custom_call.1} parent=11 // pred_region
          _
        $region28: #{tpu_custom_call.1} parent=11 // pred_fallthru
          _
        // Predicated region
        $region29: #{tpu_custom_call.1} parent=11 // pred_check
          %p264 = pneg %p201
        $region30: #{tpu_custom_call.1} parent=11 // pred_check_branch
          %266 = sbr.rel (%p264) target = $region32
        $region31: #{tpu_custom_call.1} parent=11 // pred_region
          _
        $region32: #{tpu_custom_call.1} parent=11 // pred_fallthru
          _
      $region12: #{tpu_custom_call.1} parent=5 // pred_fallthru
        _
      %p267 = scmp.lt.s32.totalorder %s18, 2
      // Predicated region
      $region33: #{tpu_custom_call.1} parent=5 // pred_check
        %p268 = pneg %p267
      $region34: #{tpu_custom_call.1} parent=5 // pred_check_branch
        %270 = sbr.rel (%p268) target = $region36
      $region35: #{tpu_custom_call.1} parent=5 // pred_region
        // Predicated region
        $region37: #{tpu_custom_call.1} parent=35 // pred_check
          %p271 = pneg %p38
        $region38: #{tpu_custom_call.1} parent=35 // pred_check_branch
          %273 = sbr.rel (%p271) target = $region40
        $region39: #{tpu_custom_call.1} parent=35 // pred_region
          %p274 = scmp.lt.s32.totalorder %s18, 1
          %s275 = scalar_select %p274, %s18, 1
          %s276 = smul.addr %s275, 8
          %s277 = scalar_lea.vmem %s0, %s276
        $region40: #{tpu_custom_call.1} parent=35 // pred_fallthru
          _
        // Predicated region
        $region41: #{tpu_custom_call.1} parent=35 // pred_check
          %p278 = pneg %p64
        $region42: #{tpu_custom_call.1} parent=35 // pred_check_branch
          %280 = sbr.rel (%p278) target = $region44
        $region43: #{tpu_custom_call.1} parent=35 // pred_region
          %p281 = scmp.lt.s32.totalorder %s18, 1
          %s282 = scalar_select %p281, %s18, 1
          %s283 = smul.addr %s282, 8
          %s284 = scalar_lea.vmem %s1, %s283
        $region44: #{tpu_custom_call.1} parent=35 // pred_fallthru
          _
        // Predicated region
        $region45: #{tpu_custom_call.1} parent=35 // pred_check
          %p285 = pneg %p90
        $region46: #{tpu_custom_call.1} parent=35 // pred_check_branch
          %287 = sbr.rel (%p285) target = $region48
        $region47: #{tpu_custom_call.1} parent=35 // pred_region
          %p288 = scmp.lt.s32.totalorder %s18, 1
          %s289 = scalar_select %p288, %s18, 1
          %s290 = scalar_lea.vmem %s2, %s289
        $region48: #{tpu_custom_call.1} parent=35 // pred_fallthru
          _
      $region36: #{tpu_custom_call.1} parent=5 // pred_fallthru
        _
      %p291 = scmp.le.s32.totalorder 1, %s18
      %p292 = scmp.lt.s32.totalorder %s18, 3
      %p293 = pnand %p291, %p292
      %p294 = pneg %p293
      // Predicated region
      $region49: #{tpu_custom_call.1} parent=5 // pred_check
        _
      $region50: #{tpu_custom_call.1} parent=5 // pred_check_branch
        %296 = sbr.rel (%p293) target = $region52
      $region51: #{tpu_custom_call.1} parent=5 // pred_region
        %s297 = ssub.s32 %s18, 1
        // Predicated region
        $region53: #{tpu_custom_call.1} parent=51 // pred_check
          %p298 = pneg %p117
        $region54: #{tpu_custom_call.1} parent=51 // pred_check_branch
          %300 = sbr.rel (%p298) target = $region56
        $region55: #{tpu_custom_call.1} parent=51 // pred_region
          %301 = dma.done [#allocation3], 2048
        $region56: #{tpu_custom_call.1} parent=51 // pred_fallthru
          _
        %p302 = scmp.lt.s32.totalorder %s23, 1
        %s303 = scalar_select %p302, %s23, 1
        %s304 = smul.addr %s303, 8
        %s305 = scalar_lea.vmem %s0, %s304
        %p306 = pneg %p44
        %p307 = pneg %p41
        %p308 = scmp.lt.s32.totalorder %s23, 1
        %s309 = scalar_select %p308, %s23, 1
        %s310 = smul.addr %s309, 8
        %s311 = scalar_lea.vmem %s1, %s310
        %p312 = pneg %p70
        %p313 = pneg %p67
        %p314 = scmp.lt.s32.totalorder %s23, 1
        %s315 = scalar_select %p314, %s23, 1
        %s316 = scalar_lea.vmem %s2, %s315
        %p317 = pneg %p96
        %p318 = pneg %p93
        %p319 = pneg %p117
        %p320 = pneg %p114
        %p321 = pneg %p138
        %p322 = pneg %p135
        %p323 = pneg %p159
        %p324 = pneg %p156
        %p325 = pneg %p180
        %p326 = pneg %p177
        %p327 = pneg %p201
        %p328 = pneg %p198
        %p329 = pneg %p227
        %p330 = pneg %p224
        %s331 = sand.u32 %s214, 1
        %s332 = scalar_lea.sflag [#allocation4], %s331
        %s333 = sand.u32 %s214, 1
        %s334 = smul.addr %s333, 8
        %s335 = scalar_lea.vmem [#allocation5], %s334
        %p336 = scmp.lt.s32.totalorder %s23, 1
        %s337 = scalar_select %p336, %s23, 1
        %s338 = smul.addr %s337, 8
        %s339 = scalar_lea.vmem %s0, %s338
        %p340 = scmp.lt.s32.totalorder %s23, 1
        %s341 = scalar_select %p340, %s23, 1
        %s342 = smul.addr %s341, 8
        %s343 = scalar_lea.vmem %s1, %s342
        %p344 = scmp.lt.s32.totalorder %s23, 1
        %s345 = scalar_select %p344, %s23, 1
        %s346 = scalar_lea.vmem %s2, %s345
        %v347 = vld [vmem:[%s339] sm:$0xff]
        %v348 = vld [vmem:[%s343] sm:$0xff]
        %v349 = vld [vmem:[#allocation2] sm:$0xff]
        %v350 = vld [vmem:[#allocation2 + $0x8] sm:$0xff]
        %v351 = vld [vmem:[#allocation2 + $0x10] sm:$0xff]
        %v352 = vld [vmem:[#allocation2 + $0x18] sm:$0xff]
        %s353 = scalar_lea.vmem [#allocation2], 32
        %v354 = vld [vmem:[%s353] sm:$0xff]
        %v355 = vld [vmem:[%s353 + $0x8] sm:$0xff]
        %v356 = vld [vmem:[%s353 + $0x10] sm:$0xff]
        %v357 = vld [vmem:[%s353 + $0x18] sm:$0xff]
        %s358 = scalar_lea.vmem [#allocation2], 64
        %v359 = vld [vmem:[%s358] sm:$0xff]
        %v360 = vld [vmem:[%s358 + $0x8] sm:$0xff]
        %v361 = vld [vmem:[%s358 + $0x10] sm:$0xff]
        %v362 = vld [vmem:[%s358 + $0x18] sm:$0xff]
        %s363 = scalar_lea.vmem [#allocation2], 96
        %v364 = vld [vmem:[%s363] sm:$0xff]
        %v365 = vld [vmem:[%s363 + $0x8] sm:$0xff]
        %v366 = vld [vmem:[%s363 + $0x10] sm:$0xff]
        %v367 = vld [vmem:[%s363 + $0x18] sm:$0xff]
        %v368 = vld [vmem:[%s5] sm:$0xff]
        %v369 = vld [vmem:[%s5 + $0x8] sm:$0xff]
        %v370 = vld [vmem:[%s5 + $0x10] sm:$0xff]
        %v371 = vld [vmem:[%s5 + $0x18] sm:$0xff]
        %v372 = vld [vmem:[%s7] sm:$0xff]
        %v373 = vld [vmem:[%s7 + $0x8] sm:$0xff]
        %v374 = vld [vmem:[%s7 + $0x10] sm:$0xff]
        %v375 = vld [vmem:[%s7 + $0x18] sm:$0xff]
        %v376 = vld [vmem:[%s7 + $0x20] sm:$0xff]
        %v377 = vld [vmem:[%s7 + $0x28] sm:$0xff]
        %v378 = vld [vmem:[%s7 + $0x30] sm:$0xff]
        %v379 = vld [vmem:[%s7 + $0x38] sm:$0xff]
        %v380 = vld [vmem:[%s6] sm:$0x1]
        %v381 = vld [vmem:[%s4] sm:$0x1]
        %v382 = vld [vmem:[%s4 + $0x1] sm:$0x1]
        %v383 = vld [vmem:[%s4 + $0x2] sm:$0x1]
        %v384 = vld [vmem:[%s4 + $0x3] sm:$0x1]
        %v385 = vld [vmem:[%s4 + $0x4] sm:$0x1]
        %v386 = vld [vmem:[%s4 + $0x5] sm:$0x1]
        %v387 = vld [vmem:[%s4 + $0x6] sm:$0x1]
        %v388 = vld [vmem:[%s4 + $0x7] sm:$0x1]
        %v389 = vld [vmem:[%s4 + $0x8] sm:$0x1]
        %v390 = vlaneseq
        %v391 = vshrl.u32 %v390, 7
        %v392 = vsub.s32 0, %v391
        %v393 = vrot.slane %v382, %v392
        %vm394 = vcmask 261120
        %v396 = vsel %vm394, %v348, 0
        %398 = vmatprep.subr.mxu0 0.0
        %399 = vmatpush1.msra.mxu0 %v354
        %400 = vmatprep.subr.mxu0 0.0
        %401 = vmatpush1.msra.mxu0 %v355
        %402 = vmatprep.subr.mxu0 0.0
        %403 = vmatpush1.msra.mxu0 %v356
        %404 = vmatprep.subr.mxu0 0.0
        %405 = vmatpush1.msra.mxu0 %v357
        %406 = vmatprep.subr.mxu0 0.0
        %407 = vmatpush1.msra.mxu0 0.0
        %408 = vmatprep.subr.mxu0 0.0
        %409 = vmatpush1.msra.mxu0 0.0
        %410 = vmatprep.subr.mxu0 0.0
        %411 = vmatpush1.msra.mxu0 0.0
        %412 = vmatprep.subr.mxu0 0.0
        %413 = vmatpush1.msra.mxu0 0.0
        %414 = vmatprep.subr.mxu0 0.0
        %415 = vmatpush1.msra.mxu0 0.0
        %416 = vmatprep.subr.mxu0 0.0
        %417 = vmatpush1.msra.mxu0 0.0
        %418 = vmatprep.subr.mxu0 0.0
        %419 = vmatpush1.msra.mxu0 0.0
        %420 = vmatprep.subr.mxu0 0.0
        %421 = vmatpush1.msra.mxu0 0.0
        %422 = vmatprep.subr.mxu0 0.0
        %423 = vmatpush1.msra.mxu0 0.0
        %424 = vmatprep.subr.mxu0 0.0
        %425 = vmatpush1.msra.mxu0 0.0
        %426 = vmatprep.subr.mxu0 0.0
        %427 = vmatpush1.msra.mxu0 0.0
        %428 = vmatprep.subr.mxu0 0.0
        %429 = vmatpush1.msra.mxu0 0.0
        %430 = vmatprep.subr.mxu0 0.0
        %431 = vmatpush1.msra.mxu0 0.0
        %432 = vmatprep.subr.mxu0 0.0
        %433 = vmatpush1.msra.mxu0 0.0
        %434 = vmatprep.subr.mxu0 0.0
        %435 = vmatpush1.msra.mxu0 0.0
        %436 = vmatprep.subr.mxu0 0.0
        %437 = vmatpush1.msra.mxu0 0.0
        %438 = vmatprep.subr.mxu0 0.0
        %439 = vmatpush1.msra.mxu0 0.0
        %440 = vmatprep.subr.mxu0 0.0
        %441 = vmatpush1.msra.mxu0 0.0
        %442 = vmatprep.subr.mxu0 0.0
        %443 = vmatpush1.msra.mxu0 0.0
        %444 = vmatprep.subr.mxu0 0.0
        %445 = vmatpush1.msra.mxu0 0.0
        %446 = vmatprep.subr.mxu0 0.0
        %447 = vmatpush1.msra.mxu0 0.0
        %448 = vmatprep.subr.mxu0 0.0
        %449 = vmatpush1.msra.mxu0 0.0
        %450 = vmatprep.subr.mxu0 0.0
        %451 = vmatpush1.msra.mxu0 0.0
        %452 = vmatprep.subr.mxu0 0.0
        %453 = vmatpush1.msra.mxu0 0.0
        %454 = vmatprep.subr.mxu0 0.0
        %455 = vmatpush1.msra.mxu0 0.0
        %456 = vmatprep.subr.mxu0 0.0
        %457 = vmatpush1.msra.mxu0 0.0
        %458 = vmatprep.subr.mxu0 0.0
        %459 = vmatpush1.msra.mxu0 0.0
        %460 = vmatprep.subr.mxu0 0.0
        %461 = vmatpush1.msra.mxu0 0.0
        %462 = vmatprep.mubr.f32.mxu0 0.0
        %463 = vmatmul.mubr.f32.gmra.mrb[0].mxu0 %v396
        %v464 = vpop.f32.mrb[0].mxu0
        %v465 = vadd.f32 %v393, %v464
        %v466 = vpop.f32.mrb[0].mxu0
        %467 = vdwg.mxu0
        %v468 = vlaneseq
        %v469 = vshrl.u32 %v468, 7
        %v470 = vsub.s32 0, %v469
        %v471 = vrot.slane %v383, %v470
        %472 = vmatprep.subr.mxu0 0.0
        %473 = vmatpush1.msra.mxu0 %v359
        %474 = vmatprep.subr.mxu0 0.0
        %475 = vmatpush1.msra.mxu0 %v360
        %476 = vmatprep.subr.mxu0 0.0
        %477 = vmatpush1.msra.mxu0 %v361
        %478 = vmatprep.subr.mxu0 0.0
        %479 = vmatpush1.msra.mxu0 %v362
        %480 = vmatprep.subr.mxu0 0.0
        %481 = vmatpush1.msra.mxu0 0.0
        %482 = vmatprep.subr.mxu0 0.0
        %483 = vmatpush1.msra.mxu0 0.0
        %484 = vmatprep.subr.mxu0 0.0
        %485 = vmatpush1.msra.mxu0 0.0
        %486 = vmatprep.subr.mxu0 0.0
        %487 = vmatpush1.msra.mxu0 0.0
        %488 = vmatprep.subr.mxu0 0.0
        %489 = vmatpush1.msra.mxu0 0.0
        %490 = vmatprep.subr.mxu0 0.0
        %491 = vmatpush1.msra.mxu0 0.0
        %492 = vmatprep.subr.mxu0 0.0
        %493 = vmatpush1.msra.mxu0 0.0
        %494 = vmatprep.subr.mxu0 0.0
        %495 = vmatpush1.msra.mxu0 0.0
        %496 = vmatprep.subr.mxu0 0.0
        %497 = vmatpush1.msra.mxu0 0.0
        %498 = vmatprep.subr.mxu0 0.0
        %499 = vmatpush1.msra.mxu0 0.0
        %500 = vmatprep.subr.mxu0 0.0
        %501 = vmatpush1.msra.mxu0 0.0
        %502 = vmatprep.subr.mxu0 0.0
        %503 = vmatpush1.msra.mxu0 0.0
        %504 = vmatprep.subr.mxu0 0.0
        %505 = vmatpush1.msra.mxu0 0.0
        %506 = vmatprep.subr.mxu0 0.0
        %507 = vmatpush1.msra.mxu0 0.0
        %508 = vmatprep.subr.mxu0 0.0
        %509 = vmatpush1.msra.mxu0 0.0
        %510 = vmatprep.subr.mxu0 0.0
        %511 = vmatpush1.msra.mxu0 0.0
        %512 = vmatprep.subr.mxu0 0.0
        %513 = vmatpush1.msra.mxu0 0.0
        %514 = vmatprep.subr.mxu0 0.0
        %515 = vmatpush1.msra.mxu0 0.0
        %516 = vmatprep.subr.mxu0 0.0
        %517 = vmatpush1.msra.mxu0 0.0
        %518 = vmatprep.subr.mxu0 0.0
        %519 = vmatpush1.msra.mxu0 0.0
        %520 = vmatprep.subr.mxu0 0.0
        %521 = vmatpush1.msra.mxu0 0.0
        %522 = vmatprep.subr.mxu0 0.0
        %523 = vmatpush1.msra.mxu0 0.0
        %524 = vmatprep.subr.mxu0 0.0
        %525 = vmatpush1.msra.mxu0 0.0
        %526 = vmatprep.subr.mxu0 0.0
        %527 = vmatpush1.msra.mxu0 0.0
        %528 = vmatprep.subr.mxu0 0.0
        %529 = vmatpush1.msra.mxu0 0.0
        %530 = vmatprep.subr.mxu0 0.0
        %531 = vmatpush1.msra.mxu0 0.0
        %532 = vmatprep.subr.mxu0 0.0
        %533 = vmatpush1.msra.mxu0 0.0
        %534 = vmatprep.subr.mxu0 0.0
        %535 = vmatpush1.msra.mxu0 0.0
        %536 = vmatprep.mubr.f32.mxu0 0.0
        %537 = vmatmul.mubr.f32.gmra.mrb[0].mxu0 %v396
        %v538 = vpop.f32.mrb[0].mxu0
        %v539 = vadd.f32 %v471, %v538
        %v540 = vpop.f32.mrb[0].mxu0
        %541 = vdwg.mxu0
        %543 = vrot.lane.b32.xlu0 %v465, 120
        %v544 = vpop.permute.xlu0 %543
        %545 = vrot.lane.b32.xlu0 %v465, 112
        %v546 = vpop.permute.xlu0 %545
        %547 = vrot.lane.b32.xlu0 %v465, 104
        %v548 = vpop.permute.xlu0 %547
        %550 = vrot.lane.b32.xlu0 %v539, 120
        %v551 = vpop.permute.xlu0 %550
        %553 = vrot.lane.b32.xlu0 %v539, 112
        %v554 = vpop.permute.xlu0 %553
        %556 = vrot.lane.b32.xlu0 %v539, 104
        %v557 = vpop.permute.xlu0 %556
        %v559 = vld [vmem:[%s346] sm:$0x1]
        %v560 = vmul.f32 %v559, -1e+09
        %v561 = vlaneseq
        %v562 = vshrl.u32 %v561, 7
        %v563 = vsub.s32 0, %v562
        %v564 = vrot.slane %v381, %v563
        %v566 = vsel %vm394, %v347, 0
        %568 = vmatprep.subr.mxu0 0.0
        %569 = vmatpush1.msra.mxu0 %v349
        %570 = vmatprep.subr.mxu0 0.0
        %571 = vmatpush1.msra.mxu0 %v350
        %572 = vmatprep.subr.mxu0 0.0
        %573 = vmatpush1.msra.mxu0 %v351
        %574 = vmatprep.subr.mxu0 0.0
        %575 = vmatpush1.msra.mxu0 %v352
        %576 = vmatprep.subr.mxu0 0.0
        %577 = vmatpush1.msra.mxu0 0.0
        %578 = vmatprep.subr.mxu0 0.0
        %579 = vmatpush1.msra.mxu0 0.0
        %580 = vmatprep.subr.mxu0 0.0
        %581 = vmatpush1.msra.mxu0 0.0
        %582 = vmatprep.subr.mxu0 0.0
        %583 = vmatpush1.msra.mxu0 0.0
        %584 = vmatprep.subr.mxu0 0.0
        %585 = vmatpush1.msra.mxu0 0.0
        %586 = vmatprep.subr.mxu0 0.0
        %587 = vmatpush1.msra.mxu0 0.0
        %588 = vmatprep.subr.mxu0 0.0
        %589 = vmatpush1.msra.mxu0 0.0
        %590 = vmatprep.subr.mxu0 0.0
        %591 = vmatpush1.msra.mxu0 0.0
        %592 = vmatprep.subr.mxu0 0.0
        %593 = vmatpush1.msra.mxu0 0.0
        %594 = vmatprep.subr.mxu0 0.0
        %595 = vmatpush1.msra.mxu0 0.0
        %596 = vmatprep.subr.mxu0 0.0
        %597 = vmatpush1.msra.mxu0 0.0
        %598 = vmatprep.subr.mxu0 0.0
        %599 = vmatpush1.msra.mxu0 0.0
        %600 = vmatprep.subr.mxu0 0.0
        %601 = vmatpush1.msra.mxu0 0.0
        %602 = vmatprep.subr.mxu0 0.0
        %603 = vmatpush1.msra.mxu0 0.0
        %604 = vmatprep.subr.mxu0 0.0
        %605 = vmatpush1.msra.mxu0 0.0
        %606 = vmatprep.subr.mxu0 0.0
        %607 = vmatpush1.msra.mxu0 0.0
        %608 = vmatprep.subr.mxu0 0.0
        %609 = vmatpush1.msra.mxu0 0.0
        %610 = vmatprep.subr.mxu0 0.0
        %611 = vmatpush1.msra.mxu0 0.0
        %612 = vmatprep.subr.mxu0 0.0
        %613 = vmatpush1.msra.mxu0 0.0
        %614 = vmatprep.subr.mxu0 0.0
        %615 = vmatpush1.msra.mxu0 0.0
        %616 = vmatprep.subr.mxu0 0.0
        %617 = vmatpush1.msra.mxu0 0.0
        %618 = vmatprep.subr.mxu0 0.0
        %619 = vmatpush1.msra.mxu0 0.0
        %620 = vmatprep.subr.mxu0 0.0
        %621 = vmatpush1.msra.mxu0 0.0
        %622 = vmatprep.subr.mxu0 0.0
        %623 = vmatpush1.msra.mxu0 0.0
        %624 = vmatprep.subr.mxu0 0.0
        %625 = vmatpush1.msra.mxu0 0.0
        %626 = vmatprep.subr.mxu0 0.0
        %627 = vmatpush1.msra.mxu0 0.0
        %628 = vmatprep.subr.mxu0 0.0
        %629 = vmatpush1.msra.mxu0 0.0
        %630 = vmatprep.subr.mxu0 0.0
        %631 = vmatpush1.msra.mxu0 0.0
        %632 = vmatprep.mubr.f32.mxu0 0.0
        %633 = vmatmul.mubr.f32.gmra.mrb[0].mxu0 %v566
        %v634 = vpop.f32.mrb[0].mxu0
        %v635 = vadd.f32 %v564, %v634
        %v636 = vpop.f32.mrb[0].mxu0
        %637 = vdwg.mxu0
        %639 = vrot.lane.b32.xlu0 %v635, 120
        %v640 = vpop.permute.xlu0 %639
        %641 = vrot.lane.b32.xlu0 %v635, 112
        %v642 = vpop.permute.xlu0 %641
        %643 = vrot.lane.b32.xlu0 %v635, 104
        %v644 = vpop.permute.xlu0 %643
        %v646 = vlaneseq
        %v647 = vshrl.u32 %v646, 7
        %v648 = vsub.s32 0, %v647
        %v649 = vrot.slane %v560, %v648
        %vm651 = vcmask 64512
        %v652 = vsel %vm651, %v635, 0
        %v654 = vsel %vm651, %v465, 0
        %656 = vmatprep.subr.mxu0 0.0
        %657 = vmatpush1.xpose.msra.mxu0 %v654
        %658 = vmatprep.subr.mxu0 0.0
        %659 = vmatpush1.xpose.msra.mxu0 0.0
        %660 = vmatprep.subr.mxu0 0.0
        %661 = vmatpush1.xpose.msra.mxu0 0.0
        %662 = vmatprep.subr.mxu0 0.0
        %663 = vmatpush1.xpose.msra.mxu0 0.0
        %664 = vmatprep.subr.mxu0 0.0
        %665 = vmatpush1.xpose.msra.mxu0 0.0
        %666 = vmatprep.subr.mxu0 0.0
        %667 = vmatpush1.xpose.msra.mxu0 0.0
        %668 = vmatprep.subr.mxu0 0.0
        %669 = vmatpush1.xpose.msra.mxu0 0.0
        %670 = vmatprep.subr.mxu0 0.0
        %671 = vmatpush1.xpose.msra.mxu0 0.0
        %672 = vmatprep.subr.mxu0 0.0
        %673 = vmatpush1.xpose.msra.mxu0 0.0
        %674 = vmatprep.subr.mxu0 0.0
        %675 = vmatpush1.xpose.msra.mxu0 0.0
        %676 = vmatprep.subr.mxu0 0.0
        %677 = vmatpush1.xpose.msra.mxu0 0.0
        %678 = vmatprep.subr.mxu0 0.0
        %679 = vmatpush1.xpose.msra.mxu0 0.0
        %680 = vmatprep.subr.mxu0 0.0
        %681 = vmatpush1.xpose.msra.mxu0 0.0
        %682 = vmatprep.subr.mxu0 0.0
        %683 = vmatpush1.xpose.msra.mxu0 0.0
        %684 = vmatprep.subr.mxu0 0.0
        %685 = vmatpush1.xpose.msra.mxu0 0.0
        %686 = vmatprep.subr.mxu0 0.0
        %687 = vmatpush1.xpose.msra.mxu0 0.0
        %688 = vmatprep.subr.mxu0 0.0
        %689 = vmatpush1.xpose.msra.mxu0 0.0
        %690 = vmatprep.subr.mxu0 0.0
        %691 = vmatpush1.xpose.msra.mxu0 0.0
        %692 = vmatprep.subr.mxu0 0.0
        %693 = vmatpush1.xpose.msra.mxu0 0.0
        %694 = vmatprep.subr.mxu0 0.0
        %695 = vmatpush1.xpose.msra.mxu0 0.0
        %696 = vmatprep.subr.mxu0 0.0
        %697 = vmatpush1.xpose.msra.mxu0 0.0
        %698 = vmatprep.subr.mxu0 0.0
        %699 = vmatpush1.xpose.msra.mxu0 0.0
        %700 = vmatprep.subr.mxu0 0.0
        %701 = vmatpush1.xpose.msra.mxu0 0.0
        %702 = vmatprep.subr.mxu0 0.0
        %703 = vmatpush1.xpose.msra.mxu0 0.0
        %704 = vmatprep.subr.mxu0 0.0
        %705 = vmatpush1.xpose.msra.mxu0 0.0
        %706 = vmatprep.subr.mxu0 0.0
        %707 = vmatpush1.xpose.msra.mxu0 0.0
        %708 = vmatprep.subr.mxu0 0.0
        %709 = vmatpush1.xpose.msra.mxu0 0.0
        %710 = vmatprep.subr.mxu0 0.0
        %711 = vmatpush1.xpose.msra.mxu0 0.0
        %712 = vmatprep.subr.mxu0 0.0
        %713 = vmatpush1.xpose.msra.mxu0 0.0
        %714 = vmatprep.subr.mxu0 0.0
        %715 = vmatpush1.xpose.msra.mxu0 0.0
        %716 = vmatprep.subr.mxu0 0.0
        %717 = vmatpush1.xpose.msra.mxu0 0.0
        %718 = vmatprep.subr.mxu0 0.0
        %719 = vmatpush1.xpose.msra.mxu0 0.0
        %720 = vmatprep.mubr.f32.mxu0 0.0
        %721 = vmatmul.mubr.f32.gmra.mrb[0].mxu0 %v652
        %v722 = vpop.f32.mrb[0].mxu0
        %v723 = vadd.f32 %v649, %v722
        %v724 = vpop.f32.mrb[0].mxu0
        %725 = vdwg.mxu0
        %v726 = vsel %vm651, %v640, 0
        %v728 = vsel %vm651, %v544, 0
        %730 = vmatprep.subr.mxu0 0.0
        %731 = vmatpush1.xpose.msra.mxu0 %v728
        %732 = vmatprep.subr.mxu0 0.0
        %733 = vmatpush1.xpose.msra.mxu0 0.0
        %734 = vmatprep.subr.mxu0 0.0
        %735 = vmatpush1.xpose.msra.mxu0 0.0
        %736 = vmatprep.subr.mxu0 0.0
        %737 = vmatpush1.xpose.msra.mxu0 0.0
        %738 = vmatprep.subr.mxu0 0.0
        %739 = vmatpush1.xpose.msra.mxu0 0.0
        %740 = vmatprep.subr.mxu0 0.0
        %741 = vmatpush1.xpose.msra.mxu0 0.0
        %742 = vmatprep.subr.mxu0 0.0
        %743 = vmatpush1.xpose.msra.mxu0 0.0
        %744 = vmatprep.subr.mxu0 0.0
        %745 = vmatpush1.xpose.msra.mxu0 0.0
        %746 = vmatprep.subr.mxu0 0.0
        %747 = vmatpush1.xpose.msra.mxu0 0.0
        %748 = vmatprep.subr.mxu0 0.0
        %749 = vmatpush1.xpose.msra.mxu0 0.0
        %750 = vmatprep.subr.mxu0 0.0
        %751 = vmatpush1.xpose.msra.mxu0 0.0
        %752 = vmatprep.subr.mxu0 0.0
        %753 = vmatpush1.xpose.msra.mxu0 0.0
        %754 = vmatprep.subr.mxu0 0.0
        %755 = vmatpush1.xpose.msra.mxu0 0.0
        %756 = vmatprep.subr.mxu0 0.0
        %757 = vmatpush1.xpose.msra.mxu0 0.0
        %758 = vmatprep.subr.mxu0 0.0
        %759 = vmatpush1.xpose.msra.mxu0 0.0
        %760 = vmatprep.subr.mxu0 0.0
        %761 = vmatpush1.xpose.msra.mxu0 0.0
        %762 = vmatprep.subr.mxu0 0.0
        %763 = vmatpush1.xpose.msra.mxu0 0.0
        %764 = vmatprep.subr.mxu0 0.0
        %765 = vmatpush1.xpose.msra.mxu0 0.0
        %766 = vmatprep.subr.mxu0 0.0
        %767 = vmatpush1.xpose.msra.mxu0 0.0
        %768 = vmatprep.subr.mxu0 0.0
        %769 = vmatpush1.xpose.msra.mxu0 0.0
        %770 = vmatprep.subr.mxu0 0.0
        %771 = vmatpush1.xpose.msra.mxu0 0.0
        %772 = vmatprep.subr.mxu0 0.0
        %773 = vmatpush1.xpose.msra.mxu0 0.0
        %774 = vmatprep.subr.mxu0 0.0
        %775 = vmatpush1.xpose.msra.mxu0 0.0
        %776 = vmatprep.subr.mxu0 0.0
        %777 = vmatpush1.xpose.msra.mxu0 0.0
        %778 = vmatprep.subr.mxu0 0.0
        %779 = vmatpush1.xpose.msra.mxu0 0.0
        %780 = vmatprep.subr.mxu0 0.0
        %781 = vmatpush1.xpose.msra.mxu0 0.0
        %782 = vmatprep.subr.mxu0 0.0
        %783 = vmatpush1.xpose.msra.mxu0 0.0
        %784 = vmatprep.subr.mxu0 0.0
        %785 = vmatpush1.xpose.msra.mxu0 0.0
        %786 = vmatprep.subr.mxu0 0.0
        %787 = vmatpush1.xpose.msra.mxu0 0.0
        %788 = vmatprep.subr.mxu0 0.0
        %789 = vmatpush1.xpose.msra.mxu0 0.0
        %790 = vmatprep.subr.mxu0 0.0
        %791 = vmatpush1.xpose.msra.mxu0 0.0
        %792 = vmatprep.subr.mxu0 0.0
        %793 = vmatpush1.xpose.msra.mxu0 0.0
        %794 = vmatprep.mubr.f32.mxu0 0.0
        %795 = vmatmul.mubr.f32.gmra.mrb[0].mxu0 %v726
        %v796 = vpop.f32.mrb[0].mxu0
        %v797 = vadd.f32 %v649, %v796
        %v798 = vpop.f32.mrb[0].mxu0
        %799 = vdwg.mxu0
        %v800 = vsel %vm651, %v642, 0
        %v802 = vsel %vm651, %v546, 0
        %804 = vmatprep.subr.mxu0 0.0
        %805 = vmatpush1.xpose.msra.mxu0 %v802
        %806 = vmatprep.subr.mxu0 0.0
        %807 = vmatpush1.xpose.msra.mxu0 0.0
        %808 = vmatprep.subr.mxu0 0.0
        %809 = vmatpush1.xpose.msra.mxu0 0.0
        %810 = vmatprep.subr.mxu0 0.0
        %811 = vmatpush1.xpose.msra.mxu0 0.0
        %812 = vmatprep.subr.mxu0 0.0
        %813 = vmatpush1.xpose.msra.mxu0 0.0
        %814 = vmatprep.subr.mxu0 0.0
        %815 = vmatpush1.xpose.msra.mxu0 0.0
        %816 = vmatprep.subr.mxu0 0.0
        %817 = vmatpush1.xpose.msra.mxu0 0.0
        %818 = vmatprep.subr.mxu0 0.0
        %819 = vmatpush1.xpose.msra.mxu0 0.0
        %820 = vmatprep.subr.mxu0 0.0
        %821 = vmatpush1.xpose.msra.mxu0 0.0
        %822 = vmatprep.subr.mxu0 0.0
        %823 = vmatpush1.xpose.msra.mxu0 0.0
        %824 = vmatprep.subr.mxu0 0.0
        %825 = vmatpush1.xpose.msra.mxu0 0.0
        %826 = vmatprep.subr.mxu0 0.0
        %827 = vmatpush1.xpose.msra.mxu0 0.0
        %828 = vmatprep.subr.mxu0 0.0
        %829 = vmatpush1.xpose.msra.mxu0 0.0
        %830 = vmatprep.subr.mxu0 0.0
        %831 = vmatpush1.xpose.msra.mxu0 0.0
        %832 = vmatprep.subr.mxu0 0.0
        %833 = vmatpush1.xpose.msra.mxu0 0.0
        %834 = vmatprep.subr.mxu0 0.0
        %835 = vmatpush1.xpose.msra.mxu0 0.0
        %836 = vmatprep.subr.mxu0 0.0
        %837 = vmatpush1.xpose.msra.mxu0 0.0
        %838 = vmatprep.subr.mxu0 0.0
        %839 = vmatpush1.xpose.msra.mxu0 0.0
        %840 = vmatprep.subr.mxu0 0.0
        %841 = vmatpush1.xpose.msra.mxu0 0.0
        %842 = vmatprep.subr.mxu0 0.0
        %843 = vmatpush1.xpose.msra.mxu0 0.0
        %844 = vmatprep.subr.mxu0 0.0
        %845 = vmatpush1.xpose.msra.mxu0 0.0
        %846 = vmatprep.subr.mxu0 0.0
        %847 = vmatpush1.xpose.msra.mxu0 0.0
        %848 = vmatprep.subr.mxu0 0.0
        %849 = vmatpush1.xpose.msra.mxu0 0.0
        %850 = vmatprep.subr.mxu0 0.0
        %851 = vmatpush1.xpose.msra.mxu0 0.0
        %852 = vmatprep.subr.mxu0 0.0
        %853 = vmatpush1.xpose.msra.mxu0 0.0
        %854 = vmatprep.subr.mxu0 0.0
        %855 = vmatpush1.xpose.msra.mxu0 0.0
        %856 = vmatprep.subr.mxu0 0.0
        %857 = vmatpush1.xpose.msra.mxu0 0.0
        %858 = vmatprep.subr.mxu0 0.0
        %859 = vmatpush1.xpose.msra.mxu0 0.0
        %860 = vmatprep.subr.mxu0 0.0
        %861 = vmatpush1.xpose.msra.mxu0 0.0
        %862 = vmatprep.subr.mxu0 0.0
        %863 = vmatpush1.xpose.msra.mxu0 0.0
        %864 = vmatprep.subr.mxu0 0.0
        %865 = vmatpush1.xpose.msra.mxu0 0.0
        %866 = vmatprep.subr.mxu0 0.0
        %867 = vmatpush1.xpose.msra.mxu0 0.0
        %868 = vmatprep.mubr.f32.mxu0 0.0
        %869 = vmatmul.mubr.f32.gmra.mrb[0].mxu0 %v800
        %v870 = vpop.f32.mrb[0].mxu0
        %v871 = vadd.f32 %v649, %v870
        %v872 = vpop.f32.mrb[0].mxu0
        %873 = vdwg.mxu0
        %v874 = vsel %vm651, %v644, 0
        %v876 = vsel %vm651, %v548, 0
        %878 = vmatprep.subr.mxu0 0.0
        %879 = vmatpush1.xpose.msra.mxu0 %v876
        %880 = vmatprep.subr.mxu0 0.0
        %881 = vmatpush1.xpose.msra.mxu0 0.0
        %882 = vmatprep.subr.mxu0 0.0
        %883 = vmatpush1.xpose.msra.mxu0 0.0
        %884 = vmatprep.subr.mxu0 0.0
        %885 = vmatpush1.xpose.msra.mxu0 0.0
        %886 = vmatprep.subr.mxu0 0.0
        %887 = vmatpush1.xpose.msra.mxu0 0.0
        %888 = vmatprep.subr.mxu0 0.0
        %889 = vmatpush1.xpose.msra.mxu0 0.0
        %890 = vmatprep.subr.mxu0 0.0
        %891 = vmatpush1.xpose.msra.mxu0 0.0
        %892 = vmatprep.subr.mxu0 0.0
        %893 = vmatpush1.xpose.msra.mxu0 0.0
        %894 = vmatprep.subr.mxu0 0.0
        %895 = vmatpush1.xpose.msra.mxu0 0.0
        %896 = vmatprep.subr.mxu0 0.0
        %897 = vmatpush1.xpose.msra.mxu0 0.0
        %898 = vmatprep.subr.mxu0 0.0
        %899 = vmatpush1.xpose.msra.mxu0 0.0
        %900 = vmatprep.subr.mxu0 0.0
        %901 = vmatpush1.xpose.msra.mxu0 0.0
        %902 = vmatprep.subr.mxu0 0.0
        %903 = vmatpush1.xpose.msra.mxu0 0.0
        %904 = vmatprep.subr.mxu0 0.0
        %905 = vmatpush1.xpose.msra.mxu0 0.0
        %906 = vmatprep.subr.mxu0 0.0
        %907 = vmatpush1.xpose.msra.mxu0 0.0
        %908 = vmatprep.subr.mxu0 0.0
        %909 = vmatpush1.xpose.msra.mxu0 0.0
        %910 = vmatprep.subr.mxu0 0.0
        %911 = vmatpush1.xpose.msra.mxu0 0.0
        %912 = vmatprep.subr.mxu0 0.0
        %913 = vmatpush1.xpose.msra.mxu0 0.0
        %914 = vmatprep.subr.mxu0 0.0
        %915 = vmatpush1.xpose.msra.mxu0 0.0
        %916 = vmatprep.subr.mxu0 0.0
        %917 = vmatpush1.xpose.msra.mxu0 0.0
        %918 = vmatprep.subr.mxu0 0.0
        %919 = vmatpush1.xpose.msra.mxu0 0.0
        %920 = vmatprep.subr.mxu0 0.0
        %921 = vmatpush1.xpose.msra.mxu0 0.0
        %922 = vmatprep.subr.mxu0 0.0
        %923 = vmatpush1.xpose.msra.mxu0 0.0
        %924 = vmatprep.subr.mxu0 0.0
        %925 = vmatpush1.xpose.msra.mxu0 0.0
        %926 = vmatprep.subr.mxu0 0.0
        %927 = vmatpush1.xpose.msra.mxu0 0.0
        %928 = vmatprep.subr.mxu0 0.0
        %929 = vmatpush1.xpose.msra.mxu0 0.0
        %930 = vmatprep.subr.mxu0 0.0
        %931 = vmatpush1.xpose.msra.mxu0 0.0
        %932 = vmatprep.subr.mxu0 0.0
        %933 = vmatpush1.xpose.msra.mxu0 0.0
        %934 = vmatprep.subr.mxu0 0.0
        %935 = vmatpush1.xpose.msra.mxu0 0.0
        %936 = vmatprep.subr.mxu0 0.0
        %937 = vmatpush1.xpose.msra.mxu0 0.0
        %938 = vmatprep.subr.mxu0 0.0
        %939 = vmatpush1.xpose.msra.mxu0 0.0
        %940 = vmatprep.subr.mxu0 0.0
        %941 = vmatpush1.xpose.msra.mxu0 0.0
        %942 = vmatprep.mubr.f32.mxu0 0.0
        %943 = vmatmul.mubr.f32.gmra.mrb[0].mxu0 %v874
        %v944 = vpop.f32.mrb[0].mxu0
        %v945 = vadd.f32 %v649, %v944
        %v946 = vpop.f32.mrb[0].mxu0
        %947 = vdwg.mxu0
        %v948 = vsel %vm651, %v723, -inf
        %949 = vmax.xlane.f32.xlu0 %v948
        %v950 = vpop.xlane.xlu0 %949
        %v951 = vsel %vm651, %v797, -inf
        %952 = vmax.xlane.f32.xlu0 %v951
        %v953 = vpop.xlane.xlu0 %952
        %v954 = vsel %vm651, %v871, -inf
        %955 = vmax.xlane.f32.xlu0 %v954
        %v956 = vpop.xlane.xlu0 %955
        %v957 = vsel %vm651, %v945, -inf
        %958 = vmax.xlane.f32.xlu0 %v957
        %v959 = vpop.xlane.xlu0 %958
        %v960 = vsub.f32 %v723, %v950
        %v961 = vsub.f32 %v797, %v953
        %v962 = vsub.f32 %v871, %v956
        %v963 = vsub.f32 %v945, %v959
        %v964 = vmul.f32 %v960, 1.442695
        %v965 = vpow.pop %v964
        %v966 = vmul.f32 %v961, 1.442695
        %v967 = vpow.pop %v966
        %v968 = vmul.f32 %v962, 1.442695
        %v969 = vpow.pop %v968
        %v970 = vmul.f32 %v963, 1.442695
        %v971 = vpow.pop %v970
        %v972 = vsel %vm651, %v965, 0.0
        %973 = vadd.xlane.f32.xlu0 %v972
        %v974 = vpop.xlane.xlu0 %973
        %v975 = vsel %vm651, %v967, 0.0
        %976 = vadd.xlane.f32.xlu0 %v975
        %v977 = vpop.xlane.xlu0 %976
        %v978 = vsel %vm651, %v969, 0.0
        %979 = vadd.xlane.f32.xlu0 %v978
        %v980 = vpop.xlane.xlu0 %979
        %v981 = vsel %vm651, %v971, 0.0
        %982 = vadd.xlane.f32.xlu0 %v981
        %v983 = vpop.xlane.xlu0 %982
        %v984 = vrcp.pop %v974
        %v985 = vrcp.pop %v977
        %v986 = vrcp.pop %v980
        %v987 = vrcp.pop %v983
        %v988 = vmul.f32 %v965, %v984
        %v989 = vmul.f32 %v967, %v985
        %v990 = vmul.f32 %v969, %v986
        %v991 = vmul.f32 %v971, %v987
        %v993 = vsel %vm651, %v988, 0
        %995 = vmatprep.subr.mxu0 0.0
        %996 = vmatpush1.msra.mxu0 %v539
        %997 = vmatprep.subr.mxu0 0.0
        %998 = vmatpush1.msra.mxu0 0.0
        %999 = vmatprep.subr.mxu0 0.0
        %1000 = vmatpush1.msra.mxu0 0.0
        %1001 = vmatprep.subr.mxu0 0.0
        %1002 = vmatpush1.msra.mxu0 0.0
        %1003 = vmatprep.subr.mxu0 0.0
        %1004 = vmatpush1.msra.mxu0 0.0
        %1005 = vmatprep.subr.mxu0 0.0
        %1006 = vmatpush1.msra.mxu0 0.0
        %1007 = vmatprep.subr.mxu0 0.0
        %1008 = vmatpush1.msra.mxu0 0.0
        %1009 = vmatprep.subr.mxu0 0.0
        %1010 = vmatpush1.msra.mxu0 0.0
        %1011 = vmatprep.subr.mxu0 0.0
        %1012 = vmatpush1.msra.mxu0 0.0
        %1013 = vmatprep.subr.mxu0 0.0
        %1014 = vmatpush1.msra.mxu0 0.0
        %1015 = vmatprep.subr.mxu0 0.0
        %1016 = vmatpush1.msra.mxu0 0.0
        %1017 = vmatprep.subr.mxu0 0.0
        %1018 = vmatpush1.msra.mxu0 0.0
        %1019 = vmatprep.subr.mxu0 0.0
        %1020 = vmatpush1.msra.mxu0 0.0
        %1021 = vmatprep.subr.mxu0 0.0
        %1022 = vmatpush1.msra.mxu0 0.0
        %1023 = vmatprep.subr.mxu0 0.0
        %1024 = vmatpush1.msra.mxu0 0.0
        %1025 = vmatprep.subr.mxu0 0.0
        %1026 = vmatpush1.msra.mxu0 0.0
        %1027 = vmatprep.subr.mxu0 0.0
        %1028 = vmatpush1.msra.mxu0 0.0
        %1029 = vmatprep.subr.mxu0 0.0
        %1030 = vmatpush1.msra.mxu0 0.0
        %1031 = vmatprep.subr.mxu0 0.0
        %1032 = vmatpush1.msra.mxu0 0.0
        %1033 = vmatprep.subr.mxu0 0.0
        %1034 = vmatpush1.msra.mxu0 0.0
        %1035 = vmatprep.subr.mxu0 0.0
        %1036 = vmatpush1.msra.mxu0 0.0
        %1037 = vmatprep.subr.mxu0 0.0
        %1038 = vmatpush1.msra.mxu0 0.0
        %1039 = vmatprep.subr.mxu0 0.0
        %1040 = vmatpush1.msra.mxu0 0.0
        %1041 = vmatprep.subr.mxu0 0.0
        %1042 = vmatpush1.msra.mxu0 0.0
        %1043 = vmatprep.subr.mxu0 0.0
        %1044 = vmatpush1.msra.mxu0 0.0
        %1045 = vmatprep.subr.mxu0 0.0
        %1046 = vmatpush1.msra.mxu0 0.0
        %1047 = vmatprep.subr.mxu0 0.0
        %1048 = vmatpush1.msra.mxu0 0.0
        %1049 = vmatprep.subr.mxu0 0.0
        %1050 = vmatpush1.msra.mxu0 0.0
        %1051 = vmatprep.subr.mxu0 0.0
        %1052 = vmatpush1.msra.mxu0 0.0
        %1053 = vmatprep.subr.mxu0 0.0
        %1054 = vmatpush1.msra.mxu0 0.0
        %1055 = vmatprep.subr.mxu0 0.0
        %1056 = vmatpush1.msra.mxu0 0.0
        %1057 = vmatprep.subr.mxu0 0.0
        %1058 = vmatpush1.msra.mxu0 0.0
        %1059 = vmatprep.mubr.f32.mxu0 0.0
        %1060 = vmatmul.mubr.f32.gmra.mrb[0].mxu0 %v993
        %v1061 = vpop.f32.mrb[0].mxu0
        %v1062 = vadd.f32 0.0, %v1061
        %v1063 = vpop.f32.mrb[0].mxu0
        %1064 = vdwg.mxu0
        %v1066 = vsel %vm651, %v989, 0
        %1068 = vmatprep.subr.mxu0 0.0
        %1069 = vmatpush1.msra.mxu0 %v551
        %1070 = vmatprep.subr.mxu0 0.0
        %1071 = vmatpush1.msra.mxu0 0.0
        %1072 = vmatprep.subr.mxu0 0.0
        %1073 = vmatpush1.msra.mxu0 0.0
        %1074 = vmatprep.subr.mxu0 0.0
        %1075 = vmatpush1.msra.mxu0 0.0
        %1076 = vmatprep.subr.mxu0 0.0
        %1077 = vmatpush1.msra.mxu0 0.0
        %1078 = vmatprep.subr.mxu0 0.0
        %1079 = vmatpush1.msra.mxu0 0.0
        %1080 = vmatprep.subr.mxu0 0.0
        %1081 = vmatpush1.msra.mxu0 0.0
        %1082 = vmatprep.subr.mxu0 0.0
        %1083 = vmatpush1.msra.mxu0 0.0
        %1084 = vmatprep.subr.mxu0 0.0
        %1085 = vmatpush1.msra.mxu0 0.0
        %1086 = vmatprep.subr.mxu0 0.0
        %1087 = vmatpush1.msra.mxu0 0.0
        %1088 = vmatprep.subr.mxu0 0.0
        %1089 = vmatpush1.msra.mxu0 0.0
        %1090 = vmatprep.subr.mxu0 0.0
        %1091 = vmatpush1.msra.mxu0 0.0
        %1092 = vmatprep.subr.mxu0 0.0
        %1093 = vmatpush1.msra.mxu0 0.0
        %1094 = vmatprep.subr.mxu0 0.0
        %1095 = vmatpush1.msra.mxu0 0.0
        %1096 = vmatprep.subr.mxu0 0.0
        %1097 = vmatpush1.msra.mxu0 0.0
        %1098 = vmatprep.subr.mxu0 0.0
        %1099 = vmatpush1.msra.mxu0 0.0
        %1100 = vmatprep.subr.mxu0 0.0
        %1101 = vmatpush1.msra.mxu0 0.0
        %1102 = vmatprep.subr.mxu0 0.0
        %1103 = vmatpush1.msra.mxu0 0.0
        %1104 = vmatprep.subr.mxu0 0.0
        %1105 = vmatpush1.msra.mxu0 0.0
        %1106 = vmatprep.subr.mxu0 0.0
        %1107 = vmatpush1.msra.mxu0 0.0
        %1108 = vmatprep.subr.mxu0 0.0
        %1109 = vmatpush1.msra.mxu0 0.0
        %1110 = vmatprep.subr.mxu0 0.0
        %1111 = vmatpush1.msra.mxu0 0.0
        %1112 = vmatprep.subr.mxu0 0.0
        %1113 = vmatpush1.msra.mxu0 0.0
        %1114 = vmatprep.subr.mxu0 0.0
        %1115 = vmatpush1.msra.mxu0 0.0
        %1116 = vmatprep.subr.mxu0 0.0
        %1117 = vmatpush1.msra.mxu0 0.0
        %1118 = vmatprep.subr.mxu0 0.0
        %1119 = vmatpush1.msra.mxu0 0.0
        %1120 = vmatprep.subr.mxu0 0.0
        %1121 = vmatpush1.msra.mxu0 0.0
        %1122 = vmatprep.subr.mxu0 0.0
        %1123 = vmatpush1.msra.mxu0 0.0
        %1124 = vmatprep.subr.mxu0 0.0
        %1125 = vmatpush1.msra.mxu0 0.0
        %1126 = vmatprep.subr.mxu0 0.0
        %1127 = vmatpush1.msra.mxu0 0.0
        %1128 = vmatprep.subr.mxu0 0.0
        %1129 = vmatpush1.msra.mxu0 0.0
        %1130 = vmatprep.subr.mxu0 0.0
        %1131 = vmatpush1.msra.mxu0 0.0
        %1132 = vmatprep.mubr.f32.mxu0 0.0
        %1133 = vmatmul.mubr.f32.gmra.mrb[0].mxu0 %v1066
        %v1134 = vpop.f32.mrb[0].mxu0
        %v1135 = vadd.f32 0.0, %v1134
        %v1136 = vpop.f32.mrb[0].mxu0
        %1137 = vdwg.mxu0
        %v1139 = vsel %vm651, %v990, 0
        %1141 = vmatprep.subr.mxu0 0.0
        %1142 = vmatpush1.msra.mxu0 %v554
        %1143 = vmatprep.subr.mxu0 0.0
        %1144 = vmatpush1.msra.mxu0 0.0
        %1145 = vmatprep.subr.mxu0 0.0
        %1146 = vmatpush1.msra.mxu0 0.0
        %1147 = vmatprep.subr.mxu0 0.0
        %1148 = vmatpush1.msra.mxu0 0.0
        %1149 = vmatprep.subr.mxu0 0.0
        %1150 = vmatpush1.msra.mxu0 0.0
        %1151 = vmatprep.subr.mxu0 0.0
        %1152 = vmatpush1.msra.mxu0 0.0
        %1153 = vmatprep.subr.mxu0 0.0
        %1154 = vmatpush1.msra.mxu0 0.0
        %1155 = vmatprep.subr.mxu0 0.0
        %1156 = vmatpush1.msra.mxu0 0.0
        %1157 = vmatprep.subr.mxu0 0.0
        %1158 = vmatpush1.msra.mxu0 0.0
        %1159 = vmatprep.subr.mxu0 0.0
        %1160 = vmatpush1.msra.mxu0 0.0
        %1161 = vmatprep.subr.mxu0 0.0
        %1162 = vmatpush1.msra.mxu0 0.0
        %1163 = vmatprep.subr.mxu0 0.0
        %1164 = vmatpush1.msra.mxu0 0.0
        %1165 = vmatprep.subr.mxu0 0.0
        %1166 = vmatpush1.msra.mxu0 0.0
        %1167 = vmatprep.subr.mxu0 0.0
        %1168 = vmatpush1.msra.mxu0 0.0
        %1169 = vmatprep.subr.mxu0 0.0
        %1170 = vmatpush1.msra.mxu0 0.0
        %1171 = vmatprep.subr.mxu0 0.0
        %1172 = vmatpush1.msra.mxu0 0.0
        %1173 = vmatprep.subr.mxu0 0.0
        %1174 = vmatpush1.msra.mxu0 0.0
        %1175 = vmatprep.subr.mxu0 0.0
        %1176 = vmatpush1.msra.mxu0 0.0
        %1177 = vmatprep.subr.mxu0 0.0
        %1178 = vmatpush1.msra.mxu0 0.0
        %1179 = vmatprep.subr.mxu0 0.0
        %1180 = vmatpush1.msra.mxu0 0.0
        %1181 = vmatprep.subr.mxu0 0.0
        %1182 = vmatpush1.msra.mxu0 0.0
        %1183 = vmatprep.subr.mxu0 0.0
        %1184 = vmatpush1.msra.mxu0 0.0
        %1185 = vmatprep.subr.mxu0 0.0
        %1186 = vmatpush1.msra.mxu0 0.0
        %1187 = vmatprep.subr.mxu0 0.0
        %1188 = vmatpush1.msra.mxu0 0.0
        %1189 = vmatprep.subr.mxu0 0.0
        %1190 = vmatpush1.msra.mxu0 0.0
        %1191 = vmatprep.subr.mxu0 0.0
        %1192 = vmatpush1.msra.mxu0 0.0
        %1193 = vmatprep.subr.mxu0 0.0
        %1194 = vmatpush1.msra.mxu0 0.0
        %1195 = vmatprep.subr.mxu0 0.0
        %1196 = vmatpush1.msra.mxu0 0.0
        %1197 = vmatprep.subr.mxu0 0.0
        %1198 = vmatpush1.msra.mxu0 0.0
        %1199 = vmatprep.subr.mxu0 0.0
        %1200 = vmatpush1.msra.mxu0 0.0
        %1201 = vmatprep.subr.mxu0 0.0
        %1202 = vmatpush1.msra.mxu0 0.0
        %1203 = vmatprep.subr.mxu0 0.0
        %1204 = vmatpush1.msra.mxu0 0.0
        %1205 = vmatprep.mubr.f32.mxu0 0.0
        %1206 = vmatmul.mubr.f32.gmra.mrb[0].mxu0 %v1139
        %v1207 = vpop.f32.mrb[0].mxu0
        %v1208 = vadd.f32 0.0, %v1207
        %v1209 = vpop.f32.mrb[0].mxu0
        %1210 = vdwg.mxu0
        %v1212 = vsel %vm651, %v991, 0
        %1214 = vmatprep.subr.mxu0 0.0
        %1215 = vmatpush1.msra.mxu0 %v557
        %1216 = vmatprep.subr.mxu0 0.0
        %1217 = vmatpush1.msra.mxu0 0.0
        %1218 = vmatprep.subr.mxu0 0.0
        %1219 = vmatpush1.msra.mxu0 0.0
        %1220 = vmatprep.subr.mxu0 0.0
        %1221 = vmatpush1.msra.mxu0 0.0
        %1222 = vmatprep.subr.mxu0 0.0
        %1223 = vmatpush1.msra.mxu0 0.0
        %1224 = vmatprep.subr.mxu0 0.0
        %1225 = vmatpush1.msra.mxu0 0.0
        %1226 = vmatprep.subr.mxu0 0.0
        %1227 = vmatpush1.msra.mxu0 0.0
        %1228 = vmatprep.subr.mxu0 0.0
        %1229 = vmatpush1.msra.mxu0 0.0
        %1230 = vmatprep.subr.mxu0 0.0
        %1231 = vmatpush1.msra.mxu0 0.0
        %1232 = vmatprep.subr.mxu0 0.0
        %1233 = vmatpush1.msra.mxu0 0.0
        %1234 = vmatprep.subr.mxu0 0.0
        %1235 = vmatpush1.msra.mxu0 0.0
        %1236 = vmatprep.subr.mxu0 0.0
        %1237 = vmatpush1.msra.mxu0 0.0
        %1238 = vmatprep.subr.mxu0 0.0
        %1239 = vmatpush1.msra.mxu0 0.0
        %1240 = vmatprep.subr.mxu0 0.0
        %1241 = vmatpush1.msra.mxu0 0.0
        %1242 = vmatprep.subr.mxu0 0.0
        %1243 = vmatpush1.msra.mxu0 0.0
        %1244 = vmatprep.subr.mxu0 0.0
        %1245 = vmatpush1.msra.mxu0 0.0
        %1246 = vmatprep.subr.mxu0 0.0
        %1247 = vmatpush1.msra.mxu0 0.0
        %1248 = vmatprep.subr.mxu0 0.0
        %1249 = vmatpush1.msra.mxu0 0.0
        %1250 = vmatprep.subr.mxu0 0.0
        %1251 = vmatpush1.msra.mxu0 0.0
        %1252 = vmatprep.subr.mxu0 0.0
        %1253 = vmatpush1.msra.mxu0 0.0
        %1254 = vmatprep.subr.mxu0 0.0
        %1255 = vmatpush1.msra.mxu0 0.0
        %1256 = vmatprep.subr.mxu0 0.0
        %1257 = vmatpush1.msra.mxu0 0.0
        %1258 = vmatprep.subr.mxu0 0.0
        %1259 = vmatpush1.msra.mxu0 0.0
        %1260 = vmatprep.subr.mxu0 0.0
        %1261 = vmatpush1.msra.mxu0 0.0
        %1262 = vmatprep.subr.mxu0 0.0
        %1263 = vmatpush1.msra.mxu0 0.0
        %1264 = vmatprep.subr.mxu0 0.0
        %1265 = vmatpush1.msra.mxu0 0.0
        %1266 = vmatprep.subr.mxu0 0.0
        %1267 = vmatpush1.msra.mxu0 0.0
        %1268 = vmatprep.subr.mxu0 0.0
        %1269 = vmatpush1.msra.mxu0 0.0
        %1270 = vmatprep.subr.mxu0 0.0
        %1271 = vmatpush1.msra.mxu0 0.0
        %1272 = vmatprep.subr.mxu0 0.0
        %1273 = vmatpush1.msra.mxu0 0.0
        %1274 = vmatprep.subr.mxu0 0.0
        %1275 = vmatpush1.msra.mxu0 0.0
        %1276 = vmatprep.subr.mxu0 0.0
        %1277 = vmatpush1.msra.mxu0 0.0
        %1278 = vmatprep.mubr.f32.mxu0 0.0
        %1279 = vmatmul.mubr.f32.gmra.mrb[0].mxu0 %v1212
        %v1280 = vpop.f32.mrb[0].mxu0
        %v1281 = vadd.f32 0.0, %v1280
        %v1282 = vpop.f32.mrb[0].mxu0
        %1283 = vdwg.mxu0
        %1285 = vrot.lane.b32.xlu0 %v1135, 8
        %v1286 = vpop.permute.xlu0 %1285
        %1289 = vrot.lane.b32.xlu0 %v1208, 16
        %v1290 = vpop.permute.xlu0 %1289
        %1293 = vrot.lane.b32.xlu0 %v1281, 24
        %v1294 = vpop.permute.xlu0 %1293
        %v1296 = vsel %vm651, %v1062, %v1286
        %vm1297 = vcmask 130048
        %v1298 = vsel %vm1297, %v1296, %v1290
        %vm1299 = vcmask 195584
        %v1300 = vsel %vm1299, %v1298, %v1294
        %v1301 = vlaneseq
        %v1302 = vshrl.u32 %v1301, 7
        %v1303 = vsub.s32 0, %v1302
        %v1304 = vrot.slane %v384, %v1303
        %v1306 = vsel %vm394, %v1300, 0
        %1308 = vmatprep.subr.mxu0 0.0
        %1309 = vmatpush1.msra.mxu0 %v364
        %1310 = vmatprep.subr.mxu0 0.0
        %1311 = vmatpush1.msra.mxu0 %v365
        %1312 = vmatprep.subr.mxu0 0.0
        %1313 = vmatpush1.msra.mxu0 %v366
        %1314 = vmatprep.subr.mxu0 0.0
        %1315 = vmatpush1.msra.mxu0 %v367
        %1316 = vmatprep.subr.mxu0 0.0
        %1317 = vmatpush1.msra.mxu0 0.0
        %1318 = vmatprep.subr.mxu0 0.0
        %1319 = vmatpush1.msra.mxu0 0.0
        %1320 = vmatprep.subr.mxu0 0.0
        %1321 = vmatpush1.msra.mxu0 0.0
        %1322 = vmatprep.subr.mxu0 0.0
        %1323 = vmatpush1.msra.mxu0 0.0
        %1324 = vmatprep.subr.mxu0 0.0
        %1325 = vmatpush1.msra.mxu0 0.0
        %1326 = vmatprep.subr.mxu0 0.0
        %1327 = vmatpush1.msra.mxu0 0.0
        %1328 = vmatprep.subr.mxu0 0.0
        %1329 = vmatpush1.msra.mxu0 0.0
        %1330 = vmatprep.subr.mxu0 0.0
        %1331 = vmatpush1.msra.mxu0 0.0
        %1332 = vmatprep.subr.mxu0 0.0
        %1333 = vmatpush1.msra.mxu0 0.0
        %1334 = vmatprep.subr.mxu0 0.0
        %1335 = vmatpush1.msra.mxu0 0.0
        %1336 = vmatprep.subr.mxu0 0.0
        %1337 = vmatpush1.msra.mxu0 0.0
        %1338 = vmatprep.subr.mxu0 0.0
        %1339 = vmatpush1.msra.mxu0 0.0
        %1340 = vmatprep.subr.mxu0 0.0
        %1341 = vmatpush1.msra.mxu0 0.0
        %1342 = vmatprep.subr.mxu0 0.0
        %1343 = vmatpush1.msra.mxu0 0.0
        %1344 = vmatprep.subr.mxu0 0.0
        %1345 = vmatpush1.msra.mxu0 0.0
        %1346 = vmatprep.subr.mxu0 0.0
        %1347 = vmatpush1.msra.mxu0 0.0
        %1348 = vmatprep.subr.mxu0 0.0
        %1349 = vmatpush1.msra.mxu0 0.0
        %1350 = vmatprep.subr.mxu0 0.0
        %1351 = vmatpush1.msra.mxu0 0.0
        %1352 = vmatprep.subr.mxu0 0.0
        %1353 = vmatpush1.msra.mxu0 0.0
        %1354 = vmatprep.subr.mxu0 0.0
        %1355 = vmatpush1.msra.mxu0 0.0
        %1356 = vmatprep.subr.mxu0 0.0
        %1357 = vmatpush1.msra.mxu0 0.0
        %1358 = vmatprep.subr.mxu0 0.0
        %1359 = vmatpush1.msra.mxu0 0.0
        %1360 = vmatprep.subr.mxu0 0.0
        %1361 = vmatpush1.msra.mxu0 0.0
        %1362 = vmatprep.subr.mxu0 0.0
        %1363 = vmatpush1.msra.mxu0 0.0
        %1364 = vmatprep.subr.mxu0 0.0
        %1365 = vmatpush1.msra.mxu0 0.0
        %1366 = vmatprep.subr.mxu0 0.0
        %1367 = vmatpush1.msra.mxu0 0.0
        %1368 = vmatprep.subr.mxu0 0.0
        %1369 = vmatpush1.msra.mxu0 0.0
        %1370 = vmatprep.subr.mxu0 0.0
        %1371 = vmatpush1.msra.mxu0 0.0
        %1372 = vmatprep.mubr.f32.mxu0 0.0
        %1373 = vmatmul.mubr.f32.gmra.mrb[0].mxu0 %v1306
        %v1374 = vpop.f32.mrb[0].mxu0
        %v1375 = vadd.f32 %v1304, %v1374
        %v1376 = vpop.f32.mrb[0].mxu0
        %1377 = vdwg.mxu0
        %v1378 = vadd.f32 %v347, %v1375
        %v1379 = vsel %vm394, %v1378, 0.0
        %1380 = vadd.xlane.f32.xlu0 %v1379
        %v1381 = vpop.xlane.xlu0 %1380
        %v1382 = vrcp.pop 32.0
        %v1383 = vmul.f32 %v1381, %v1382
        %v1384 = vsub.f32 %v1378, %v1383
        %v1385 = vmul.f32 %v1384, %v1384
        %v1386 = vsel %vm394, %v1385, 0.0
        %1387 = vadd.xlane.f32.xlu0 %v1386
        %v1388 = vpop.xlane.xlu0 %1387
        %v1389 = vmul.f32 %v1388, %v1382
        %v1390 = vadd.f32 %v1389, 1e-05
        %v1391 = vrsqrt.pop %v1390
        %v1392 = vmul.f32 %v1384, %v1391
        %v1393 = vlaneseq
        %v1394 = vshrl.u32 %v1393, 7
        %v1395 = vsub.s32 0, %v1394
        %v1396 = vrot.slane %v386, %v1395
        %v1397 = vmul.f32 %v1392, %v1396
        %v1398 = vlaneseq
        %v1399 = vshrl.u32 %v1398, 7
        %v1400 = vsub.s32 0, %v1399
        %v1401 = vrot.slane %v387, %v1400
        %v1402 = vadd.f32 %v1397, %v1401
        %v1404 = vlaneseq
        %v1405 = vshrl.u32 %v1404, 7
        %v1406 = vsub.s32 0, %v1405
        %v1407 = vrot.slane %v380, %v1406
        %v1410 = vsel %vm394, %v1402, 0
        %1412 = vmatprep.subr.mxu0 0.0
        %1413 = vmatpush1.msra.mxu0 %v368
        %1414 = vmatprep.subr.mxu0 0.0
        %1415 = vmatpush1.msra.mxu0 %v369
        %1416 = vmatprep.subr.mxu0 0.0
        %1417 = vmatpush1.msra.mxu0 %v370
        %1418 = vmatprep.subr.mxu0 0.0
        %1419 = vmatpush1.msra.mxu0 %v371
        %1420 = vmatprep.subr.mxu0 0.0
        %1421 = vmatpush1.msra.mxu0 0.0
        %1422 = vmatprep.subr.mxu0 0.0
        %1423 = vmatpush1.msra.mxu0 0.0
        %1424 = vmatprep.subr.mxu0 0.0
        %1425 = vmatpush1.msra.mxu0 0.0
        %1426 = vmatprep.subr.mxu0 0.0
        %1427 = vmatpush1.msra.mxu0 0.0
        %1428 = vmatprep.subr.mxu0 0.0
        %1429 = vmatpush1.msra.mxu0 0.0
        %1430 = vmatprep.subr.mxu0 0.0
        %1431 = vmatpush1.msra.mxu0 0.0
        %1432 = vmatprep.subr.mxu0 0.0
        %1433 = vmatpush1.msra.mxu0 0.0
        %1434 = vmatprep.subr.mxu0 0.0
        %1435 = vmatpush1.msra.mxu0 0.0
        %1436 = vmatprep.subr.mxu0 0.0
        %1437 = vmatpush1.msra.mxu0 0.0
        %1438 = vmatprep.subr.mxu0 0.0
        %1439 = vmatpush1.msra.mxu0 0.0
        %1440 = vmatprep.subr.mxu0 0.0
        %1441 = vmatpush1.msra.mxu0 0.0
        %1442 = vmatprep.subr.mxu0 0.0
        %1443 = vmatpush1.msra.mxu0 0.0
        %1444 = vmatprep.subr.mxu0 0.0
        %1445 = vmatpush1.msra.mxu0 0.0
        %1446 = vmatprep.subr.mxu0 0.0
        %1447 = vmatpush1.msra.mxu0 0.0
        %1448 = vmatprep.subr.mxu0 0.0
        %1449 = vmatpush1.msra.mxu0 0.0
        %1450 = vmatprep.subr.mxu0 0.0
        %1451 = vmatpush1.msra.mxu0 0.0
        %1452 = vmatprep.subr.mxu0 0.0
        %1453 = vmatpush1.msra.mxu0 0.0
        %1454 = vmatprep.subr.mxu0 0.0
        %1455 = vmatpush1.msra.mxu0 0.0
        %1456 = vmatprep.subr.mxu0 0.0
        %1457 = vmatpush1.msra.mxu0 0.0
        %1458 = vmatprep.subr.mxu0 0.0
        %1459 = vmatpush1.msra.mxu0 0.0
        %1460 = vmatprep.subr.mxu0 0.0
        %1461 = vmatpush1.msra.mxu0 0.0
        %1462 = vmatprep.subr.mxu0 0.0
        %1463 = vmatpush1.msra.mxu0 0.0
        %1464 = vmatprep.subr.mxu0 0.0
        %1465 = vmatpush1.msra.mxu0 0.0
        %1466 = vmatprep.subr.mxu0 0.0
        %1467 = vmatpush1.msra.mxu0 0.0
        %1468 = vmatprep.subr.mxu0 0.0
        %1469 = vmatpush1.msra.mxu0 0.0
        %1470 = vmatprep.subr.mxu0 0.0
        %1471 = vmatpush1.msra.mxu0 0.0
        %1472 = vmatprep.subr.mxu0 0.0
        %1473 = vmatpush1.msra.mxu0 0.0
        %1474 = vmatprep.subr.mxu0 0.0
        %1475 = vmatpush1.msra.mxu0 0.0
        %1476 = vmatprep.mubr.f32.mxu0 0.0
        %1477 = vmatmul.mubr.f32.gmra.mrb[0].mxu0 %v1410
        %v1478 = vpop.f32.mrb[0].mxu0
        %v1479 = vadd.f32 %v1407, %v1478
        %v1480 = vpop.f32.mrb[0].mxu0
        %1481 = vdwg.mxu0
        %v1482 = vmax.f32 %v1479, 0.0
        %v1483 = vlaneseq
        %v1484 = vshrl.u32 %v1483, 7
        %v1485 = vsub.s32 0, %v1484
        %v1486 = vrot.slane %v385, %v1485
        %vm1487 = vcmask 523264
        %v1489 = vsel %vm1487, %v1482, 0
        %1491 = vmatprep.subr.mxu0 0.0
        %1492 = vmatpush1.msra.mxu0 %v372
        %1493 = vmatprep.subr.mxu0 0.0
        %1494 = vmatpush1.msra.mxu0 %v373
        %1495 = vmatprep.subr.mxu0 0.0
        %1496 = vmatpush1.msra.mxu0 %v374
        %1497 = vmatprep.subr.mxu0 0.0
        %1498 = vmatpush1.msra.mxu0 %v375
        %1499 = vmatprep.subr.mxu0 0.0
        %1500 = vmatpush1.msra.mxu0 %v376
        %1501 = vmatprep.subr.mxu0 0.0
        %1502 = vmatpush1.msra.mxu0 %v377
        %1503 = vmatprep.subr.mxu0 0.0
        %1504 = vmatpush1.msra.mxu0 %v378
        %1505 = vmatprep.subr.mxu0 0.0
        %1506 = vmatpush1.msra.mxu0 %v379
        %1507 = vmatprep.subr.mxu0 0.0
        %1508 = vmatpush1.msra.mxu0 0.0
        %1509 = vmatprep.subr.mxu0 0.0
        %1510 = vmatpush1.msra.mxu0 0.0
        %1511 = vmatprep.subr.mxu0 0.0
        %1512 = vmatpush1.msra.mxu0 0.0
        %1513 = vmatprep.subr.mxu0 0.0
        %1514 = vmatpush1.msra.mxu0 0.0
        %1515 = vmatprep.subr.mxu0 0.0
        %1516 = vmatpush1.msra.mxu0 0.0
        %1517 = vmatprep.subr.mxu0 0.0
        %1518 = vmatpush1.msra.mxu0 0.0
        %1519 = vmatprep.subr.mxu0 0.0
        %1520 = vmatpush1.msra.mxu0 0.0
        %1521 = vmatprep.subr.mxu0 0.0
        %1522 = vmatpush1.msra.mxu0 0.0
        %1523 = vmatprep.subr.mxu0 0.0
        %1524 = vmatpush1.msra.mxu0 0.0
        %1525 = vmatprep.subr.mxu0 0.0
        %1526 = vmatpush1.msra.mxu0 0.0
        %1527 = vmatprep.subr.mxu0 0.0
        %1528 = vmatpush1.msra.mxu0 0.0
        %1529 = vmatprep.subr.mxu0 0.0
        %1530 = vmatpush1.msra.mxu0 0.0
        %1531 = vmatprep.subr.mxu0 0.0
        %1532 = vmatpush1.msra.mxu0 0.0
        %1533 = vmatprep.subr.mxu0 0.0
        %1534 = vmatpush1.msra.mxu0 0.0
        %1535 = vmatprep.subr.mxu0 0.0
        %1536 = vmatpush1.msra.mxu0 0.0
        %1537 = vmatprep.subr.mxu0 0.0
        %1538 = vmatpush1.msra.mxu0 0.0
        %1539 = vmatprep.subr.mxu0 0.0
        %1540 = vmatpush1.msra.mxu0 0.0
        %1541 = vmatprep.subr.mxu0 0.0
        %1542 = vmatpush1.msra.mxu0 0.0
        %1543 = vmatprep.subr.mxu0 0.0
        %1544 = vmatpush1.msra.mxu0 0.0
        %1545 = vmatprep.subr.mxu0 0.0
        %1546 = vmatpush1.msra.mxu0 0.0
        %1547 = vmatprep.subr.mxu0 0.0
        %1548 = vmatpush1.msra.mxu0 0.0
        %1549 = vmatprep.subr.mxu0 0.0
        %1550 = vmatpush1.msra.mxu0 0.0
        %1551 = vmatprep.subr.mxu0 0.0
        %1552 = vmatpush1.msra.mxu0 0.0
        %1553 = vmatprep.subr.mxu0 0.0
        %1554 = vmatpush1.msra.mxu0 0.0
        %1555 = vmatprep.mubr.f32.mxu0 0.0
        %1556 = vmatmul.mubr.f32.gmra.mrb[0].mxu0 %v1489
        %v1557 = vpop.f32.mrb[0].mxu0
        %v1558 = vadd.f32 %v1486, %v1557
        %v1559 = vpop.f32.mrb[0].mxu0
        %1560 = vdwg.mxu0
        %v1561 = vadd.f32 %v1402, %v1558
        %v1562 = vsel %vm394, %v1561, 0.0
        %1563 = vadd.xlane.f32.xlu0 %v1562
        %v1564 = vpop.xlane.xlu0 %1563
        %v1565 = vmul.f32 %v1564, %v1382
        %v1566 = vsub.f32 %v1561, %v1565
        %v1567 = vmul.f32 %v1566, %v1566
        %v1568 = vsel %vm394, %v1567, 0.0
        %1569 = vadd.xlane.f32.xlu0 %v1568
        %v1570 = vpop.xlane.xlu0 %1569
        %v1571 = vmul.f32 %v1570, %v1382
        %v1572 = vadd.f32 %v1571, 1e-05
        %v1573 = vrsqrt.pop %v1572
        %v1574 = vmul.f32 %v1566, %v1573
        %v1575 = vlaneseq
        %v1576 = vshrl.u32 %v1575, 7
        %v1577 = vsub.s32 0, %v1576
        %v1578 = vrot.slane %v388, %v1577
        %v1579 = vmul.f32 %v1574, %v1578
        %v1580 = vlaneseq
        %v1581 = vshrl.u32 %v1580, 7
        %v1582 = vsub.s32 0, %v1581
        %v1583 = vrot.slane %v389, %v1582
        %v1584 = vadd.f32 %v1579, %v1583
        %v1586 = vsel %vm394, %v1584, 0
        %1588 = vmatprep.subr.mxu0 0.0
        %1589 = vmatpush1.msra.mxu0 %v349
        %1590 = vmatprep.subr.mxu0 0.0
        %1591 = vmatpush1.msra.mxu0 %v350
        %1592 = vmatprep.subr.mxu0 0.0
        %1593 = vmatpush1.msra.mxu0 %v351
        %1594 = vmatprep.subr.mxu0 0.0
        %1595 = vmatpush1.msra.mxu0 %v352
        %1596 = vmatprep.subr.mxu0 0.0
        %1597 = vmatpush1.msra.mxu0 0.0
        %1598 = vmatprep.subr.mxu0 0.0
        %1599 = vmatpush1.msra.mxu0 0.0
        %1600 = vmatprep.subr.mxu0 0.0
        %1601 = vmatpush1.msra.mxu0 0.0
        %1602 = vmatprep.subr.mxu0 0.0
        %1603 = vmatpush1.msra.mxu0 0.0
        %1604 = vmatprep.subr.mxu0 0.0
        %1605 = vmatpush1.msra.mxu0 0.0
        %1606 = vmatprep.subr.mxu0 0.0
        %1607 = vmatpush1.msra.mxu0 0.0
        %1608 = vmatprep.subr.mxu0 0.0
        %1609 = vmatpush1.msra.mxu0 0.0
        %1610 = vmatprep.subr.mxu0 0.0
        %1611 = vmatpush1.msra.mxu0 0.0
        %1612 = vmatprep.subr.mxu0 0.0
        %1613 = vmatpush1.msra.mxu0 0.0
        %1614 = vmatprep.subr.mxu0 0.0
        %1615 = vmatpush1.msra.mxu0 0.0
        %1616 = vmatprep.subr.mxu0 0.0
        %1617 = vmatpush1.msra.mxu0 0.0
        %1618 = vmatprep.subr.mxu0 0.0
        %1619 = vmatpush1.msra.mxu0 0.0
        %1620 = vmatprep.subr.mxu0 0.0
        %1621 = vmatpush1.msra.mxu0 0.0
        %1622 = vmatprep.subr.mxu0 0.0
        %1623 = vmatpush1.msra.mxu0 0.0
        %1624 = vmatprep.subr.mxu0 0.0
        %1625 = vmatpush1.msra.mxu0 0.0
        %1626 = vmatprep.subr.mxu0 0.0
        %1627 = vmatpush1.msra.mxu0 0.0
        %1628 = vmatprep.subr.mxu0 0.0
        %1629 = vmatpush1.msra.mxu0 0.0
        %1630 = vmatprep.subr.mxu0 0.0
        %1631 = vmatpush1.msra.mxu0 0.0
        %1632 = vmatprep.subr.mxu0 0.0
        %1633 = vmatpush1.msra.mxu0 0.0
        %1634 = vmatprep.subr.mxu0 0.0
        %1635 = vmatpush1.msra.mxu0 0.0
        %1636 = vmatprep.subr.mxu0 0.0
        %1637 = vmatpush1.msra.mxu0 0.0
        %1638 = vmatprep.subr.mxu0 0.0
        %1639 = vmatpush1.msra.mxu0 0.0
        %1640 = vmatprep.subr.mxu0 0.0
        %1641 = vmatpush1.msra.mxu0 0.0
        %1642 = vmatprep.subr.mxu0 0.0
        %1643 = vmatpush1.msra.mxu0 0.0
        %1644 = vmatprep.subr.mxu0 0.0
        %1645 = vmatpush1.msra.mxu0 0.0
        %1646 = vmatprep.subr.mxu0 0.0
        %1647 = vmatpush1.msra.mxu0 0.0
        %1648 = vmatprep.subr.mxu0 0.0
        %1649 = vmatpush1.msra.mxu0 0.0
        %1650 = vmatprep.subr.mxu0 0.0
        %1651 = vmatpush1.msra.mxu0 0.0
        %1652 = vmatprep.mubr.f32.mxu0 0.0
        %1653 = vmatmul.mubr.f32.gmra.mrb[0].mxu0 %v1586
        %v1654 = vpop.f32.mrb[0].mxu0
        %v1655 = vadd.f32 %v564, %v1654
        %v1656 = vpop.f32.mrb[0].mxu0
        %1657 = vdwg.mxu0
        %1659 = vrot.lane.b32.xlu0 %v1655, 120
        %v1660 = vpop.permute.xlu0 %1659
        %1661 = vrot.lane.b32.xlu0 %v1655, 112
        %v1662 = vpop.permute.xlu0 %1661
        %1663 = vrot.lane.b32.xlu0 %v1655, 104
        %v1664 = vpop.permute.xlu0 %1663
        %v1665 = vsel %vm651, %v1655, 0
        %1667 = vmatprep.subr.mxu0 0.0
        %1668 = vmatpush1.xpose.msra.mxu0 %v654
        %1669 = vmatprep.subr.mxu0 0.0
        %1670 = vmatpush1.xpose.msra.mxu0 0.0
        %1671 = vmatprep.subr.mxu0 0.0
        %1672 = vmatpush1.xpose.msra.mxu0 0.0
        %1673 = vmatprep.subr.mxu0 0.0
        %1674 = vmatpush1.xpose.msra.mxu0 0.0
        %1675 = vmatprep.subr.mxu0 0.0
        %1676 = vmatpush1.xpose.msra.mxu0 0.0
        %1677 = vmatprep.subr.mxu0 0.0
        %1678 = vmatpush1.xpose.msra.mxu0 0.0
        %1679 = vmatprep.subr.mxu0 0.0
        %1680 = vmatpush1.xpose.msra.mxu0 0.0
        %1681 = vmatprep.subr.mxu0 0.0
        %1682 = vmatpush1.xpose.msra.mxu0 0.0
        %1683 = vmatprep.subr.mxu0 0.0
        %1684 = vmatpush1.xpose.msra.mxu0 0.0
        %1685 = vmatprep.subr.mxu0 0.0
        %1686 = vmatpush1.xpose.msra.mxu0 0.0
        %1687 = vmatprep.subr.mxu0 0.0
        %1688 = vmatpush1.xpose.msra.mxu0 0.0
        %1689 = vmatprep.subr.mxu0 0.0
        %1690 = vmatpush1.xpose.msra.mxu0 0.0
        %1691 = vmatprep.subr.mxu0 0.0
        %1692 = vmatpush1.xpose.msra.mxu0 0.0
        %1693 = vmatprep.subr.mxu0 0.0
        %1694 = vmatpush1.xpose.msra.mxu0 0.0
        %1695 = vmatprep.subr.mxu0 0.0
        %1696 = vmatpush1.xpose.msra.mxu0 0.0
        %1697 = vmatprep.subr.mxu0 0.0
        %1698 = vmatpush1.xpose.msra.mxu0 0.0
        %1699 = vmatprep.subr.mxu0 0.0
        %1700 = vmatpush1.xpose.msra.mxu0 0.0
        %1701 = vmatprep.subr.mxu0 0.0
        %1702 = vmatpush1.xpose.msra.mxu0 0.0
        %1703 = vmatprep.subr.mxu0 0.0
        %1704 = vmatpush1.xpose.msra.mxu0 0.0
        %1705 = vmatprep.subr.mxu0 0.0
        %1706 = vmatpush1.xpose.msra.mxu0 0.0
        %1707 = vmatprep.subr.mxu0 0.0
        %1708 = vmatpush1.xpose.msra.mxu0 0.0
        %1709 = vmatprep.subr.mxu0 0.0
        %1710 = vmatpush1.xpose.msra.mxu0 0.0
        %1711 = vmatprep.subr.mxu0 0.0
        %1712 = vmatpush1.xpose.msra.mxu0 0.0
        %1713 = vmatprep.subr.mxu0 0.0
        %1714 = vmatpush1.xpose.msra.mxu0 0.0
        %1715 = vmatprep.subr.mxu0 0.0
        %1716 = vmatpush1.xpose.msra.mxu0 0.0
        %1717 = vmatprep.subr.mxu0 0.0
        %1718 = vmatpush1.xpose.msra.mxu0 0.0
        %1719 = vmatprep.subr.mxu0 0.0
        %1720 = vmatpush1.xpose.msra.mxu0 0.0
        %1721 = vmatprep.subr.mxu0 0.0
        %1722 = vmatpush1.xpose.msra.mxu0 0.0
        %1723 = vmatprep.subr.mxu0 0.0
        %1724 = vmatpush1.xpose.msra.mxu0 0.0
        %1725 = vmatprep.subr.mxu0 0.0
        %1726 = vmatpush1.xpose.msra.mxu0 0.0
        %1727 = vmatprep.subr.mxu0 0.0
        %1728 = vmatpush1.xpose.msra.mxu0 0.0
        %1729 = vmatprep.subr.mxu0 0.0
        %1730 = vmatpush1.xpose.msra.mxu0 0.0
        %1731 = vmatprep.mubr.f32.mxu0 0.0
        %1732 = vmatmul.mubr.f32.gmra.mrb[0].mxu0 %v1665
        %v1733 = vpop.f32.mrb[0].mxu0
        %v1734 = vadd.f32 %v649, %v1733
        %v1735 = vpop.f32.mrb[0].mxu0
        %1736 = vdwg.mxu0
        %v1737 = vsel %vm651, %v1660, 0
        %1739 = vmatprep.subr.mxu0 0.0
        %1740 = vmatpush1.xpose.msra.mxu0 %v728
        %1741 = vmatprep.subr.mxu0 0.0
        %1742 = vmatpush1.xpose.msra.mxu0 0.0
        %1743 = vmatprep.subr.mxu0 0.0
        %1744 = vmatpush1.xpose.msra.mxu0 0.0
        %1745 = vmatprep.subr.mxu0 0.0
        %1746 = vmatpush1.xpose.msra.mxu0 0.0
        %1747 = vmatprep.subr.mxu0 0.0
        %1748 = vmatpush1.xpose.msra.mxu0 0.0
        %1749 = vmatprep.subr.mxu0 0.0
        %1750 = vmatpush1.xpose.msra.mxu0 0.0
        %1751 = vmatprep.subr.mxu0 0.0
        %1752 = vmatpush1.xpose.msra.mxu0 0.0
        %1753 = vmatprep.subr.mxu0 0.0
        %1754 = vmatpush1.xpose.msra.mxu0 0.0
        %1755 = vmatprep.subr.mxu0 0.0
        %1756 = vmatpush1.xpose.msra.mxu0 0.0
        %1757 = vmatprep.subr.mxu0 0.0
        %1758 = vmatpush1.xpose.msra.mxu0 0.0
        %1759 = vmatprep.subr.mxu0 0.0
        %1760 = vmatpush1.xpose.msra.mxu0 0.0
        %1761 = vmatprep.subr.mxu0 0.0
        %1762 = vmatpush1.xpose.msra.mxu0 0.0
        %1763 = vmatprep.subr.mxu0 0.0
        %1764 = vmatpush1.xpose.msra.mxu0 0.0
        %1765 = vmatprep.subr.mxu0 0.0
        %1766 = vmatpush1.xpose.msra.mxu0 0.0
        %1767 = vmatprep.subr.mxu0 0.0
        %1768 = vmatpush1.xpose.msra.mxu0 0.0
        %1769 = vmatprep.subr.mxu0 0.0
        %1770 = vmatpush1.xpose.msra.mxu0 0.0
        %1771 = vmatprep.subr.mxu0 0.0
        %1772 = vmatpush1.xpose.msra.mxu0 0.0
        %1773 = vmatprep.subr.mxu0 0.0
        %1774 = vmatpush1.xpose.msra.mxu0 0.0
        %1775 = vmatprep.subr.mxu0 0.0
        %1776 = vmatpush1.xpose.msra.mxu0 0.0
        %1777 = vmatprep.subr.mxu0 0.0
        %1778 = vmatpush1.xpose.msra.mxu0 0.0
        %1779 = vmatprep.subr.mxu0 0.0
        %1780 = vmatpush1.xpose.msra.mxu0 0.0
        %1781 = vmatprep.subr.mxu0 0.0
        %1782 = vmatpush1.xpose.msra.mxu0 0.0
        %1783 = vmatprep.subr.mxu0 0.0
        %1784 = vmatpush1.xpose.msra.mxu0 0.0
        %1785 = vmatprep.subr.mxu0 0.0
        %1786 = vmatpush1.xpose.msra.mxu0 0.0
        %1787 = vmatprep.subr.mxu0 0.0
        %1788 = vmatpush1.xpose.msra.mxu0 0.0
        %1789 = vmatprep.subr.mxu0 0.0
        %1790 = vmatpush1.xpose.msra.mxu0 0.0
        %1791 = vmatprep.subr.mxu0 0.0
        %1792 = vmatpush1.xpose.msra.mxu0 0.0
        %1793 = vmatprep.subr.mxu0 0.0
        %1794 = vmatpush1.xpose.msra.mxu0 0.0
        %1795 = vmatprep.subr.mxu0 0.0
        %1796 = vmatpush1.xpose.msra.mxu0 0.0
        %1797 = vmatprep.subr.mxu0 0.0
        %1798 = vmatpush1.xpose.msra.mxu0 0.0
        %1799 = vmatprep.subr.mxu0 0.0
        %1800 = vmatpush1.xpose.msra.mxu0 0.0
        %1801 = vmatprep.subr.mxu0 0.0
        %1802 = vmatpush1.xpose.msra.mxu0 0.0
        %1803 = vmatprep.mubr.f32.mxu0 0.0
        %1804 = vmatmul.mubr.f32.gmra.mrb[0].mxu0 %v1737
        %v1805 = vpop.f32.mrb[0].mxu0
        %v1806 = vadd.f32 %v649, %v1805
        %v1807 = vpop.f32.mrb[0].mxu0
        %1808 = vdwg.mxu0
        %v1809 = vsel %vm651, %v1662, 0
        %1811 = vmatprep.subr.mxu0 0.0
        %1812 = vmatpush1.xpose.msra.mxu0 %v802
        %1813 = vmatprep.subr.mxu0 0.0
        %1814 = vmatpush1.xpose.msra.mxu0 0.0
        %1815 = vmatprep.subr.mxu0 0.0
        %1816 = vmatpush1.xpose.msra.mxu0 0.0
        %1817 = vmatprep.subr.mxu0 0.0
        %1818 = vmatpush1.xpose.msra.mxu0 0.0
        %1819 = vmatprep.subr.mxu0 0.0
        %1820 = vmatpush1.xpose.msra.mxu0 0.0
        %1821 = vmatprep.subr.mxu0 0.0
        %1822 = vmatpush1.xpose.msra.mxu0 0.0
        %1823 = vmatprep.subr.mxu0 0.0
        %1824 = vmatpush1.xpose.msra.mxu0 0.0
        %1825 = vmatprep.subr.mxu0 0.0
        %1826 = vmatpush1.xpose.msra.mxu0 0.0
        %1827 = vmatprep.subr.mxu0 0.0
        %1828 = vmatpush1.xpose.msra.mxu0 0.0
        %1829 = vmatprep.subr.mxu0 0.0
        %1830 = vmatpush1.xpose.msra.mxu0 0.0
        %1831 = vmatprep.subr.mxu0 0.0
        %1832 = vmatpush1.xpose.msra.mxu0 0.0
        %1833 = vmatprep.subr.mxu0 0.0
        %1834 = vmatpush1.xpose.msra.mxu0 0.0
        %1835 = vmatprep.subr.mxu0 0.0
        %1836 = vmatpush1.xpose.msra.mxu0 0.0
        %1837 = vmatprep.subr.mxu0 0.0
        %1838 = vmatpush1.xpose.msra.mxu0 0.0
        %1839 = vmatprep.subr.mxu0 0.0
        %1840 = vmatpush1.xpose.msra.mxu0 0.0
        %1841 = vmatprep.subr.mxu0 0.0
        %1842 = vmatpush1.xpose.msra.mxu0 0.0
        %1843 = vmatprep.subr.mxu0 0.0
        %1844 = vmatpush1.xpose.msra.mxu0 0.0
        %1845 = vmatprep.subr.mxu0 0.0
        %1846 = vmatpush1.xpose.msra.mxu0 0.0
        %1847 = vmatprep.subr.mxu0 0.0
        %1848 = vmatpush1.xpose.msra.mxu0 0.0
        %1849 = vmatprep.subr.mxu0 0.0
        %1850 = vmatpush1.xpose.msra.mxu0 0.0
        %1851 = vmatprep.subr.mxu0 0.0
        %1852 = vmatpush1.xpose.msra.mxu0 0.0
        %1853 = vmatprep.subr.mxu0 0.0
        %1854 = vmatpush1.xpose.msra.mxu0 0.0
        %1855 = vmatprep.subr.mxu0 0.0
        %1856 = vmatpush1.xpose.msra.mxu0 0.0
        %1857 = vmatprep.subr.mxu0 0.0
        %1858 = vmatpush1.xpose.msra.mxu0 0.0
        %1859 = vmatprep.subr.mxu0 0.0
        %1860 = vmatpush1.xpose.msra.mxu0 0.0
        %1861 = vmatprep.subr.mxu0 0.0
        %1862 = vmatpush1.xpose.msra.mxu0 0.0
        %1863 = vmatprep.subr.mxu0 0.0
        %1864 = vmatpush1.xpose.msra.mxu0 0.0
        %1865 = vmatprep.subr.mxu0 0.0
        %1866 = vmatpush1.xpose.msra.mxu0 0.0
        %1867 = vmatprep.subr.mxu0 0.0
        %1868 = vmatpush1.xpose.msra.mxu0 0.0
        %1869 = vmatprep.subr.mxu0 0.0
        %1870 = vmatpush1.xpose.msra.mxu0 0.0
        %1871 = vmatprep.subr.mxu0 0.0
        %1872 = vmatpush1.xpose.msra.mxu0 0.0
        %1873 = vmatprep.subr.mxu0 0.0
        %1874 = vmatpush1.xpose.msra.mxu0 0.0
        %1875 = vmatprep.mubr.f32.mxu0 0.0
        %1876 = vmatmul.mubr.f32.gmra.mrb[0].mxu0 %v1809
        %v1877 = vpop.f32.mrb[0].mxu0
        %v1878 = vadd.f32 %v649, %v1877
        %v1879 = vpop.f32.mrb[0].mxu0
        %1880 = vdwg.mxu0
        %v1881 = vsel %vm651, %v1664, 0
        %1883 = vmatprep.subr.mxu0 0.0
        %1884 = vmatpush1.xpose.msra.mxu0 %v876
        %1885 = vmatprep.subr.mxu0 0.0
        %1886 = vmatpush1.xpose.msra.mxu0 0.0
        %1887 = vmatprep.subr.mxu0 0.0
        %1888 = vmatpush1.xpose.msra.mxu0 0.0
        %1889 = vmatprep.subr.mxu0 0.0
        %1890 = vmatpush1.xpose.msra.mxu0 0.0
        %1891 = vmatprep.subr.mxu0 0.0
        %1892 = vmatpush1.xpose.msra.mxu0 0.0
        %1893 = vmatprep.subr.mxu0 0.0
        %1894 = vmatpush1.xpose.msra.mxu0 0.0
        %1895 = vmatprep.subr.mxu0 0.0
        %1896 = vmatpush1.xpose.msra.mxu0 0.0
        %1897 = vmatprep.subr.mxu0 0.0
        %1898 = vmatpush1.xpose.msra.mxu0 0.0
        %1899 = vmatprep.subr.mxu0 0.0
        %1900 = vmatpush1.xpose.msra.mxu0 0.0
        %1901 = vmatprep.subr.mxu0 0.0
        %1902 = vmatpush1.xpose.msra.mxu0 0.0
        %1903 = vmatprep.subr.mxu0 0.0
        %1904 = vmatpush1.xpose.msra.mxu0 0.0
        %1905 = vmatprep.subr.mxu0 0.0
        %1906 = vmatpush1.xpose.msra.mxu0 0.0
        %1907 = vmatprep.subr.mxu0 0.0
        %1908 = vmatpush1.xpose.msra.mxu0 0.0
        %1909 = vmatprep.subr.mxu0 0.0
        %1910 = vmatpush1.xpose.msra.mxu0 0.0
        %1911 = vmatprep.subr.mxu0 0.0
        %1912 = vmatpush1.xpose.msra.mxu0 0.0
        %1913 = vmatprep.subr.mxu0 0.0
        %1914 = vmatpush1.xpose.msra.mxu0 0.0
        %1915 = vmatprep.subr.mxu0 0.0
        %1916 = vmatpush1.xpose.msra.mxu0 0.0
        %1917 = vmatprep.subr.mxu0 0.0
        %1918 = vmatpush1.xpose.msra.mxu0 0.0
        %1919 = vmatprep.subr.mxu0 0.0
        %1920 = vmatpush1.xpose.msra.mxu0 0.0
        %1921 = vmatprep.subr.mxu0 0.0
        %1922 = vmatpush1.xpose.msra.mxu0 0.0
        %1923 = vmatprep.subr.mxu0 0.0
        %1924 = vmatpush1.xpose.msra.mxu0 0.0
        %1925 = vmatprep.subr.mxu0 0.0
        %1926 = vmatpush1.xpose.msra.mxu0 0.0
        %1927 = vmatprep.subr.mxu0 0.0
        %1928 = vmatpush1.xpose.msra.mxu0 0.0
        %1929 = vmatprep.subr.mxu0 0.0
        %1930 = vmatpush1.xpose.msra.mxu0 0.0
        %1931 = vmatprep.subr.mxu0 0.0
        %1932 = vmatpush1.xpose.msra.mxu0 0.0
        %1933 = vmatprep.subr.mxu0 0.0
        %1934 = vmatpush1.xpose.msra.mxu0 0.0
        %1935 = vmatprep.subr.mxu0 0.0
        %1936 = vmatpush1.xpose.msra.mxu0 0.0
        %1937 = vmatprep.subr.mxu0 0.0
        %1938 = vmatpush1.xpose.msra.mxu0 0.0
        %1939 = vmatprep.subr.mxu0 0.0
        %1940 = vmatpush1.xpose.msra.mxu0 0.0
        %1941 = vmatprep.subr.mxu0 0.0
        %1942 = vmatpush1.xpose.msra.mxu0 0.0
        %1943 = vmatprep.subr.mxu0 0.0
        %1944 = vmatpush1.xpose.msra.mxu0 0.0
        %1945 = vmatprep.subr.mxu0 0.0
        %1946 = vmatpush1.xpose.msra.mxu0 0.0
        %1947 = vmatprep.mubr.f32.mxu0 0.0
        %1948 = vmatmul.mubr.f32.gmra.mrb[0].mxu0 %v1881
        %v1949 = vpop.f32.mrb[0].mxu0
        %v1950 = vadd.f32 %v649, %v1949
        %v1951 = vpop.f32.mrb[0].mxu0
        %1952 = vdwg.mxu0
        %v1953 = vsel %vm651, %v1734, -inf
        %1954 = vmax.xlane.f32.xlu0 %v1953
        %v1955 = vpop.xlane.xlu0 %1954
        %v1956 = vsel %vm651, %v1806, -inf
        %1957 = vmax.xlane.f32.xlu0 %v1956
        %v1958 = vpop.xlane.xlu0 %1957
        %v1959 = vsel %vm651, %v1878, -inf
        %1960 = vmax.xlane.f32.xlu0 %v1959
        %v1961 = vpop.xlane.xlu0 %1960
        %v1962 = vsel %vm651, %v1950, -inf
        %1963 = vmax.xlane.f32.xlu0 %v1962
        %v1964 = vpop.xlane.xlu0 %1963
        %v1965 = vsub.f32 %v1734, %v1955
        %v1966 = vsub.f32 %v1806, %v1958
        %v1967 = vsub.f32 %v1878, %v1961
        %v1968 = vsub.f32 %v1950, %v1964
        %v1969 = vmul.f32 %v1965, 1.442695
        %v1970 = vpow.pop %v1969
        %v1971 = vmul.f32 %v1966, 1.442695
        %v1972 = vpow.pop %v1971
        %v1973 = vmul.f32 %v1967, 1.442695
        %v1974 = vpow.pop %v1973
        %v1975 = vmul.f32 %v1968, 1.442695
        %v1976 = vpow.pop %v1975
        %v1977 = vsel %vm651, %v1970, 0.0
        %1978 = vadd.xlane.f32.xlu0 %v1977
        %v1979 = vpop.xlane.xlu0 %1978
        %v1980 = vsel %vm651, %v1972, 0.0
        %1981 = vadd.xlane.f32.xlu0 %v1980
        %v1982 = vpop.xlane.xlu0 %1981
        %v1983 = vsel %vm651, %v1974, 0.0
        %1984 = vadd.xlane.f32.xlu0 %v1983
        %v1985 = vpop.xlane.xlu0 %1984
        %v1986 = vsel %vm651, %v1976, 0.0
        %1987 = vadd.xlane.f32.xlu0 %v1986
        %v1988 = vpop.xlane.xlu0 %1987
        %v1989 = vrcp.pop %v1979
        %v1990 = vrcp.pop %v1982
        %v1991 = vrcp.pop %v1985
        %v1992 = vrcp.pop %v1988
        %v1993 = vmul.f32 %v1970, %v1989
        %v1994 = vmul.f32 %v1972, %v1990
        %v1995 = vmul.f32 %v1974, %v1991
        %v1996 = vmul.f32 %v1976, %v1992
        %v1998 = vsel %vm651, %v1993, 0
        %2000 = vmatprep.subr.mxu0 0.0
        %2001 = vmatpush1.msra.mxu0 %v539
        %2002 = vmatprep.subr.mxu0 0.0
        %2003 = vmatpush1.msra.mxu0 0.0
        %2004 = vmatprep.subr.mxu0 0.0
        %2005 = vmatpush1.msra.mxu0 0.0
        %2006 = vmatprep.subr.mxu0 0.0
        %2007 = vmatpush1.msra.mxu0 0.0
        %2008 = vmatprep.subr.mxu0 0.0
        %2009 = vmatpush1.msra.mxu0 0.0
        %2010 = vmatprep.subr.mxu0 0.0
        %2011 = vmatpush1.msra.mxu0 0.0
        %2012 = vmatprep.subr.mxu0 0.0
        %2013 = vmatpush1.msra.mxu0 0.0
        %2014 = vmatprep.subr.mxu0 0.0
        %2015 = vmatpush1.msra.mxu0 0.0
        %2016 = vmatprep.subr.mxu0 0.0
        %2017 = vmatpush1.msra.mxu0 0.0
        %2018 = vmatprep.subr.mxu0 0.0
        %2019 = vmatpush1.msra.mxu0 0.0
        %2020 = vmatprep.subr.mxu0 0.0
        %2021 = vmatpush1.msra.mxu0 0.0
        %2022 = vmatprep.subr.mxu0 0.0
        %2023 = vmatpush1.msra.mxu0 0.0
        %2024 = vmatprep.subr.mxu0 0.0
        %2025 = vmatpush1.msra.mxu0 0.0
        %2026 = vmatprep.subr.mxu0 0.0
        %2027 = vmatpush1.msra.mxu0 0.0
        %2028 = vmatprep.subr.mxu0 0.0
        %2029 = vmatpush1.msra.mxu0 0.0
        %2030 = vmatprep.subr.mxu0 0.0
        %2031 = vmatpush1.msra.mxu0 0.0
        %2032 = vmatprep.subr.mxu0 0.0
        %2033 = vmatpush1.msra.mxu0 0.0
        %2034 = vmatprep.subr.mxu0 0.0
        %2035 = vmatpush1.msra.mxu0 0.0
        %2036 = vmatprep.subr.mxu0 0.0
        %2037 = vmatpush1.msra.mxu0 0.0
        %2038 = vmatprep.subr.mxu0 0.0
        %2039 = vmatpush1.msra.mxu0 0.0
        %2040 = vmatprep.subr.mxu0 0.0
        %2041 = vmatpush1.msra.mxu0 0.0
        %2042 = vmatprep.subr.mxu0 0.0
        %2043 = vmatpush1.msra.mxu0 0.0
        %2044 = vmatprep.subr.mxu0 0.0
        %2045 = vmatpush1.msra.mxu0 0.0
        %2046 = vmatprep.subr.mxu0 0.0
        %2047 = vmatpush1.msra.mxu0 0.0
        %2048 = vmatprep.subr.mxu0 0.0
        %2049 = vmatpush1.msra.mxu0 0.0
        %2050 = vmatprep.subr.mxu0 0.0
        %2051 = vmatpush1.msra.mxu0 0.0
        %2052 = vmatprep.subr.mxu0 0.0
        %2053 = vmatpush1.msra.mxu0 0.0
        %2054 = vmatprep.subr.mxu0 0.0
        %2055 = vmatpush1.msra.mxu0 0.0
        %2056 = vmatprep.subr.mxu0 0.0
        %2057 = vmatpush1.msra.mxu0 0.0
        %2058 = vmatprep.subr.mxu0 0.0
        %2059 = vmatpush1.msra.mxu0 0.0
        %2060 = vmatprep.subr.mxu0 0.0
        %2061 = vmatpush1.msra.mxu0 0.0
        %2062 = vmatprep.subr.mxu0 0.0
        %2063 = vmatpush1.msra.mxu0 0.0
        %2064 = vmatprep.mubr.f32.mxu0 0.0
        %2065 = vmatmul.mubr.f32.gmra.mrb[0].mxu0 %v1998
        %v2066 = vpop.f32.mrb[0].mxu0
        %v2067 = vadd.f32 0.0, %v2066
        %v2068 = vpop.f32.mrb[0].mxu0
        %2069 = vdwg.mxu0
        %v2071 = vsel %vm651, %v1994, 0
        %2073 = vmatprep.subr.mxu0 0.0
        %2074 = vmatpush1.msra.mxu0 %v551
        %2075 = vmatprep.subr.mxu0 0.0
        %2076 = vmatpush1.msra.mxu0 0.0
        %2077 = vmatprep.subr.mxu0 0.0
        %2078 = vmatpush1.msra.mxu0 0.0
        %2079 = vmatprep.subr.mxu0 0.0
        %2080 = vmatpush1.msra.mxu0 0.0
        %2081 = vmatprep.subr.mxu0 0.0
        %2082 = vmatpush1.msra.mxu0 0.0
        %2083 = vmatprep.subr.mxu0 0.0
        %2084 = vmatpush1.msra.mxu0 0.0
        %2085 = vmatprep.subr.mxu0 0.0
        %2086 = vmatpush1.msra.mxu0 0.0
        %2087 = vmatprep.subr.mxu0 0.0
        %2088 = vmatpush1.msra.mxu0 0.0
        %2089 = vmatprep.subr.mxu0 0.0
        %2090 = vmatpush1.msra.mxu0 0.0
        %2091 = vmatprep.subr.mxu0 0.0
        %2092 = vmatpush1.msra.mxu0 0.0
        %2093 = vmatprep.subr.mxu0 0.0
        %2094 = vmatpush1.msra.mxu0 0.0
        %2095 = vmatprep.subr.mxu0 0.0
        %2096 = vmatpush1.msra.mxu0 0.0
        %2097 = vmatprep.subr.mxu0 0.0
        %2098 = vmatpush1.msra.mxu0 0.0
        %2099 = vmatprep.subr.mxu0 0.0
        %2100 = vmatpush1.msra.mxu0 0.0
        %2101 = vmatprep.subr.mxu0 0.0
        %2102 = vmatpush1.msra.mxu0 0.0
        %2103 = vmatprep.subr.mxu0 0.0
        %2104 = vmatpush1.msra.mxu0 0.0
        %2105 = vmatprep.subr.mxu0 0.0
        %2106 = vmatpush1.msra.mxu0 0.0
        %2107 = vmatprep.subr.mxu0 0.0
        %2108 = vmatpush1.msra.mxu0 0.0
        %2109 = vmatprep.subr.mxu0 0.0
        %2110 = vmatpush1.msra.mxu0 0.0
        %2111 = vmatprep.subr.mxu0 0.0
        %2112 = vmatpush1.msra.mxu0 0.0
        %2113 = vmatprep.subr.mxu0 0.0
        %2114 = vmatpush1.msra.mxu0 0.0
        %2115 = vmatprep.subr.mxu0 0.0
        %2116 = vmatpush1.msra.mxu0 0.0
        %2117 = vmatprep.subr.mxu0 0.0
        %2118 = vmatpush1.msra.mxu0 0.0
        %2119 = vmatprep.subr.mxu0 0.0
        %2120 = vmatpush1.msra.mxu0 0.0
        %2121 = vmatprep.subr.mxu0 0.0
        %2122 = vmatpush1.msra.mxu0 0.0
        %2123 = vmatprep.subr.mxu0 0.0
        %2124 = vmatpush1.msra.mxu0 0.0
        %2125 = vmatprep.subr.mxu0 0.0
        %2126 = vmatpush1.msra.mxu0 0.0
        %2127 = vmatprep.subr.mxu0 0.0
        %2128 = vmatpush1.msra.mxu0 0.0
        %2129 = vmatprep.subr.mxu0 0.0
        %2130 = vmatpush1.msra.mxu0 0.0
        %2131 = vmatprep.subr.mxu0 0.0
        %2132 = vmatpush1.msra.mxu0 0.0
        %2133 = vmatprep.subr.mxu0 0.0
        %2134 = vmatpush1.msra.mxu0 0.0
        %2135 = vmatprep.subr.mxu0 0.0
        %2136 = vmatpush1.msra.mxu0 0.0
        %2137 = vmatprep.mubr.f32.mxu0 0.0
        %2138 = vmatmul.mubr.f32.gmra.mrb[0].mxu0 %v2071
        %v2139 = vpop.f32.mrb[0].mxu0
        %v2140 = vadd.f32 0.0, %v2139
        %v2141 = vpop.f32.mrb[0].mxu0
        %2142 = vdwg.mxu0
        %v2144 = vsel %vm651, %v1995, 0
        %2146 = vmatprep.subr.mxu0 0.0
        %2147 = vmatpush1.msra.mxu0 %v554
        %2148 = vmatprep.subr.mxu0 0.0
        %2149 = vmatpush1.msra.mxu0 0.0
        %2150 = vmatprep.subr.mxu0 0.0
        %2151 = vmatpush1.msra.mxu0 0.0
        %2152 = vmatprep.subr.mxu0 0.0
        %2153 = vmatpush1.msra.mxu0 0.0
        %2154 = vmatprep.subr.mxu0 0.0
        %2155 = vmatpush1.msra.mxu0 0.0
        %2156 = vmatprep.subr.mxu0 0.0
        %2157 = vmatpush1.msra.mxu0 0.0
        %2158 = vmatprep.subr.mxu0 0.0
        %2159 = vmatpush1.msra.mxu0 0.0
        %2160 = vmatprep.subr.mxu0 0.0
        %2161 = vmatpush1.msra.mxu0 0.0
        %2162 = vmatprep.subr.mxu0 0.0
        %2163 = vmatpush1.msra.mxu0 0.0
        %2164 = vmatprep.subr.mxu0 0.0
        %2165 = vmatpush1.msra.mxu0 0.0
        %2166 = vmatprep.subr.mxu0 0.0
        %2167 = vmatpush1.msra.mxu0 0.0
        %2168 = vmatprep.subr.mxu0 0.0
        %2169 = vmatpush1.msra.mxu0 0.0
        %2170 = vmatprep.subr.mxu0 0.0
        %2171 = vmatpush1.msra.mxu0 0.0
        %2172 = vmatprep.subr.mxu0 0.0
        %2173 = vmatpush1.msra.mxu0 0.0
        %2174 = vmatprep.subr.mxu0 0.0
        %2175 = vmatpush1.msra.mxu0 0.0
        %2176 = vmatprep.subr.mxu0 0.0
        %2177 = vmatpush1.msra.mxu0 0.0
        %2178 = vmatprep.subr.mxu0 0.0
        %2179 = vmatpush1.msra.mxu0 0.0
        %2180 = vmatprep.subr.mxu0 0.0
        %2181 = vmatpush1.msra.mxu0 0.0
        %2182 = vmatprep.subr.mxu0 0.0
        %2183 = vmatpush1.msra.mxu0 0.0
        %2184 = vmatprep.subr.mxu0 0.0
        %2185 = vmatpush1.msra.mxu0 0.0
        %2186 = vmatprep.subr.mxu0 0.0
        %2187 = vmatpush1.msra.mxu0 0.0
        %2188 = vmatprep.subr.mxu0 0.0
        %2189 = vmatpush1.msra.mxu0 0.0
        %2190 = vmatprep.subr.mxu0 0.0
        %2191 = vmatpush1.msra.mxu0 0.0
        %2192 = vmatprep.subr.mxu0 0.0
        %2193 = vmatpush1.msra.mxu0 0.0
        %2194 = vmatprep.subr.mxu0 0.0
        %2195 = vmatpush1.msra.mxu0 0.0
        %2196 = vmatprep.subr.mxu0 0.0
        %2197 = vmatpush1.msra.mxu0 0.0
        %2198 = vmatprep.subr.mxu0 0.0
        %2199 = vmatpush1.msra.mxu0 0.0
        %2200 = vmatprep.subr.mxu0 0.0
        %2201 = vmatpush1.msra.mxu0 0.0
        %2202 = vmatprep.subr.mxu0 0.0
        %2203 = vmatpush1.msra.mxu0 0.0
        %2204 = vmatprep.subr.mxu0 0.0
        %2205 = vmatpush1.msra.mxu0 0.0
        %2206 = vmatprep.subr.mxu0 0.0
        %2207 = vmatpush1.msra.mxu0 0.0
        %2208 = vmatprep.subr.mxu0 0.0
        %2209 = vmatpush1.msra.mxu0 0.0
        %2210 = vmatprep.mubr.f32.mxu0 0.0
        %2211 = vmatmul.mubr.f32.gmra.mrb[0].mxu0 %v2144
        %v2212 = vpop.f32.mrb[0].mxu0
        %v2213 = vadd.f32 0.0, %v2212
        %v2214 = vpop.f32.mrb[0].mxu0
        %2215 = vdwg.mxu0
        %v2217 = vsel %vm651, %v1996, 0
        %2219 = vmatprep.subr.mxu0 0.0
        %2220 = vmatpush1.msra.mxu0 %v557
        %2221 = vmatprep.subr.mxu0 0.0
        %2222 = vmatpush1.msra.mxu0 0.0
        %2223 = vmatprep.subr.mxu0 0.0
        %2224 = vmatpush1.msra.mxu0 0.0
        %2225 = vmatprep.subr.mxu0 0.0
        %2226 = vmatpush1.msra.mxu0 0.0
        %2227 = vmatprep.subr.mxu0 0.0
        %2228 = vmatpush1.msra.mxu0 0.0
        %2229 = vmatprep.subr.mxu0 0.0
        %2230 = vmatpush1.msra.mxu0 0.0
        %2231 = vmatprep.subr.mxu0 0.0
        %2232 = vmatpush1.msra.mxu0 0.0
        %2233 = vmatprep.subr.mxu0 0.0
        %2234 = vmatpush1.msra.mxu0 0.0
        %2235 = vmatprep.subr.mxu0 0.0
        %2236 = vmatpush1.msra.mxu0 0.0
        %2237 = vmatprep.subr.mxu0 0.0
        %2238 = vmatpush1.msra.mxu0 0.0
        %2239 = vmatprep.subr.mxu0 0.0
        %2240 = vmatpush1.msra.mxu0 0.0
        %2241 = vmatprep.subr.mxu0 0.0
        %2242 = vmatpush1.msra.mxu0 0.0
        %2243 = vmatprep.subr.mxu0 0.0
        %2244 = vmatpush1.msra.mxu0 0.0
        %2245 = vmatprep.subr.mxu0 0.0
        %2246 = vmatpush1.msra.mxu0 0.0
        %2247 = vmatprep.subr.mxu0 0.0
        %2248 = vmatpush1.msra.mxu0 0.0
        %2249 = vmatprep.subr.mxu0 0.0
        %2250 = vmatpush1.msra.mxu0 0.0
        %2251 = vmatprep.subr.mxu0 0.0
        %2252 = vmatpush1.msra.mxu0 0.0
        %2253 = vmatprep.subr.mxu0 0.0
        %2254 = vmatpush1.msra.mxu0 0.0
        %2255 = vmatprep.subr.mxu0 0.0
        %2256 = vmatpush1.msra.mxu0 0.0
        %2257 = vmatprep.subr.mxu0 0.0
        %2258 = vmatpush1.msra.mxu0 0.0
        %2259 = vmatprep.subr.mxu0 0.0
        %2260 = vmatpush1.msra.mxu0 0.0
        %2261 = vmatprep.subr.mxu0 0.0
        %2262 = vmatpush1.msra.mxu0 0.0
        %2263 = vmatprep.subr.mxu0 0.0
        %2264 = vmatpush1.msra.mxu0 0.0
        %2265 = vmatprep.subr.mxu0 0.0
        %2266 = vmatpush1.msra.mxu0 0.0
        %2267 = vmatprep.subr.mxu0 0.0
        %2268 = vmatpush1.msra.mxu0 0.0
        %2269 = vmatprep.subr.mxu0 0.0
        %2270 = vmatpush1.msra.mxu0 0.0
        %2271 = vmatprep.subr.mxu0 0.0
        %2272 = vmatpush1.msra.mxu0 0.0
        %2273 = vmatprep.subr.mxu0 0.0
        %2274 = vmatpush1.msra.mxu0 0.0
        %2275 = vmatprep.subr.mxu0 0.0
        %2276 = vmatpush1.msra.mxu0 0.0
        %2277 = vmatprep.subr.mxu0 0.0
        %2278 = vmatpush1.msra.mxu0 0.0
        %2279 = vmatprep.subr.mxu0 0.0
        %2280 = vmatpush1.msra.mxu0 0.0
        %2281 = vmatprep.subr.mxu0 0.0
        %2282 = vmatpush1.msra.mxu0 0.0
        %2283 = vmatprep.mubr.f32.mxu0 0.0
        %2284 = vmatmul.mubr.f32.gmra.mrb[0].mxu0 %v2217
        %v2285 = vpop.f32.mrb[0].mxu0
        %v2286 = vadd.f32 0.0, %v2285
        %v2287 = vpop.f32.mrb[0].mxu0
        %2288 = vdwg.mxu0
        %2290 = vrot.lane.b32.xlu0 %v2140, 8
        %v2291 = vpop.permute.xlu0 %2290
        %2294 = vrot.lane.b32.xlu0 %v2213, 16
        %v2295 = vpop.permute.xlu0 %2294
        %2298 = vrot.lane.b32.xlu0 %v2286, 24
        %v2299 = vpop.permute.xlu0 %2298
        %v2301 = vsel %vm651, %v2067, %v2291
        %v2302 = vsel %vm1297, %v2301, %v2295
        %v2303 = vsel %vm1299, %v2302, %v2299
        %v2305 = vsel %vm394, %v2303, 0
        %2307 = vmatprep.subr.mxu0 0.0
        %2308 = vmatpush1.msra.mxu0 %v364
        %2309 = vmatprep.subr.mxu0 0.0
        %2310 = vmatpush1.msra.mxu0 %v365
        %2311 = vmatprep.subr.mxu0 0.0
        %2312 = vmatpush1.msra.mxu0 %v366
        %2313 = vmatprep.subr.mxu0 0.0
        %2314 = vmatpush1.msra.mxu0 %v367
        %2315 = vmatprep.subr.mxu0 0.0
        %2316 = vmatpush1.msra.mxu0 0.0
        %2317 = vmatprep.subr.mxu0 0.0
        %2318 = vmatpush1.msra.mxu0 0.0
        %2319 = vmatprep.subr.mxu0 0.0
        %2320 = vmatpush1.msra.mxu0 0.0
        %2321 = vmatprep.subr.mxu0 0.0
        %2322 = vmatpush1.msra.mxu0 0.0
        %2323 = vmatprep.subr.mxu0 0.0
        %2324 = vmatpush1.msra.mxu0 0.0
        %2325 = vmatprep.subr.mxu0 0.0
        %2326 = vmatpush1.msra.mxu0 0.0
        %2327 = vmatprep.subr.mxu0 0.0
        %2328 = vmatpush1.msra.mxu0 0.0
        %2329 = vmatprep.subr.mxu0 0.0
        %2330 = vmatpush1.msra.mxu0 0.0
        %2331 = vmatprep.subr.mxu0 0.0
        %2332 = vmatpush1.msra.mxu0 0.0
        %2333 = vmatprep.subr.mxu0 0.0
        %2334 = vmatpush1.msra.mxu0 0.0
        %2335 = vmatprep.subr.mxu0 0.0
        %2336 = vmatpush1.msra.mxu0 0.0
        %2337 = vmatprep.subr.mxu0 0.0
        %2338 = vmatpush1.msra.mxu0 0.0
        %2339 = vmatprep.subr.mxu0 0.0
        %2340 = vmatpush1.msra.mxu0 0.0
        %2341 = vmatprep.subr.mxu0 0.0
        %2342 = vmatpush1.msra.mxu0 0.0
        %2343 = vmatprep.subr.mxu0 0.0
        %2344 = vmatpush1.msra.mxu0 0.0
        %2345 = vmatprep.subr.mxu0 0.0
        %2346 = vmatpush1.msra.mxu0 0.0
        %2347 = vmatprep.subr.mxu0 0.0
        %2348 = vmatpush1.msra.mxu0 0.0
        %2349 = vmatprep.subr.mxu0 0.0
        %2350 = vmatpush1.msra.mxu0 0.0
        %2351 = vmatprep.subr.mxu0 0.0
        %2352 = vmatpush1.msra.mxu0 0.0
        %2353 = vmatprep.subr.mxu0 0.0
        %2354 = vmatpush1.msra.mxu0 0.0
        %2355 = vmatprep.subr.mxu0 0.0
        %2356 = vmatpush1.msra.mxu0 0.0
        %2357 = vmatprep.subr.mxu0 0.0
        %2358 = vmatpush1.msra.mxu0 0.0
        %2359 = vmatprep.subr.mxu0 0.0
        %2360 = vmatpush1.msra.mxu0 0.0
        %2361 = vmatprep.subr.mxu0 0.0
        %2362 = vmatpush1.msra.mxu0 0.0
        %2363 = vmatprep.subr.mxu0 0.0
        %2364 = vmatpush1.msra.mxu0 0.0
        %2365 = vmatprep.subr.mxu0 0.0
        %2366 = vmatpush1.msra.mxu0 0.0
        %2367 = vmatprep.subr.mxu0 0.0
        %2368 = vmatpush1.msra.mxu0 0.0
        %2369 = vmatprep.subr.mxu0 0.0
        %2370 = vmatpush1.msra.mxu0 0.0
        %2371 = vmatprep.mubr.f32.mxu0 0.0
        %2372 = vmatmul.mubr.f32.gmra.mrb[0].mxu0 %v2305
        %v2373 = vpop.f32.mrb[0].mxu0
        %v2374 = vadd.f32 %v1304, %v2373
        %v2375 = vpop.f32.mrb[0].mxu0
        %2376 = vdwg.mxu0
        %v2377 = vadd.f32 %v1584, %v2374
        %v2378 = vsel %vm394, %v2377, 0.0
        %2379 = vadd.xlane.f32.xlu0 %v2378
        %v2380 = vpop.xlane.xlu0 %2379
        %v2381 = vmul.f32 %v2380, %v1382
        %v2382 = vsub.f32 %v2377, %v2381
        %v2383 = vmul.f32 %v2382, %v2382
        %v2384 = vsel %vm394, %v2383, 0.0
        %2385 = vadd.xlane.f32.xlu0 %v2384
        %v2386 = vpop.xlane.xlu0 %2385
        %v2387 = vmul.f32 %v2386, %v1382
        %v2388 = vadd.f32 %v2387, 1e-05
        %v2389 = vrsqrt.pop %v2388
        %v2390 = vmul.f32 %v2382, %v2389
        %v2391 = vmul.f32 %v2390, %v1396
        %v2392 = vadd.f32 %v2391, %v1401
        %v2394 = vsel %vm394, %v2392, 0
        %2396 = vmatprep.subr.mxu0 0.0
        %2397 = vmatpush1.msra.mxu0 %v368
        %2398 = vmatprep.subr.mxu0 0.0
        %2399 = vmatpush1.msra.mxu0 %v369
        %2400 = vmatprep.subr.mxu0 0.0
        %2401 = vmatpush1.msra.mxu0 %v370
        %2402 = vmatprep.subr.mxu0 0.0
        %2403 = vmatpush1.msra.mxu0 %v371
        %2404 = vmatprep.subr.mxu0 0.0
        %2405 = vmatpush1.msra.mxu0 0.0
        %2406 = vmatprep.subr.mxu0 0.0
        %2407 = vmatpush1.msra.mxu0 0.0
        %2408 = vmatprep.subr.mxu0 0.0
        %2409 = vmatpush1.msra.mxu0 0.0
        %2410 = vmatprep.subr.mxu0 0.0
        %2411 = vmatpush1.msra.mxu0 0.0
        %2412 = vmatprep.subr.mxu0 0.0
        %2413 = vmatpush1.msra.mxu0 0.0
        %2414 = vmatprep.subr.mxu0 0.0
        %2415 = vmatpush1.msra.mxu0 0.0
        %2416 = vmatprep.subr.mxu0 0.0
        %2417 = vmatpush1.msra.mxu0 0.0
        %2418 = vmatprep.subr.mxu0 0.0
        %2419 = vmatpush1.msra.mxu0 0.0
        %2420 = vmatprep.subr.mxu0 0.0
        %2421 = vmatpush1.msra.mxu0 0.0
        %2422 = vmatprep.subr.mxu0 0.0
        %2423 = vmatpush1.msra.mxu0 0.0
        %2424 = vmatprep.subr.mxu0 0.0
        %2425 = vmatpush1.msra.mxu0 0.0
        %2426 = vmatprep.subr.mxu0 0.0
        %2427 = vmatpush1.msra.mxu0 0.0
        %2428 = vmatprep.subr.mxu0 0.0
        %2429 = vmatpush1.msra.mxu0 0.0
        %2430 = vmatprep.subr.mxu0 0.0
        %2431 = vmatpush1.msra.mxu0 0.0
        %2432 = vmatprep.subr.mxu0 0.0
        %2433 = vmatpush1.msra.mxu0 0.0
        %2434 = vmatprep.subr.mxu0 0.0
        %2435 = vmatpush1.msra.mxu0 0.0
        %2436 = vmatprep.subr.mxu0 0.0
        %2437 = vmatpush1.msra.mxu0 0.0
        %2438 = vmatprep.subr.mxu0 0.0
        %2439 = vmatpush1.msra.mxu0 0.0
        %2440 = vmatprep.subr.mxu0 0.0
        %2441 = vmatpush1.msra.mxu0 0.0
        %2442 = vmatprep.subr.mxu0 0.0
        %2443 = vmatpush1.msra.mxu0 0.0
        %2444 = vmatprep.subr.mxu0 0.0
        %2445 = vmatpush1.msra.mxu0 0.0
        %2446 = vmatprep.subr.mxu0 0.0
        %2447 = vmatpush1.msra.mxu0 0.0
        %2448 = vmatprep.subr.mxu0 0.0
        %2449 = vmatpush1.msra.mxu0 0.0
        %2450 = vmatprep.subr.mxu0 0.0
        %2451 = vmatpush1.msra.mxu0 0.0
        %2452 = vmatprep.subr.mxu0 0.0
        %2453 = vmatpush1.msra.mxu0 0.0
        %2454 = vmatprep.subr.mxu0 0.0
        %2455 = vmatpush1.msra.mxu0 0.0
        %2456 = vmatprep.subr.mxu0 0.0
        %2457 = vmatpush1.msra.mxu0 0.0
        %2458 = vmatprep.subr.mxu0 0.0
        %2459 = vmatpush1.msra.mxu0 0.0
        %2460 = vmatprep.mubr.f32.mxu0 0.0
        %2461 = vmatmul.mubr.f32.gmra.mrb[0].mxu0 %v2394
        %v2462 = vpop.f32.mrb[0].mxu0
        %v2463 = vadd.f32 %v1407, %v2462
        %v2464 = vpop.f32.mrb[0].mxu0
        %2465 = vdwg.mxu0
        %v2466 = vmax.f32 %v2463, 0.0
        %v2468 = vsel %vm1487, %v2466, 0
        %2470 = vmatprep.subr.mxu0 0.0
        %2471 = vmatpush1.msra.mxu0 %v372
        %2472 = vmatprep.subr.mxu0 0.0
        %2473 = vmatpush1.msra.mxu0 %v373
        %2474 = vmatprep.subr.mxu0 0.0
        %2475 = vmatpush1.msra.mxu0 %v374
        %2476 = vmatprep.subr.mxu0 0.0
        %2477 = vmatpush1.msra.mxu0 %v375
        %2478 = vmatprep.subr.mxu0 0.0
        %2479 = vmatpush1.msra.mxu0 %v376
        %2480 = vmatprep.subr.mxu0 0.0
        %2481 = vmatpush1.msra.mxu0 %v377
        %2482 = vmatprep.subr.mxu0 0.0
        %2483 = vmatpush1.msra.mxu0 %v378
        %2484 = vmatprep.subr.mxu0 0.0
        %2485 = vmatpush1.msra.mxu0 %v379
        %2486 = vmatprep.subr.mxu0 0.0
        %2487 = vmatpush1.msra.mxu0 0.0
        %2488 = vmatprep.subr.mxu0 0.0
        %2489 = vmatpush1.msra.mxu0 0.0
        %2490 = vmatprep.subr.mxu0 0.0
        %2491 = vmatpush1.msra.mxu0 0.0
        %2492 = vmatprep.subr.mxu0 0.0
        %2493 = vmatpush1.msra.mxu0 0.0
        %2494 = vmatprep.subr.mxu0 0.0
        %2495 = vmatpush1.msra.mxu0 0.0
        %2496 = vmatprep.subr.mxu0 0.0
        %2497 = vmatpush1.msra.mxu0 0.0
        %2498 = vmatprep.subr.mxu0 0.0
        %2499 = vmatpush1.msra.mxu0 0.0
        %2500 = vmatprep.subr.mxu0 0.0
        %2501 = vmatpush1.msra.mxu0 0.0
        %2502 = vmatprep.subr.mxu0 0.0
        %2503 = vmatpush1.msra.mxu0 0.0
        %2504 = vmatprep.subr.mxu0 0.0
        %2505 = vmatpush1.msra.mxu0 0.0
        %2506 = vmatprep.subr.mxu0 0.0
        %2507 = vmatpush1.msra.mxu0 0.0
        %2508 = vmatprep.subr.mxu0 0.0
        %2509 = vmatpush1.msra.mxu0 0.0
        %2510 = vmatprep.subr.mxu0 0.0
        %2511 = vmatpush1.msra.mxu0 0.0
        %2512 = vmatprep.subr.mxu0 0.0
        %2513 = vmatpush1.msra.mxu0 0.0
        %2514 = vmatprep.subr.mxu0 0.0
        %2515 = vmatpush1.msra.mxu0 0.0
        %2516 = vmatprep.subr.mxu0 0.0
        %2517 = vmatpush1.msra.mxu0 0.0
        %2518 = vmatprep.subr.mxu0 0.0
        %2519 = vmatpush1.msra.mxu0 0.0
        %2520 = vmatprep.subr.mxu0 0.0
        %2521 = vmatpush1.msra.mxu0 0.0
        %2522 = vmatprep.subr.mxu0 0.0
        %2523 = vmatpush1.msra.mxu0 0.0
        %2524 = vmatprep.subr.mxu0 0.0
        %2525 = vmatpush1.msra.mxu0 0.0
        %2526 = vmatprep.subr.mxu0 0.0
        %2527 = vmatpush1.msra.mxu0 0.0
        %2528 = vmatprep.subr.mxu0 0.0
        %2529 = vmatpush1.msra.mxu0 0.0
        %2530 = vmatprep.subr.mxu0 0.0
        %2531 = vmatpush1.msra.mxu0 0.0
        %2532 = vmatprep.subr.mxu0 0.0
        %2533 = vmatpush1.msra.mxu0 0.0
        %2534 = vmatprep.mubr.f32.mxu0 0.0
        %2535 = vmatmul.mubr.f32.gmra.mrb[0].mxu0 %v2468
        %v2536 = vpop.f32.mrb[0].mxu0
        %v2537 = vadd.f32 %v1486, %v2536
        %v2538 = vpop.f32.mrb[0].mxu0
        %2539 = vdwg.mxu0
        %v2540 = vadd.f32 %v2392, %v2537
        %v2541 = vsel %vm394, %v2540, 0.0
        %2542 = vadd.xlane.f32.xlu0 %v2541
        %v2543 = vpop.xlane.xlu0 %2542
        %v2544 = vmul.f32 %v2543, %v1382
        %v2545 = vsub.f32 %v2540, %v2544
        %v2546 = vmul.f32 %v2545, %v2545
        %v2547 = vsel %vm394, %v2546, 0.0
        %2548 = vadd.xlane.f32.xlu0 %v2547
        %v2549 = vpop.xlane.xlu0 %2548
        %v2550 = vmul.f32 %v2549, %v1382
        %v2551 = vadd.f32 %v2550, 1e-05
        %v2552 = vrsqrt.pop %v2551
        %v2553 = vmul.f32 %v2545, %v2552
        %v2554 = vmul.f32 %v2553, %v1578
        %v2555 = vadd.f32 %v2554, %v1583
        %2556 = vst.msk [vmem:[%s335] sm:$0xff] %vm394, %v2555
        %s2557 = sand.u32 %s214, 1
        %s2558 = scalar_lea.sflag [#allocation4], %s2557
        %s2559 = sand.u32 %s214, 1
        %s2560 = smul.addr %s2559, 8
        %s2561 = scalar_lea.vmem [#allocation5], %s2560
        // Predicated region
        $region57: #{tpu_custom_call.1} parent=51 // pred_check
          %p2562 = pneg %p224
        $region58: #{tpu_custom_call.1} parent=51 // pred_check_branch
          %2564 = sbr.rel (%p2562) target = $region60
        $region59: #{tpu_custom_call.1} parent=51 // pred_region
          %s2566 = ssub.s32 128, 128
          %2567 = vsyncadd %s2558, %s2566
          %s2568 = smul.addr %s23, 128
          %s2569 = scalar_lea.hbm %s8, %s2568
          %s2571 = sshll.u32 %s2561, 4
          %s2572 = int_to_ptr.vmem [resolvable:$true] %s2571
          %2574 = dma.vmem_to_hbm [thread:$0]  %s2572, 128, %s2569, %s2558
        $region60: #{tpu_custom_call.1} parent=51 // pred_fallthru
          _
      $region52: #{tpu_custom_call.1} parent=5 // pred_fallthru
        _
      %p2575 = scmp.le.s32.totalorder 2, %s18
      // Predicated region
      $region61: #{tpu_custom_call.1} parent=5 // pred_check
        %p2576 = pneg %p2575
      $region62: #{tpu_custom_call.1} parent=5 // pred_check_branch
        %2578 = sbr.rel (%p2576) target = $region64
      $region63: #{tpu_custom_call.1} parent=5 // pred_region
        %s2579 = ssub.s32 %s18, 2
        // Predicated region
        $region65: #{tpu_custom_call.1} parent=63 // pred_check
          %p2580 = pneg %p230
        $region66: #{tpu_custom_call.1} parent=63 // pred_check_branch
          %2582 = sbr.rel (%p2580) target = $region68
        $region67: #{tpu_custom_call.1} parent=63 // pred_region
          %s2583 = sand.u32 %s215, 1
          %s2584 = scalar_lea.sflag [#allocation4], %s2583
          %s2585 = sand.u32 %s215, 1
          %s2586 = smul.addr %s2585, 8
          %s2587 = scalar_lea.vmem [#allocation5], %s2586
          %2588 = dma.done %s2584, 128
        $region68: #{tpu_custom_call.1} parent=63 // pred_fallthru
          _
      $region64: #{tpu_custom_call.1} parent=5 // pred_fallthru
        _
    $region6: #{tpu_custom_call.1} parent=1 // loop_footer
      %s22 = sadd.s32 1, %s18
    $region7: #{tpu_custom_call.1} parent=1 // loop_footer_branch
      %17 = sbr.rel target = $region3
    $region8: #{tpu_custom_call.1} parent=1 // loop_exit
      _
    %2589 = vsyncpa [#allocation3], 1
    %s2590 = scalar_lea.sflag [#allocation3], 1
    %2591 = vsyncpa %s2590, 1
    %2592 = vsyncpa [#allocation4], 1
    %s2593 = scalar_lea.sflag [#allocation4], 1
    %2594 = vsyncpa %s2593, 1

</llo_original>
